<compile_context>
chip_gen: v7x
topology: tpu7x:2x2x1
jax: 0.10.0
libtpu: 0.0.40
codegen_flags: <defaults>
</compile_context>

<pallas_src>
import math

import jax
import jax.numpy as jnp
from jax import lax
from jax.experimental import pallas as pl
from jax.experimental.pallas import tpu as pltpu  # noqa: F401  (TPU backend)

# ------------------------- small, forward-consistent config ------------------
BATCH       = 2
IN_CHANNELS = 4
IMAGE_SIZE  = 16
PATCH       = 8
DIM         = 32
FF_DIM      = 64
NUM_HEADS   = 4
NUM_LAYERS  = 2
NUM_CLS     = 4
LN_EPS      = 1e-6

GH = GW     = IMAGE_SIZE // PATCH
SEQ_PATCH   = GH * GW                       # patches per image
SEQ_LEN     = SEQ_PATCH + NUM_CLS           # + class tokens
HEAD_DIM    = DIM // NUM_HEADS
PATCH_DIM   = IN_CHANNELS * PATCH * PATCH   # flattened patch vector length
TOKENS      = BATCH * SEQ_LEN               # batch folded into matmul M dim


# ----------------------------- in-kernel helpers ------------------------------
def _layer_norm(z, g, b):
    mu = jnp.mean(z, axis=-1, keepdims=True)
    var = jnp.mean(jnp.square(z - mu), axis=-1, keepdims=True)
    return (z - mu) * lax.rsqrt(var + LN_EPS) * g + b


def _gelu(x):
    # TODO(synk): reference uses exact erf-based GELU; tanh approximation kept
    # (~1e-3 deviation) because erf lowering in Mosaic is not guaranteed.
    c = math.sqrt(2.0 / math.pi)
    return 0.5 * x * (1.0 + jnp.tanh(c * (x + 0.044715 * x * x * x)))


# ----------------------------- fused ViT kernel --------------------------------
def _vit_kernel(patches_ref, wp_ref, bp_ref, cls_ref, pos_ref,
                g1_ref, be1_ref, wqkv_ref, bqkv_ref, wo_ref, bo_ref,
                g2_ref, be2_ref, w1_ref, b1_ref, w2_ref, b2_ref, o_ref):
    # ---- patch embedding: stride-PATCH Conv2d == per-patch matmul, whole batch
    # patches_ref: (B*SEQ_PATCH, PATCH_DIM), wp_ref: (PATCH_DIM, DIM)
    emb = jnp.dot(patches_ref[...], wp_ref[...],
                  preferred_element_type=jnp.float32) + bp_ref[...]     # (B*Sp, D)

    # ---- class tokens + positional embedding, built entirely in VMEM
    rows = []
    for b in range(BATCH):                                              # static
        e_b = emb[b * SEQ_PATCH:(b + 1) * SEQ_PATCH]                    # (Sp, D)
        rows.append(jnp.concatenate([cls_ref[...], e_b], axis=0) + pos_ref[...])
    x = jnp.concatenate(rows, axis=0)                                   # (B*S, D)

    scale = 1.0 / math.sqrt(HEAD_DIM)

    # ---- NUM_LAYERS pre-norm transformer blocks, unrolled in-kernel
    for L in range(NUM_LAYERS):
        # ---------------- multi-head self-attention ----------------
        h = _layer_norm(x, g1_ref[L], be1_ref[L])
        qkv = jnp.dot(h, wqkv_ref[L],
                      preferred_element_type=jnp.float32) + bqkv_ref[L]  # (B*S, 3D)
        q = qkv[:, 0 * DIM:1 * DIM]
        k = qkv[:, 1 * DIM:2 * DIM]
        v = qkv[:, 2 * DIM:3 * DIM]

        def split_heads(t):
            # (B*S, D) -> (B*H, S, HEAD_DIM) with the batched axis leading so
            # the einsums below lower to standard batched dot_generals.
            return jnp.stack(
                [t[b * SEQ_LEN:(b + 1) * SEQ_LEN,
                   hh * HEAD_DIM:(hh + 1) * HEAD_DIM]
                 for b in range(BATCH) for hh in range(NUM_HEADS)], axis=0)

        qh, kh, vh = split_heads(q), split_heads(k), split_heads(v)

        s = jnp.einsum('bqd,bkd->bqk', qh, kh,
                       preferred_element_type=jnp.float32) * scale       # (BH,S,S)
        s = s - jnp.max(s, axis=-1, keepdims=True)
        p = jnp.exp(s)
        p = p * pl.reciprocal(jnp.sum(p, axis=-1, keepdims=True), approx=True)
        ctx_h = jnp.einsum('bqk,bkd->bqd', p, vh,
                           preferred_element_type=jnp.float32)           # (BH,S,Dh)

        # merge heads back to (B*S, D)
        ctx = jnp.concatenate(
            [jnp.concatenate([ctx_h[b * NUM_HEADS + hh]
                              for hh in range(NUM_HEADS)], axis=-1)
             for b in range(BATCH)], axis=0)

        attn = jnp.dot(ctx, wo_ref[L],
                       preferred_element_type=jnp.float32) + bo_ref[L]
        x = x + attn                                                     # residual 1

        # ---------------- MLP ----------------
        h2 = _layer_norm(x, g2_ref[L], be2_ref[L])
        ff = jnp.dot(h2, w1_ref[L], preferred_element_type=jnp.float32) + b1_ref[L]
        ff = _gelu(ff)
        ff = jnp.dot(ff, w2_ref[L], preferred_element_type=jnp.float32) + b2_ref[L]
        x = x + ff                                                       # residual 2

    o_ref[...] = x


# ----------------------------- parameters ------------------------------------
def _xavier_uniform(key, shape):
    fan_in, fan_out = shape
    limit = math.sqrt(6.0 / (fan_in + fan_out))
    return jax.random.uniform(key, shape, jnp.float32, -limit, limit)


def init_params(key):
    keys = iter(jax.random.split(key, 128))

    # Conv2d(IN_CHANNELS, DIM, kernel=stride=PATCH) stored as (PATCH_DIM, DIM)
    # matmul matrix; flatten order (c, kh, kw) matches the NCHW patch vectors.
    conv_w = jax.random.normal(next(keys), (DIM, IN_CHANNELS, PATCH, PATCH),
                               jnp.float32) * 0.02
    w_patch = conv_w.reshape(DIM, PATCH_DIM).T
    b_patch = (jax.random.normal(next(keys), (DIM,), jnp.float32) * 1e-6
               ).reshape(1, DIM)

    class_token = jnp.zeros((NUM_CLS, DIM), jnp.float32)                 # init 0
    pos_emb = jax.random.normal(next(keys), (SEQ_LEN, DIM),
                                jnp.float32) * 0.02                      # std 0.02

    def lin(in_d, out_d):
        w = _xavier_uniform(next(keys), (in_d, out_d))                   # (in, out)
        b = (jax.random.normal(next(keys), (out_d,), jnp.float32) * 1e-6
             ).reshape(1, out_d)
        return w, b

    wqkv, bqkv, wo, bo = [], [], [], []
    w1, b1, w2, b2 = [], [], [], []
    g1, be1, g2, be2 = [], [], [], []
    for _ in range(NUM_LAYERS):
        wq, bq = lin(DIM, DIM)
        wk, bk = lin(DIM, DIM)
        wv, bv = lin(DIM, DIM)
        wqkv.append(jnp.concatenate([wq, wk, wv], axis=1))               # (D, 3D)
        bqkv.append(jnp.concatenate([bq, bk, bv], axis=1))               # (1, 3D)
        wo_i, bo_i = lin(DIM, DIM);   wo.append(wo_i); bo.append(bo_i)
        w1_i, b1_i = lin(DIM, FF_DIM); w1.append(w1_i); b1.append(b1_i)
        w2_i, b2_i = lin(FF_DIM, DIM); w2.append(w2_i); b2.append(b2_i)
        g1.append(jnp.ones((1, DIM), jnp.float32))
        be1.append(jnp.zeros((1, DIM), jnp.float32))
        g2.append(jnp.ones((1, DIM), jnp.float32))
        be2.append(jnp.zeros((1, DIM), jnp.float32))

    stack = lambda xs: jnp.stack(xs, axis=0)                             # (L, ...)
    return dict(
        w_patch=w_patch, b_patch=b_patch,
        class_token=class_token, pos_emb=pos_emb,
        ln1_g=stack(g1), ln1_b=stack(be1),
        wqkv=stack(wqkv), bqkv=stack(bqkv),
        wo=stack(wo), bo=stack(bo),
        ln2_g=stack(g2), ln2_b=stack(be2),
        w1=stack(w1), b1=stack(b1), w2=stack(w2), b2=stack(b2),
    )


# ----------------------------- forward ----------------------------------------
def vit_forward(x, params):
    """x: (B, C, H, W) float32 (NCHW, like the PyTorch module)."""
    B, C, H, W = x.shape
    assert B == BATCH and C == IN_CHANNELS and H == W == IMAGE_SIZE

    # stride-patch conv == per-patch matmul: extract non-overlapping patches
    # (layout glue only; the matmul itself happens inside the Pallas kernel).
    patches = x.reshape(B, C, GH, PATCH, GW, PATCH)
    patches = patches.transpose(0, 2, 4, 1, 3, 5).reshape(B * SEQ_PATCH, PATCH_DIM)

    # One fused pallas_call: every operand fits fully in VMEM (no grid / no
    # tiling needed at these shapes; DIM=32 / SEQ=8 padding is unavoidable).
    seq_flat = pl.pallas_call(
        _vit_kernel,
        out_shape=jax.ShapeDtypeStruct((TOKENS, DIM), jnp.float32),
    )(patches, params["w_patch"], params["b_patch"],
      params["class_token"], params["pos_emb"],
      params["ln1_g"], params["ln1_b"], params["wqkv"], params["bqkv"],
      params["wo"], params["bo"], params["ln2_g"], params["ln2_b"],
      params["w1"], params["b1"], params["w2"], params["b2"])

    seq = seq_flat.reshape(B, SEQ_LEN, DIM)
    # dropout layers are identity at inference time (no-op here).
    # mirrors torch `.squeeze()` (drops the batch dim if B == 1 — same footgun).
    pooler = jnp.squeeze(seq[:, :NUM_CLS])
    return {"pooler_output": pooler, "last_hidden_state": seq[:, NUM_CLS:]}


# ----------------------------- main -------------------------------------------
if __name__ == "__main__":
    key = jax.random.PRNGKey(0)
    pkey, xkey = jax.random.split(key)
    params = init_params(pkey)
    x = jax.random.normal(xkey, (BATCH, IN_CHANNELS, IMAGE_SIZE, IMAGE_SIZE),
                          jnp.float32)
    fwd = jax.jit(vit_forward)
    out = fwd(x, params)
    jax.block_until_ready(out)
    assert out["pooler_output"].shape == (BATCH, NUM_CLS, DIM)
    assert out["last_hidden_state"].shape == (BATCH, SEQ_PATCH, DIM)
    assert bool(jnp.all(jnp.isfinite(out["pooler_output"])))
    print("KERNEL_OK")
</pallas_src>

<mosaic_0001>
module attributes {stable_mosaic.version = 11 : i64} {
  func.func @_vit_kernel(%arg0: memref<8x256xf32, #tpu.memory_space<vmem>>, %arg1: memref<256x32xf32, #tpu.memory_space<vmem>>, %arg2: memref<1x32xf32, #tpu.memory_space<vmem>>, %arg3: memref<4x32xf32, #tpu.memory_space<vmem>>, %arg4: memref<8x32xf32, #tpu.memory_space<vmem>>, %arg5: memref<2x1x32xf32, #tpu.memory_space<vmem>>, %arg6: memref<2x1x32xf32, #tpu.memory_space<vmem>>, %arg7: memref<2x32x96xf32, #tpu.memory_space<vmem>>, %arg8: memref<2x1x96xf32, #tpu.memory_space<vmem>>, %arg9: memref<2x32x32xf32, #tpu.memory_space<vmem>>, %arg10: memref<2x1x32xf32, #tpu.memory_space<vmem>>, %arg11: memref<2x1x32xf32, #tpu.memory_space<vmem>>, %arg12: memref<2x1x32xf32, #tpu.memory_space<vmem>>, %arg13: memref<2x32x64xf32, #tpu.memory_space<vmem>>, %arg14: memref<2x1x64xf32, #tpu.memory_space<vmem>>, %arg15: memref<2x64x32xf32, #tpu.memory_space<vmem>>, %arg16: memref<2x1x32xf32, #tpu.memory_space<vmem>>, %arg17: memref<16x32xf32, #tpu.memory_space<vmem>>) attributes {dimension_semantics = [], scalar_prefetch = 0 : i64, scratch_operands = 0 : i64, tpu.core_type = #tpu.core_type<tc>} {
    %c0 = arith.constant 0 : index
    %c0_0 = arith.constant 0 : index
    %0 = vector.load %arg0[%c0, %c0_0] : memref<8x256xf32, #tpu.memory_space<vmem>>, vector<8x256xf32>
    %c0_1 = arith.constant 0 : index
    %c0_2 = arith.constant 0 : index
    %1 = vector.load %arg1[%c0_1, %c0_2] : memref<256x32xf32, #tpu.memory_space<vmem>>, vector<256x32xf32>
    %cst = arith.constant dense<0.000000e+00> : vector<8x32xf32>
    %2 = tpu.matmul %0, %1, %cst {dimension_numbers = #tpu.dot_dimension_numbers<[1], [0], [0], [1], [0, 0, 1, 1], [], []>} : vector<8x256xf32>, vector<256x32xf32>, vector<8x32xf32> -> vector<8x32xf32>
    %c0_3 = arith.constant 0 : index
    %c0_4 = arith.constant 0 : index
    %3 = vector.load %arg2[%c0_3, %c0_4] : memref<1x32xf32, #tpu.memory_space<vmem>>, vector<1x32xf32>
    %4 = vector.broadcast %3 : vector<1x32xf32> to vector<8x32xf32>
    %5 = arith.addf %2, %4 : vector<8x32xf32>
    %6 = vector.extract_strided_slice %5 {offsets = [0, 0], sizes = [4, 32], strides = [1, 1]} : vector<8x32xf32> to vector<4x32xf32>
    %c0_5 = arith.constant 0 : index
    %c0_6 = arith.constant 0 : index
    %7 = vector.load %arg3[%c0_5, %c0_6] : memref<4x32xf32, #tpu.memory_space<vmem>>, vector<4x32xf32>
    %8 = tpu.concatenate %7, %6 in 0 : vector<4x32xf32>, vector<4x32xf32> -> vector<8x32xf32>
    %c0_7 = arith.constant 0 : index
    %c0_8 = arith.constant 0 : index
    %9 = vector.load %arg4[%c0_7, %c0_8] : memref<8x32xf32, #tpu.memory_space<vmem>>, vector<8x32xf32>
    %10 = arith.addf %8, %9 : vector<8x32xf32>
    %11 = vector.extract_strided_slice %5 {offsets = [4, 0], sizes = [4, 32], strides = [1, 1]} : vector<8x32xf32> to vector<4x32xf32>
    %c0_9 = arith.constant 0 : index
    %c0_10 = arith.constant 0 : index
    %12 = vector.load %arg3[%c0_9, %c0_10] : memref<4x32xf32, #tpu.memory_space<vmem>>, vector<4x32xf32>
    %13 = tpu.concatenate %12, %11 in 0 : vector<4x32xf32>, vector<4x32xf32> -> vector<8x32xf32>
    %c0_11 = arith.constant 0 : index
    %c0_12 = arith.constant 0 : index
    %14 = vector.load %arg4[%c0_11, %c0_12] : memref<8x32xf32, #tpu.memory_space<vmem>>, vector<8x32xf32>
    %15 = arith.addf %13, %14 : vector<8x32xf32>
    %16 = tpu.concatenate %10, %15 in 0 : vector<8x32xf32>, vector<8x32xf32> -> vector<16x32xf32>
    %c0_13 = arith.constant 0 : index
    %c0_14 = arith.constant 0 : index
    %c0_15 = arith.constant 0 : index
    %17 = vector.load %arg5[%c0_13, %c0_14, %c0_15] : memref<2x1x32xf32, #tpu.memory_space<vmem>>, vector<1x1x32xf32>
    %18 = vector.shape_cast %17 : vector<1x1x32xf32> to vector<1x32xf32>
    %c0_16 = arith.constant 0 : index
    %c0_17 = arith.constant 0 : index
    %c0_18 = arith.constant 0 : index
    %19 = vector.load %arg6[%c0_16, %c0_17, %c0_18] : memref<2x1x32xf32, #tpu.memory_space<vmem>>, vector<1x1x32xf32>
    %20 = vector.shape_cast %19 : vector<1x1x32xf32> to vector<1x32xf32>
    %cst_19 = arith.constant dense<0.000000e+00> : vector<16xf32>
    %21 = vector.multi_reduction <add>, %16, %cst_19 [1] : vector<16x32xf32> to vector<16xf32>
    %22 = vector.shape_cast %21 : vector<16xf32> to vector<16x1xf32>
    %cst_20 = arith.constant 3.200000e+01 : f32
    %23 = vector.broadcast %cst_20 : f32 to vector<16x1xf32>
    %24 = arith.divf %22, %23 : vector<16x1xf32>
    %25 = vector.broadcast %24 : vector<16x1xf32> to vector<16x32xf32>
    %26 = arith.subf %16, %25 : vector<16x32xf32>
    %27 = arith.mulf %26, %26 : vector<16x32xf32>
    %cst_21 = arith.constant dense<0.000000e+00> : vector<16xf32>
    %28 = vector.multi_reduction <add>, %27, %cst_21 [1] : vector<16x32xf32> to vector<16xf32>
    %29 = vector.shape_cast %28 : vector<16xf32> to vector<16x1xf32>
    %cst_22 = arith.constant 3.200000e+01 : f32
    %30 = vector.broadcast %cst_22 : f32 to vector<16x1xf32>
    %31 = arith.divf %29, %30 : vector<16x1xf32>
    %32 = vector.broadcast %24 : vector<16x1xf32> to vector<16x32xf32>
    %33 = arith.subf %16, %32 : vector<16x32xf32>
    %cst_23 = arith.constant 9.99999997E-7 : f32
    %34 = vector.broadcast %cst_23 : f32 to vector<16x1xf32>
    %35 = arith.addf %31, %34 : vector<16x1xf32>
    %36 = math.rsqrt %35 : vector<16x1xf32>
    %37 = vector.broadcast %36 : vector<16x1xf32> to vector<16x32xf32>
    %38 = arith.mulf %33, %37 : vector<16x32xf32>
    %39 = vector.broadcast %18 : vector<1x32xf32> to vector<16x32xf32>
    %40 = arith.mulf %38, %39 : vector<16x32xf32>
    %41 = vector.broadcast %20 : vector<1x32xf32> to vector<16x32xf32>
    %42 = arith.addf %40, %41 : vector<16x32xf32>
    %c0_24 = arith.constant 0 : index
    %c0_25 = arith.constant 0 : index
    %c0_26 = arith.constant 0 : index
    %43 = vector.load %arg7[%c0_24, %c0_25, %c0_26] : memref<2x32x96xf32, #tpu.memory_space<vmem>>, vector<1x32x96xf32>
    %44 = vector.shape_cast %43 : vector<1x32x96xf32> to vector<32x96xf32>
    %cst_27 = arith.constant dense<0.000000e+00> : vector<16x96xf32>
    %45 = tpu.matmul %42, %44, %cst_27 {dimension_numbers = #tpu.dot_dimension_numbers<[1], [0], [0], [1], [0, 0, 1, 1], [], []>} : vector<16x32xf32>, vector<32x96xf32>, vector<16x96xf32> -> vector<16x96xf32>
    %c0_28 = arith.constant 0 : index
    %c0_29 = arith.constant 0 : index
    %c0_30 = arith.constant 0 : index
    %46 = vector.load %arg8[%c0_28, %c0_29, %c0_30] : memref<2x1x96xf32, #tpu.memory_space<vmem>>, vector<1x1x96xf32>
    %47 = vector.shape_cast %46 : vector<1x1x96xf32> to vector<1x96xf32>
    %48 = vector.broadcast %47 : vector<1x96xf32> to vector<16x96xf32>
    %49 = arith.addf %45, %48 : vector<16x96xf32>
    %50 = vector.extract_strided_slice %49 {offsets = [0, 0], sizes = [16, 32], strides = [1, 1]} : vector<16x96xf32> to vector<16x32xf32>
    %51 = vector.extract_strided_slice %49 {offsets = [0, 32], sizes = [16, 32], strides = [1, 1]} : vector<16x96xf32> to vector<16x32xf32>
    %52 = vector.extract_strided_slice %49 {offsets = [0, 64], sizes = [16, 32], strides = [1, 1]} : vector<16x96xf32> to vector<16x32xf32>
    %53 = vector.extract_strided_slice %50 {offsets = [0, 0], sizes = [8, 8], strides = [1, 1]} : vector<16x32xf32> to vector<8x8xf32>
    %54 = vector.extract_strided_slice %50 {offsets = [0, 8], sizes = [8, 8], strides = [1, 1]} : vector<16x32xf32> to vector<8x8xf32>
    %55 = vector.extract_strided_slice %50 {offsets = [0, 16], sizes = [8, 8], strides = [1, 1]} : vector<16x32xf32> to vector<8x8xf32>
    %56 = vector.extract_strided_slice %50 {offsets = [0, 24], sizes = [8, 8], strides = [1, 1]} : vector<16x32xf32> to vector<8x8xf32>
    %57 = vector.extract_strided_slice %50 {offsets = [8, 0], sizes = [8, 8], strides = [1, 1]} : vector<16x32xf32> to vector<8x8xf32>
    %58 = vector.extract_strided_slice %50 {offsets = [8, 8], sizes = [8, 8], strides = [1, 1]} : vector<16x32xf32> to vector<8x8xf32>
    %59 = vector.extract_strided_slice %50 {offsets = [8, 16], sizes = [8, 8], strides = [1, 1]} : vector<16x32xf32> to vector<8x8xf32>
    %60 = vector.extract_strided_slice %50 {offsets = [8, 24], sizes = [8, 8], strides = [1, 1]} : vector<16x32xf32> to vector<8x8xf32>
    %61 = vector.shape_cast %53 : vector<8x8xf32> to vector<1x8x8xf32>
    %62 = vector.shape_cast %54 : vector<8x8xf32> to vector<1x8x8xf32>
    %63 = vector.shape_cast %55 : vector<8x8xf32> to vector<1x8x8xf32>
    %64 = vector.shape_cast %56 : vector<8x8xf32> to vector<1x8x8xf32>
    %65 = vector.shape_cast %57 : vector<8x8xf32> to vector<1x8x8xf32>
    %66 = vector.shape_cast %58 : vector<8x8xf32> to vector<1x8x8xf32>
    %67 = vector.shape_cast %59 : vector<8x8xf32> to vector<1x8x8xf32>
    %68 = vector.shape_cast %60 : vector<8x8xf32> to vector<1x8x8xf32>
    %69 = tpu.concatenate %61, %62, %63, %64, %65, %66, %67, %68 in 0 : vector<1x8x8xf32>, vector<1x8x8xf32>, vector<1x8x8xf32>, vector<1x8x8xf32>, vector<1x8x8xf32>, vector<1x8x8xf32>, vector<1x8x8xf32>, vector<1x8x8xf32> -> vector<8x8x8xf32>
    %70 = vector.extract_strided_slice %51 {offsets = [0, 0], sizes = [8, 8], strides = [1, 1]} : vector<16x32xf32> to vector<8x8xf32>
    %71 = vector.extract_strided_slice %51 {offsets = [0, 8], sizes = [8, 8], strides = [1, 1]} : vector<16x32xf32> to vector<8x8xf32>
    %72 = vector.extract_strided_slice %51 {offsets = [0, 16], sizes = [8, 8], strides = [1, 1]} : vector<16x32xf32> to vector<8x8xf32>
    %73 = vector.extract_strided_slice %51 {offsets = [0, 24], sizes = [8, 8], strides = [1, 1]} : vector<16x32xf32> to vector<8x8xf32>
    %74 = vector.extract_strided_slice %51 {offsets = [8, 0], sizes = [8, 8], strides = [1, 1]} : vector<16x32xf32> to vector<8x8xf32>
    %75 = vector.extract_strided_slice %51 {offsets = [8, 8], sizes = [8, 8], strides = [1, 1]} : vector<16x32xf32> to vector<8x8xf32>
    %76 = vector.extract_strided_slice %51 {offsets = [8, 16], sizes = [8, 8], strides = [1, 1]} : vector<16x32xf32> to vector<8x8xf32>
    %77 = vector.extract_strided_slice %51 {offsets = [8, 24], sizes = [8, 8], strides = [1, 1]} : vector<16x32xf32> to vector<8x8xf32>
    %78 = vector.shape_cast %70 : vector<8x8xf32> to vector<1x8x8xf32>
    %79 = vector.shape_cast %71 : vector<8x8xf32> to vector<1x8x8xf32>
    %80 = vector.shape_cast %72 : vector<8x8xf32> to vector<1x8x8xf32>
    %81 = vector.shape_cast %73 : vector<8x8xf32> to vector<1x8x8xf32>
    %82 = vector.shape_cast %74 : vector<8x8xf32> to vector<1x8x8xf32>
    %83 = vector.shape_cast %75 : vector<8x8xf32> to vector<1x8x8xf32>
    %84 = vector.shape_cast %76 : vector<8x8xf32> to vector<1x8x8xf32>
    %85 = vector.shape_cast %77 : vector<8x8xf32> to vector<1x8x8xf32>
    %86 = tpu.concatenate %78, %79, %80, %81, %82, %83, %84, %85 in 0 : vector<1x8x8xf32>, vector<1x8x8xf32>, vector<1x8x8xf32>, vector<1x8x8xf32>, vector<1x8x8xf32>, vector<1x8x8xf32>, vector<1x8x8xf32>, vector<1x8x8xf32> -> vector<8x8x8xf32>
    %87 = vector.extract_strided_slice %52 {offsets = [0, 0], sizes = [8, 8], strides = [1, 1]} : vector<16x32xf32> to vector<8x8xf32>
    %88 = vector.extract_strided_slice %52 {offsets = [0, 8], sizes = [8, 8], strides = [1, 1]} : vector<16x32xf32> to vector<8x8xf32>
    %89 = vector.extract_strided_slice %52 {offsets = [0, 16], sizes = [8, 8], strides = [1, 1]} : vector<16x32xf32> to vector<8x8xf32>
    %90 = vector.extract_strided_slice %52 {offsets = [0, 24], sizes = [8, 8], strides = [1, 1]} : vector<16x32xf32> to vector<8x8xf32>
    %91 = vector.extract_strided_slice %52 {offsets = [8, 0], sizes = [8, 8], strides = [1, 1]} : vector<16x32xf32> to vector<8x8xf32>
    %92 = vector.extract_strided_slice %52 {offsets = [8, 8], sizes = [8, 8], strides = [1, 1]} : vector<16x32xf32> to vector<8x8xf32>
    %93 = vector.extract_strided_slice %52 {offsets = [8, 16], sizes = [8, 8], strides = [1, 1]} : vector<16x32xf32> to vector<8x8xf32>
    %94 = vector.extract_strided_slice %52 {offsets = [8, 24], sizes = [8, 8], strides = [1, 1]} : vector<16x32xf32> to vector<8x8xf32>
    %95 = vector.shape_cast %87 : vector<8x8xf32> to vector<1x8x8xf32>
    %96 = vector.shape_cast %88 : vector<8x8xf32> to vector<1x8x8xf32>
    %97 = vector.shape_cast %89 : vector<8x8xf32> to vector<1x8x8xf32>
    %98 = vector.shape_cast %90 : vector<8x8xf32> to vector<1x8x8xf32>
    %99 = vector.shape_cast %91 : vector<8x8xf32> to vector<1x8x8xf32>
    %100 = vector.shape_cast %92 : vector<8x8xf32> to vector<1x8x8xf32>
    %101 = vector.shape_cast %93 : vector<8x8xf32> to vector<1x8x8xf32>
    %102 = vector.shape_cast %94 : vector<8x8xf32> to vector<1x8x8xf32>
    %103 = tpu.concatenate %95, %96, %97, %98, %99, %100, %101, %102 in 0 : vector<1x8x8xf32>, vector<1x8x8xf32>, vector<1x8x8xf32>, vector<1x8x8xf32>, vector<1x8x8xf32>, vector<1x8x8xf32>, vector<1x8x8xf32>, vector<1x8x8xf32> -> vector<8x8x8xf32>
    "tpu.trace_start"() <{level = 10 : i32, message = "bqd,bkd->bqk"}> : () -> ()
    %cst_31 = arith.constant dense<0.000000e+00> : vector<8x8x8xf32>
    %104 = tpu.matmul %69, %86, %cst_31 {dimension_numbers = #tpu.dot_dimension_numbers<[2], [2], [1], [1], [0, 0, 0, 1, 1, 1], [0], [0]>} : vector<8x8x8xf32>, vector<8x8x8xf32>, vector<8x8x8xf32> -> vector<8x8x8xf32>
    "tpu.trace_stop"() : () -> ()
    %cst_32 = arith.constant 0.353553385 : f32
    %105 = vector.broadcast %cst_32 : f32 to vector<8x8x8xf32>
    %106 = arith.mulf %104, %105 : vector<8x8x8xf32>
    %cst_33 = arith.constant dense<0xFF800000> : vector<8x8xf32>
    %107 = vector.multi_reduction <maximumf>, %106, %cst_33 [2] : vector<8x8x8xf32> to vector<8x8xf32>
    %108 = vector.shape_cast %107 : vector<8x8xf32> to vector<8x8x1xf32>
    %109 = vector.broadcast %108 : vector<8x8x1xf32> to vector<8x8x8xf32>
    %110 = arith.subf %106, %109 : vector<8x8x8xf32>
    %111 = math.exp %110 : vector<8x8x8xf32>
    %cst_34 = arith.constant dense<0.000000e+00> : vector<8x8xf32>
    %112 = vector.multi_reduction <add>, %111, %cst_34 [2] : vector<8x8x8xf32> to vector<8x8xf32>
    %113 = vector.shape_cast %112 : vector<8x8xf32> to vector<8x8x1xf32>
    %114 = tpu.reciprocal %113 {approx = true} : vector<8x8x1xf32> -> vector<8x8x1xf32>
    %115 = vector.broadcast %114 : vector<8x8x1xf32> to vector<8x8x8xf32>
    %116 = arith.mulf %111, %115 : vector<8x8x8xf32>
    "tpu.trace_start"() <{level = 10 : i32, message = "bqk,bkd->bqd"}> : () -> ()
    %cst_35 = arith.constant dense<0.000000e+00> : vector<8x8x8xf32>
    %117 = tpu.matmul %116, %103, %cst_35 {dimension_numbers = #tpu.dot_dimension_numbers<[2], [1], [1], [2], [0, 0, 0, 1, 1, 2], [0], [0]>} : vector<8x8x8xf32>, vector<8x8x8xf32>, vector<8x8x8xf32> -> vector<8x8x8xf32>
    "tpu.trace_stop"() : () -> ()
    %118 = vector.extract_strided_slice %117 {offsets = [0, 0, 0], sizes = [1, 8, 8], strides = [1, 1, 1]} : vector<8x8x8xf32> to vector<1x8x8xf32>
    %119 = vector.shape_cast %118 : vector<1x8x8xf32> to vector<8x8xf32>
    %120 = vector.extract_strided_slice %117 {offsets = [1, 0, 0], sizes = [1, 8, 8], strides = [1, 1, 1]} : vector<8x8x8xf32> to vector<1x8x8xf32>
    %121 = vector.shape_cast %120 : vector<1x8x8xf32> to vector<8x8xf32>
    %122 = vector.extract_strided_slice %117 {offsets = [2, 0, 0], sizes = [1, 8, 8], strides = [1, 1, 1]} : vector<8x8x8xf32> to vector<1x8x8xf32>
    %123 = vector.shape_cast %122 : vector<1x8x8xf32> to vector<8x8xf32>
    %124 = vector.extract_strided_slice %117 {offsets = [3, 0, 0], sizes = [1, 8, 8], strides = [1, 1, 1]} : vector<8x8x8xf32> to vector<1x8x8xf32>
    %125 = vector.shape_cast %124 : vector<1x8x8xf32> to vector<8x8xf32>
    %126 = tpu.concatenate %119, %121, %123, %125 in 1 : vector<8x8xf32>, vector<8x8xf32>, vector<8x8xf32>, vector<8x8xf32> -> vector<8x32xf32>
    %127 = vector.extract_strided_slice %117 {offsets = [4, 0, 0], sizes = [1, 8, 8], strides = [1, 1, 1]} : vector<8x8x8xf32> to vector<1x8x8xf32>
    %128 = vector.shape_cast %127 : vector<1x8x8xf32> to vector<8x8xf32>
    %129 = vector.extract_strided_slice %117 {offsets = [5, 0, 0], sizes = [1, 8, 8], strides = [1, 1, 1]} : vector<8x8x8xf32> to vector<1x8x8xf32>
    %130 = vector.shape_cast %129 : vector<1x8x8xf32> to vector<8x8xf32>
    %131 = vector.extract_strided_slice %117 {offsets = [6, 0, 0], sizes = [1, 8, 8], strides = [1, 1, 1]} : vector<8x8x8xf32> to vector<1x8x8xf32>
    %132 = vector.shape_cast %131 : vector<1x8x8xf32> to vector<8x8xf32>
    %133 = vector.extract_strided_slice %117 {offsets = [7, 0, 0], sizes = [1, 8, 8], strides = [1, 1, 1]} : vector<8x8x8xf32> to vector<1x8x8xf32>
    %134 = vector.shape_cast %133 : vector<1x8x8xf32> to vector<8x8xf32>
    %135 = tpu.concatenate %128, %130, %132, %134 in 1 : vector<8x8xf32>, vector<8x8xf32>, vector<8x8xf32>, vector<8x8xf32> -> vector<8x32xf32>
    %136 = tpu.concatenate %126, %135 in 0 : vector<8x32xf32>, vector<8x32xf32> -> vector<16x32xf32>
    %c0_36 = arith.constant 0 : index
    %c0_37 = arith.constant 0 : index
    %c0_38 = arith.constant 0 : index
    %137 = vector.load %arg9[%c0_36, %c0_37, %c0_38] : memref<2x32x32xf32, #tpu.memory_space<vmem>>, vector<1x32x32xf32>
    %138 = vector.shape_cast %137 : vector<1x32x32xf32> to vector<32x32xf32>
    %cst_39 = arith.constant dense<0.000000e+00> : vector<16x32xf32>
    %139 = tpu.matmul %136, %138, %cst_39 {dimension_numbers = #tpu.dot_dimension_numbers<[1], [0], [0], [1], [0, 0, 1, 1], [], []>} : vector<16x32xf32>, vector<32x32xf32>, vector<16x32xf32> -> vector<16x32xf32>
    %c0_40 = arith.constant 0 : index
    %c0_41 = arith.constant 0 : index
    %c0_42 = arith.constant 0 : index
    %140 = vector.load %arg10[%c0_40, %c0_41, %c0_42] : memref<2x1x32xf32, #tpu.memory_space<vmem>>, vector<1x1x32xf32>
    %141 = vector.shape_cast %140 : vector<1x1x32xf32> to vector<1x32xf32>
    %142 = vector.broadcast %141 : vector<1x32xf32> to vector<16x32xf32>
    %143 = arith.addf %139, %142 : vector<16x32xf32>
    %144 = arith.addf %16, %143 : vector<16x32xf32>
    %c0_43 = arith.constant 0 : index
    %c0_44 = arith.constant 0 : index
    %c0_45 = arith.constant 0 : index
    %145 = vector.load %arg11[%c0_43, %c0_44, %c0_45] : memref<2x1x32xf32, #tpu.memory_space<vmem>>, vector<1x1x32xf32>
    %146 = vector.shape_cast %145 : vector<1x1x32xf32> to vector<1x32xf32>
    %c0_46 = arith.constant 0 : index
    %c0_47 = arith.constant 0 : index
    %c0_48 = arith.constant 0 : index
    %147 = vector.load %arg12[%c0_46, %c0_47, %c0_48] : memref<2x1x32xf32, #tpu.memory_space<vmem>>, vector<1x1x32xf32>
    %148 = vector.shape_cast %147 : vector<1x1x32xf32> to vector<1x32xf32>
    %cst_49 = arith.constant dense<0.000000e+00> : vector<16xf32>
    %149 = vector.multi_reduction <add>, %144, %cst_49 [1] : vector<16x32xf32> to vector<16xf32>
    %150 = vector.shape_cast %149 : vector<16xf32> to vector<16x1xf32>
    %cst_50 = arith.constant 3.200000e+01 : f32
    %151 = vector.broadcast %cst_50 : f32 to vector<16x1xf32>
    %152 = arith.divf %150, %151 : vector<16x1xf32>
    %153 = vector.broadcast %152 : vector<16x1xf32> to vector<16x32xf32>
    %154 = arith.subf %144, %153 : vector<16x32xf32>
    %155 = arith.mulf %154, %154 : vector<16x32xf32>
    %cst_51 = arith.constant dense<0.000000e+00> : vector<16xf32>
    %156 = vector.multi_reduction <add>, %155, %cst_51 [1] : vector<16x32xf32> to vector<16xf32>
    %157 = vector.shape_cast %156 : vector<16xf32> to vector<16x1xf32>
    %cst_52 = arith.constant 3.200000e+01 : f32
    %158 = vector.broadcast %cst_52 : f32 to vector<16x1xf32>
    %159 = arith.divf %157, %158 : vector<16x1xf32>
    %160 = vector.broadcast %152 : vector<16x1xf32> to vector<16x32xf32>
    %161 = arith.subf %144, %160 : vector<16x32xf32>
    %cst_53 = arith.constant 9.99999997E-7 : f32
    %162 = vector.broadcast %cst_53 : f32 to vector<16x1xf32>
    %163 = arith.addf %159, %162 : vector<16x1xf32>
    %164 = math.rsqrt %163 : vector<16x1xf32>
    %165 = vector.broadcast %164 : vector<16x1xf32> to vector<16x32xf32>
    %166 = arith.mulf %161, %165 : vector<16x32xf32>
    %167 = vector.broadcast %146 : vector<1x32xf32> to vector<16x32xf32>
    %168 = arith.mulf %166, %167 : vector<16x32xf32>
    %169 = vector.broadcast %148 : vector<1x32xf32> to vector<16x32xf32>
    %170 = arith.addf %168, %169 : vector<16x32xf32>
    %c0_54 = arith.constant 0 : index
    %c0_55 = arith.constant 0 : index
    %c0_56 = arith.constant 0 : index
    %171 = vector.load %arg13[%c0_54, %c0_55, %c0_56] : memref<2x32x64xf32, #tpu.memory_space<vmem>>, vector<1x32x64xf32>
    %172 = vector.shape_cast %171 : vector<1x32x64xf32> to vector<32x64xf32>
    %cst_57 = arith.constant dense<0.000000e+00> : vector<16x64xf32>
    %173 = tpu.matmul %170, %172, %cst_57 {dimension_numbers = #tpu.dot_dimension_numbers<[1], [0], [0], [1], [0, 0, 1, 1], [], []>} : vector<16x32xf32>, vector<32x64xf32>, vector<16x64xf32> -> vector<16x64xf32>
    %c0_58 = arith.constant 0 : index
    %c0_59 = arith.constant 0 : index
    %c0_60 = arith.constant 0 : index
    %174 = vector.load %arg14[%c0_58, %c0_59, %c0_60] : memref<2x1x64xf32, #tpu.memory_space<vmem>>, vector<1x1x64xf32>
    %175 = vector.shape_cast %174 : vector<1x1x64xf32> to vector<1x64xf32>
    %176 = vector.broadcast %175 : vector<1x64xf32> to vector<16x64xf32>
    %177 = arith.addf %173, %176 : vector<16x64xf32>
    %cst_61 = arith.constant 5.000000e-01 : f32
    %178 = vector.broadcast %cst_61 : f32 to vector<16x64xf32>
    %179 = arith.mulf %178, %177 : vector<16x64xf32>
    %cst_62 = arith.constant 4.471500e-02 : f32
    %180 = vector.broadcast %cst_62 : f32 to vector<16x64xf32>
    %181 = arith.mulf %180, %177 : vector<16x64xf32>
    %182 = arith.mulf %181, %177 : vector<16x64xf32>
    %183 = arith.mulf %182, %177 : vector<16x64xf32>
    %184 = arith.addf %177, %183 : vector<16x64xf32>
    %cst_63 = arith.constant 0.797884583 : f32
    %185 = vector.broadcast %cst_63 : f32 to vector<16x64xf32>
    %186 = arith.mulf %185, %184 : vector<16x64xf32>
    %187 = math.tanh %186 : vector<16x64xf32>
    %cst_64 = arith.constant 1.000000e+00 : f32
    %188 = vector.broadcast %cst_64 : f32 to vector<16x64xf32>
    %189 = arith.addf %188, %187 : vector<16x64xf32>
    %190 = arith.mulf %179, %189 : vector<16x64xf32>
    %c0_65 = arith.constant 0 : index
    %c0_66 = arith.constant 0 : index
    %c0_67 = arith.constant 0 : index
    %191 = vector.load %arg15[%c0_65, %c0_66, %c0_67] : memref<2x64x32xf32, #tpu.memory_space<vmem>>, vector<1x64x32xf32>
    %192 = vector.shape_cast %191 : vector<1x64x32xf32> to vector<64x32xf32>
    %cst_68 = arith.constant dense<0.000000e+00> : vector<16x32xf32>
    %193 = tpu.matmul %190, %192, %cst_68 {dimension_numbers = #tpu.dot_dimension_numbers<[1], [0], [0], [1], [0, 0, 1, 1], [], []>} : vector<16x64xf32>, vector<64x32xf32>, vector<16x32xf32> -> vector<16x32xf32>
    %c0_69 = arith.constant 0 : index
    %c0_70 = arith.constant 0 : index
    %c0_71 = arith.constant 0 : index
    %194 = vector.load %arg16[%c0_69, %c0_70, %c0_71] : memref<2x1x32xf32, #tpu.memory_space<vmem>>, vector<1x1x32xf32>
    %195 = vector.shape_cast %194 : vector<1x1x32xf32> to vector<1x32xf32>
    %196 = vector.broadcast %195 : vector<1x32xf32> to vector<16x32xf32>
    %197 = arith.addf %193, %196 : vector<16x32xf32>
    %198 = arith.addf %144, %197 : vector<16x32xf32>
    %c1 = arith.constant 1 : index
    %c0_72 = arith.constant 0 : index
    %c0_73 = arith.constant 0 : index
    %199 = vector.load %arg5[%c1, %c0_72, %c0_73] : memref<2x1x32xf32, #tpu.memory_space<vmem>>, vector<1x1x32xf32>
    %200 = vector.shape_cast %199 : vector<1x1x32xf32> to vector<1x32xf32>
    %c1_74 = arith.constant 1 : index
    %c0_75 = arith.constant 0 : index
    %c0_76 = arith.constant 0 : index
    %201 = vector.load %arg6[%c1_74, %c0_75, %c0_76] : memref<2x1x32xf32, #tpu.memory_space<vmem>>, vector<1x1x32xf32>
    %202 = vector.shape_cast %201 : vector<1x1x32xf32> to vector<1x32xf32>
    %cst_77 = arith.constant dense<0.000000e+00> : vector<16xf32>
    %203 = vector.multi_reduction <add>, %198, %cst_77 [1] : vector<16x32xf32> to vector<16xf32>
    %204 = vector.shape_cast %203 : vector<16xf32> to vector<16x1xf32>
    %cst_78 = arith.constant 3.200000e+01 : f32
    %205 = vector.broadcast %cst_78 : f32 to vector<16x1xf32>
    %206 = arith.divf %204, %205 : vector<16x1xf32>
    %207 = vector.broadcast %206 : vector<16x1xf32> to vector<16x32xf32>
    %208 = arith.subf %198, %207 : vector<16x32xf32>
    %209 = arith.mulf %208, %208 : vector<16x32xf32>
    %cst_79 = arith.constant dense<0.000000e+00> : vector<16xf32>
    %210 = vector.multi_reduction <add>, %209, %cst_79 [1] : vector<16x32xf32> to vector<16xf32>
    %211 = vector.shape_cast %210 : vector<16xf32> to vector<16x1xf32>
    %cst_80 = arith.constant 3.200000e+01 : f32
    %212 = vector.broadcast %cst_80 : f32 to vector<16x1xf32>
    %213 = arith.divf %211, %212 : vector<16x1xf32>
    %214 = vector.broadcast %206 : vector<16x1xf32> to vector<16x32xf32>
    %215 = arith.subf %198, %214 : vector<16x32xf32>
    %cst_81 = arith.constant 9.99999997E-7 : f32
    %216 = vector.broadcast %cst_81 : f32 to vector<16x1xf32>
    %217 = arith.addf %213, %216 : vector<16x1xf32>
    %218 = math.rsqrt %217 : vector<16x1xf32>
    %219 = vector.broadcast %218 : vector<16x1xf32> to vector<16x32xf32>
    %220 = arith.mulf %215, %219 : vector<16x32xf32>
    %221 = vector.broadcast %200 : vector<1x32xf32> to vector<16x32xf32>
    %222 = arith.mulf %220, %221 : vector<16x32xf32>
    %223 = vector.broadcast %202 : vector<1x32xf32> to vector<16x32xf32>
    %224 = arith.addf %222, %223 : vector<16x32xf32>
    %c1_82 = arith.constant 1 : index
    %c0_83 = arith.constant 0 : index
    %c0_84 = arith.constant 0 : index
    %225 = vector.load %arg7[%c1_82, %c0_83, %c0_84] : memref<2x32x96xf32, #tpu.memory_space<vmem>>, vector<1x32x96xf32>
    %226 = vector.shape_cast %225 : vector<1x32x96xf32> to vector<32x96xf32>
    %cst_85 = arith.constant dense<0.000000e+00> : vector<16x96xf32>
    %227 = tpu.matmul %224, %226, %cst_85 {dimension_numbers = #tpu.dot_dimension_numbers<[1], [0], [0], [1], [0, 0, 1, 1], [], []>} : vector<16x32xf32>, vector<32x96xf32>, vector<16x96xf32> -> vector<16x96xf32>
    %c1_86 = arith.constant 1 : index
    %c0_87 = arith.constant 0 : index
    %c0_88 = arith.constant 0 : index
    %228 = vector.load %arg8[%c1_86, %c0_87, %c0_88] : memref<2x1x96xf32, #tpu.memory_space<vmem>>, vector<1x1x96xf32>
    %229 = vector.shape_cast %228 : vector<1x1x96xf32> to vector<1x96xf32>
    %230 = vector.broadcast %229 : vector<1x96xf32> to vector<16x96xf32>
    %231 = arith.addf %227, %230 : vector<16x96xf32>
    %232 = vector.extract_strided_slice %231 {offsets = [0, 0], sizes = [16, 32], strides = [1, 1]} : vector<16x96xf32> to vector<16x32xf32>
    %233 = vector.extract_strided_slice %231 {offsets = [0, 32], sizes = [16, 32], strides = [1, 1]} : vector<16x96xf32> to vector<16x32xf32>
    %234 = vector.extract_strided_slice %231 {offsets = [0, 64], sizes = [16, 32], strides = [1, 1]} : vector<16x96xf32> to vector<16x32xf32>
    %235 = vector.extract_strided_slice %232 {offsets = [0, 0], sizes = [8, 8], strides = [1, 1]} : vector<16x32xf32> to vector<8x8xf32>
    %236 = vector.extract_strided_slice %232 {offsets = [0, 8], sizes = [8, 8], strides = [1, 1]} : vector<16x32xf32> to vector<8x8xf32>
    %237 = vector.extract_strided_slice %232 {offsets = [0, 16], sizes = [8, 8], strides = [1, 1]} : vector<16x32xf32> to vector<8x8xf32>
    %238 = vector.extract_strided_slice %232 {offsets = [0, 24], sizes = [8, 8], strides = [1, 1]} : vector<16x32xf32> to vector<8x8xf32>
    %239 = vector.extract_strided_slice %232 {offsets = [8, 0], sizes = [8, 8], strides = [1, 1]} : vector<16x32xf32> to vector<8x8xf32>
    %240 = vector.extract_strided_slice %232 {offsets = [8, 8], sizes = [8, 8], strides = [1, 1]} : vector<16x32xf32> to vector<8x8xf32>
    %241 = vector.extract_strided_slice %232 {offsets = [8, 16], sizes = [8, 8], strides = [1, 1]} : vector<16x32xf32> to vector<8x8xf32>
    %242 = vector.extract_strided_slice %232 {offsets = [8, 24], sizes = [8, 8], strides = [1, 1]} : vector<16x32xf32> to vector<8x8xf32>
    %243 = vector.shape_cast %235 : vector<8x8xf32> to vector<1x8x8xf32>
    %244 = vector.shape_cast %236 : vector<8x8xf32> to vector<1x8x8xf32>
    %245 = vector.shape_cast %237 : vector<8x8xf32> to vector<1x8x8xf32>
    %246 = vector.shape_cast %238 : vector<8x8xf32> to vector<1x8x8xf32>
    %247 = vector.shape_cast %239 : vector<8x8xf32> to vector<1x8x8xf32>
    %248 = vector.shape_cast %240 : vector<8x8xf32> to vector<1x8x8xf32>
    %249 = vector.shape_cast %241 : vector<8x8xf32> to vector<1x8x8xf32>
    %250 = vector.shape_cast %242 : vector<8x8xf32> to vector<1x8x8xf32>
    %251 = tpu.concatenate %243, %244, %245, %246, %247, %248, %249, %250 in 0 : vector<1x8x8xf32>, vector<1x8x8xf32>, vector<1x8x8xf32>, vector<1x8x8xf32>, vector<1x8x8xf32>, vector<1x8x8xf32>, vector<1x8x8xf32>, vector<1x8x8xf32> -> vector<8x8x8xf32>
    %252 = vector.extract_strided_slice %233 {offsets = [0, 0], sizes = [8, 8], strides = [1, 1]} : vector<16x32xf32> to vector<8x8xf32>
    %253 = vector.extract_strided_slice %233 {offsets = [0, 8], sizes = [8, 8], strides = [1, 1]} : vector<16x32xf32> to vector<8x8xf32>
    %254 = vector.extract_strided_slice %233 {offsets = [0, 16], sizes = [8, 8], strides = [1, 1]} : vector<16x32xf32> to vector<8x8xf32>
    %255 = vector.extract_strided_slice %233 {offsets = [0, 24], sizes = [8, 8], strides = [1, 1]} : vector<16x32xf32> to vector<8x8xf32>
    %256 = vector.extract_strided_slice %233 {offsets = [8, 0], sizes = [8, 8], strides = [1, 1]} : vector<16x32xf32> to vector<8x8xf32>
    %257 = vector.extract_strided_slice %233 {offsets = [8, 8], sizes = [8, 8], strides = [1, 1]} : vector<16x32xf32> to vector<8x8xf32>
    %258 = vector.extract_strided_slice %233 {offsets = [8, 16], sizes = [8, 8], strides = [1, 1]} : vector<16x32xf32> to vector<8x8xf32>
    %259 = vector.extract_strided_slice %233 {offsets = [8, 24], sizes = [8, 8], strides = [1, 1]} : vector<16x32xf32> to vector<8x8xf32>
    %260 = vector.shape_cast %252 : vector<8x8xf32> to vector<1x8x8xf32>
    %261 = vector.shape_cast %253 : vector<8x8xf32> to vector<1x8x8xf32>
    %262 = vector.shape_cast %254 : vector<8x8xf32> to vector<1x8x8xf32>
    %263 = vector.shape_cast %255 : vector<8x8xf32> to vector<1x8x8xf32>
    %264 = vector.shape_cast %256 : vector<8x8xf32> to vector<1x8x8xf32>
    %265 = vector.shape_cast %257 : vector<8x8xf32> to vector<1x8x8xf32>
    %266 = vector.shape_cast %258 : vector<8x8xf32> to vector<1x8x8xf32>
    %267 = vector.shape_cast %259 : vector<8x8xf32> to vector<1x8x8xf32>
    %268 = tpu.concatenate %260, %261, %262, %263, %264, %265, %266, %267 in 0 : vector<1x8x8xf32>, vector<1x8x8xf32>, vector<1x8x8xf32>, vector<1x8x8xf32>, vector<1x8x8xf32>, vector<1x8x8xf32>, vector<1x8x8xf32>, vector<1x8x8xf32> -> vector<8x8x8xf32>
    %269 = vector.extract_strided_slice %234 {offsets = [0, 0], sizes = [8, 8], strides = [1, 1]} : vector<16x32xf32> to vector<8x8xf32>
    %270 = vector.extract_strided_slice %234 {offsets = [0, 8], sizes = [8, 8], strides = [1, 1]} : vector<16x32xf32> to vector<8x8xf32>
    %271 = vector.extract_strided_slice %234 {offsets = [0, 16], sizes = [8, 8], strides = [1, 1]} : vector<16x32xf32> to vector<8x8xf32>
    %272 = vector.extract_strided_slice %234 {offsets = [0, 24], sizes = [8, 8], strides = [1, 1]} : vector<16x32xf32> to vector<8x8xf32>
    %273 = vector.extract_strided_slice %234 {offsets = [8, 0], sizes = [8, 8], strides = [1, 1]} : vector<16x32xf32> to vector<8x8xf32>
    %274 = vector.extract_strided_slice %234 {offsets = [8, 8], sizes = [8, 8], strides = [1, 1]} : vector<16x32xf32> to vector<8x8xf32>
    %275 = vector.extract_strided_slice %234 {offsets = [8, 16], sizes = [8, 8], strides = [1, 1]} : vector<16x32xf32> to vector<8x8xf32>
    %276 = vector.extract_strided_slice %234 {offsets = [8, 24], sizes = [8, 8], strides = [1, 1]} : vector<16x32xf32> to vector<8x8xf32>
    %277 = vector.shape_cast %269 : vector<8x8xf32> to vector<1x8x8xf32>
    %278 = vector.shape_cast %270 : vector<8x8xf32> to vector<1x8x8xf32>
    %279 = vector.shape_cast %271 : vector<8x8xf32> to vector<1x8x8xf32>
    %280 = vector.shape_cast %272 : vector<8x8xf32> to vector<1x8x8xf32>
    %281 = vector.shape_cast %273 : vector<8x8xf32> to vector<1x8x8xf32>
    %282 = vector.shape_cast %274 : vector<8x8xf32> to vector<1x8x8xf32>
    %283 = vector.shape_cast %275 : vector<8x8xf32> to vector<1x8x8xf32>
    %284 = vector.shape_cast %276 : vector<8x8xf32> to vector<1x8x8xf32>
    %285 = tpu.concatenate %277, %278, %279, %280, %281, %282, %283, %284 in 0 : vector<1x8x8xf32>, vector<1x8x8xf32>, vector<1x8x8xf32>, vector<1x8x8xf32>, vector<1x8x8xf32>, vector<1x8x8xf32>, vector<1x8x8xf32>, vector<1x8x8xf32> -> vector<8x8x8xf32>
    "tpu.trace_start"() <{level = 10 : i32, message = "bqd,bkd->bqk"}> : () -> ()
    %cst_89 = arith.constant dense<0.000000e+00> : vector<8x8x8xf32>
    %286 = tpu.matmul %251, %268, %cst_89 {dimension_numbers = #tpu.dot_dimension_numbers<[2], [2], [1], [1], [0, 0, 0, 1, 1, 1], [0], [0]>} : vector<8x8x8xf32>, vector<8x8x8xf32>, vector<8x8x8xf32> -> vector<8x8x8xf32>
    "tpu.trace_stop"() : () -> ()
    %cst_90 = arith.constant 0.353553385 : f32
    %287 = vector.broadcast %cst_90 : f32 to vector<8x8x8xf32>
    %288 = arith.mulf %286, %287 : vector<8x8x8xf32>
    %cst_91 = arith.constant dense<0xFF800000> : vector<8x8xf32>
    %289 = vector.multi_reduction <maximumf>, %288, %cst_91 [2] : vector<8x8x8xf32> to vector<8x8xf32>
    %290 = vector.shape_cast %289 : vector<8x8xf32> to vector<8x8x1xf32>
    %291 = vector.broadcast %290 : vector<8x8x1xf32> to vector<8x8x8xf32>
    %292 = arith.subf %288, %291 : vector<8x8x8xf32>
    %293 = math.exp %292 : vector<8x8x8xf32>
    %cst_92 = arith.constant dense<0.000000e+00> : vector<8x8xf32>
    %294 = vector.multi_reduction <add>, %293, %cst_92 [2] : vector<8x8x8xf32> to vector<8x8xf32>
    %295 = vector.shape_cast %294 : vector<8x8xf32> to vector<8x8x1xf32>
    %296 = tpu.reciprocal %295 {approx = true} : vector<8x8x1xf32> -> vector<8x8x1xf32>
    %297 = vector.broadcast %296 : vector<8x8x1xf32> to vector<8x8x8xf32>
    %298 = arith.mulf %293, %297 : vector<8x8x8xf32>
    "tpu.trace_start"() <{level = 10 : i32, message = "bqk,bkd->bqd"}> : () -> ()
    %cst_93 = arith.constant dense<0.000000e+00> : vector<8x8x8xf32>
    %299 = tpu.matmul %298, %285, %cst_93 {dimension_numbers = #tpu.dot_dimension_numbers<[2], [1], [1], [2], [0, 0, 0, 1, 1, 2], [0], [0]>} : vector<8x8x8xf32>, vector<8x8x8xf32>, vector<8x8x8xf32> -> vector<8x8x8xf32>
    "tpu.trace_stop"() : () -> ()
    %300 = vector.extract_strided_slice %299 {offsets = [0, 0, 0], sizes = [1, 8, 8], strides = [1, 1, 1]} : vector<8x8x8xf32> to vector<1x8x8xf32>
    %301 = vector.shape_cast %300 : vector<1x8x8xf32> to vector<8x8xf32>
    %302 = vector.extract_strided_slice %299 {offsets = [1, 0, 0], sizes = [1, 8, 8], strides = [1, 1, 1]} : vector<8x8x8xf32> to vector<1x8x8xf32>
    %303 = vector.shape_cast %302 : vector<1x8x8xf32> to vector<8x8xf32>
    %304 = vector.extract_strided_slice %299 {offsets = [2, 0, 0], sizes = [1, 8, 8], strides = [1, 1, 1]} : vector<8x8x8xf32> to vector<1x8x8xf32>
    %305 = vector.shape_cast %304 : vector<1x8x8xf32> to vector<8x8xf32>
    %306 = vector.extract_strided_slice %299 {offsets = [3, 0, 0], sizes = [1, 8, 8], strides = [1, 1, 1]} : vector<8x8x8xf32> to vector<1x8x8xf32>
    %307 = vector.shape_cast %306 : vector<1x8x8xf32> to vector<8x8xf32>
    %308 = tpu.concatenate %301, %303, %305, %307 in 1 : vector<8x8xf32>, vector<8x8xf32>, vector<8x8xf32>, vector<8x8xf32> -> vector<8x32xf32>
    %309 = vector.extract_strided_slice %299 {offsets = [4, 0, 0], sizes = [1, 8, 8], strides = [1, 1, 1]} : vector<8x8x8xf32> to vector<1x8x8xf32>
    %310 = vector.shape_cast %309 : vector<1x8x8xf32> to vector<8x8xf32>
    %311 = vector.extract_strided_slice %299 {offsets = [5, 0, 0], sizes = [1, 8, 8], strides = [1, 1, 1]} : vector<8x8x8xf32> to vector<1x8x8xf32>
    %312 = vector.shape_cast %311 : vector<1x8x8xf32> to vector<8x8xf32>
    %313 = vector.extract_strided_slice %299 {offsets = [6, 0, 0], sizes = [1, 8, 8], strides = [1, 1, 1]} : vector<8x8x8xf32> to vector<1x8x8xf32>
    %314 = vector.shape_cast %313 : vector<1x8x8xf32> to vector<8x8xf32>
    %315 = vector.extract_strided_slice %299 {offsets = [7, 0, 0], sizes = [1, 8, 8], strides = [1, 1, 1]} : vector<8x8x8xf32> to vector<1x8x8xf32>
    %316 = vector.shape_cast %315 : vector<1x8x8xf32> to vector<8x8xf32>
    %317 = tpu.concatenate %310, %312, %314, %316 in 1 : vector<8x8xf32>, vector<8x8xf32>, vector<8x8xf32>, vector<8x8xf32> -> vector<8x32xf32>
    %318 = tpu.concatenate %308, %317 in 0 : vector<8x32xf32>, vector<8x32xf32> -> vector<16x32xf32>
    %c1_94 = arith.constant 1 : index
    %c0_95 = arith.constant 0 : index
    %c0_96 = arith.constant 0 : index
    %319 = vector.load %arg9[%c1_94, %c0_95, %c0_96] : memref<2x32x32xf32, #tpu.memory_space<vmem>>, vector<1x32x32xf32>
    %320 = vector.shape_cast %319 : vector<1x32x32xf32> to vector<32x32xf32>
    %cst_97 = arith.constant dense<0.000000e+00> : vector<16x32xf32>
    %321 = tpu.matmul %318, %320, %cst_97 {dimension_numbers = #tpu.dot_dimension_numbers<[1], [0], [0], [1], [0, 0, 1, 1], [], []>} : vector<16x32xf32>, vector<32x32xf32>, vector<16x32xf32> -> vector<16x32xf32>
    %c1_98 = arith.constant 1 : index
    %c0_99 = arith.constant 0 : index
    %c0_100 = arith.constant 0 : index
    %322 = vector.load %arg10[%c1_98, %c0_99, %c0_100] : memref<2x1x32xf32, #tpu.memory_space<vmem>>, vector<1x1x32xf32>
    %323 = vector.shape_cast %322 : vector<1x1x32xf32> to vector<1x32xf32>
    %324 = vector.broadcast %323 : vector<1x32xf32> to vector<16x32xf32>
    %325 = arith.addf %321, %324 : vector<16x32xf32>
    %326 = arith.addf %198, %325 : vector<16x32xf32>
    %c1_101 = arith.constant 1 : index
    %c0_102 = arith.constant 0 : index
    %c0_103 = arith.constant 0 : index
    %327 = vector.load %arg11[%c1_101, %c0_102, %c0_103] : memref<2x1x32xf32, #tpu.memory_space<vmem>>, vector<1x1x32xf32>
    %328 = vector.shape_cast %327 : vector<1x1x32xf32> to vector<1x32xf32>
    %c1_104 = arith.constant 1 : index
    %c0_105 = arith.constant 0 : index
    %c0_106 = arith.constant 0 : index
    %329 = vector.load %arg12[%c1_104, %c0_105, %c0_106] : memref<2x1x32xf32, #tpu.memory_space<vmem>>, vector<1x1x32xf32>
    %330 = vector.shape_cast %329 : vector<1x1x32xf32> to vector<1x32xf32>
    %cst_107 = arith.constant dense<0.000000e+00> : vector<16xf32>
    %331 = vector.multi_reduction <add>, %326, %cst_107 [1] : vector<16x32xf32> to vector<16xf32>
    %332 = vector.shape_cast %331 : vector<16xf32> to vector<16x1xf32>
    %cst_108 = arith.constant 3.200000e+01 : f32
    %333 = vector.broadcast %cst_108 : f32 to vector<16x1xf32>
    %334 = arith.divf %332, %333 : vector<16x1xf32>
    %335 = vector.broadcast %334 : vector<16x1xf32> to vector<16x32xf32>
    %336 = arith.subf %326, %335 : vector<16x32xf32>
    %337 = arith.mulf %336, %336 : vector<16x32xf32>
    %cst_109 = arith.constant dense<0.000000e+00> : vector<16xf32>
    %338 = vector.multi_reduction <add>, %337, %cst_109 [1] : vector<16x32xf32> to vector<16xf32>
    %339 = vector.shape_cast %338 : vector<16xf32> to vector<16x1xf32>
    %cst_110 = arith.constant 3.200000e+01 : f32
    %340 = vector.broadcast %cst_110 : f32 to vector<16x1xf32>
    %341 = arith.divf %339, %340 : vector<16x1xf32>
    %342 = vector.broadcast %334 : vector<16x1xf32> to vector<16x32xf32>
    %343 = arith.subf %326, %342 : vector<16x32xf32>
    %cst_111 = arith.constant 9.99999997E-7 : f32
    %344 = vector.broadcast %cst_111 : f32 to vector<16x1xf32>
    %345 = arith.addf %341, %344 : vector<16x1xf32>
    %346 = math.rsqrt %345 : vector<16x1xf32>
    %347 = vector.broadcast %346 : vector<16x1xf32> to vector<16x32xf32>
    %348 = arith.mulf %343, %347 : vector<16x32xf32>
    %349 = vector.broadcast %328 : vector<1x32xf32> to vector<16x32xf32>
    %350 = arith.mulf %348, %349 : vector<16x32xf32>
    %351 = vector.broadcast %330 : vector<1x32xf32> to vector<16x32xf32>
    %352 = arith.addf %350, %351 : vector<16x32xf32>
    %c1_112 = arith.constant 1 : index
    %c0_113 = arith.constant 0 : index
    %c0_114 = arith.constant 0 : index
    %353 = vector.load %arg13[%c1_112, %c0_113, %c0_114] : memref<2x32x64xf32, #tpu.memory_space<vmem>>, vector<1x32x64xf32>
    %354 = vector.shape_cast %353 : vector<1x32x64xf32> to vector<32x64xf32>
    %cst_115 = arith.constant dense<0.000000e+00> : vector<16x64xf32>
    %355 = tpu.matmul %352, %354, %cst_115 {dimension_numbers = #tpu.dot_dimension_numbers<[1], [0], [0], [1], [0, 0, 1, 1], [], []>} : vector<16x32xf32>, vector<32x64xf32>, vector<16x64xf32> -> vector<16x64xf32>
    %c1_116 = arith.constant 1 : index
    %c0_117 = arith.constant 0 : index
    %c0_118 = arith.constant 0 : index
    %356 = vector.load %arg14[%c1_116, %c0_117, %c0_118] : memref<2x1x64xf32, #tpu.memory_space<vmem>>, vector<1x1x64xf32>
    %357 = vector.shape_cast %356 : vector<1x1x64xf32> to vector<1x64xf32>
    %358 = vector.broadcast %357 : vector<1x64xf32> to vector<16x64xf32>
    %359 = arith.addf %355, %358 : vector<16x64xf32>
    %cst_119 = arith.constant 5.000000e-01 : f32
    %360 = vector.broadcast %cst_119 : f32 to vector<16x64xf32>
    %361 = arith.mulf %360, %359 : vector<16x64xf32>
    %cst_120 = arith.constant 4.471500e-02 : f32
    %362 = vector.broadcast %cst_120 : f32 to vector<16x64xf32>
    %363 = arith.mulf %362, %359 : vector<16x64xf32>
    %364 = arith.mulf %363, %359 : vector<16x64xf32>
    %365 = arith.mulf %364, %359 : vector<16x64xf32>
    %366 = arith.addf %359, %365 : vector<16x64xf32>
    %cst_121 = arith.constant 0.797884583 : f32
    %367 = vector.broadcast %cst_121 : f32 to vector<16x64xf32>
    %368 = arith.mulf %367, %366 : vector<16x64xf32>
    %369 = math.tanh %368 : vector<16x64xf32>
    %cst_122 = arith.constant 1.000000e+00 : f32
    %370 = vector.broadcast %cst_122 : f32 to vector<16x64xf32>
    %371 = arith.addf %370, %369 : vector<16x64xf32>
    %372 = arith.mulf %361, %371 : vector<16x64xf32>
    %c1_123 = arith.constant 1 : index
    %c0_124 = arith.constant 0 : index
    %c0_125 = arith.constant 0 : index
    %373 = vector.load %arg15[%c1_123, %c0_124, %c0_125] : memref<2x64x32xf32, #tpu.memory_space<vmem>>, vector<1x64x32xf32>
    %374 = vector.shape_cast %373 : vector<1x64x32xf32> to vector<64x32xf32>
    %cst_126 = arith.constant dense<0.000000e+00> : vector<16x32xf32>
    %375 = tpu.matmul %372, %374, %cst_126 {dimension_numbers = #tpu.dot_dimension_numbers<[1], [0], [0], [1], [0, 0, 1, 1], [], []>} : vector<16x64xf32>, vector<64x32xf32>, vector<16x32xf32> -> vector<16x32xf32>
    %c1_127 = arith.constant 1 : index
    %c0_128 = arith.constant 0 : index
    %c0_129 = arith.constant 0 : index
    %376 = vector.load %arg16[%c1_127, %c0_128, %c0_129] : memref<2x1x32xf32, #tpu.memory_space<vmem>>, vector<1x1x32xf32>
    %377 = vector.shape_cast %376 : vector<1x1x32xf32> to vector<1x32xf32>
    %378 = vector.broadcast %377 : vector<1x32xf32> to vector<16x32xf32>
    %379 = arith.addf %375, %378 : vector<16x32xf32>
    %380 = arith.addf %326, %379 : vector<16x32xf32>
    %c0_130 = arith.constant 0 : index
    %c0_131 = arith.constant 0 : index
    %381 = vector.load %arg17[%c0_130, %c0_131] : memref<16x32xf32, #tpu.memory_space<vmem>>, vector<16x32xf32>
    tpu.vector_store %arg17[%c0_130, %c0_131], %380 {strides = array<i32>} : memref<16x32xf32, #tpu.memory_space<vmem>>, vector<16x32xf32>,
    return
  }
}

</mosaic_0001>

<llo_original>
// kernel: vit_forward.1
$region0: #{vit_forward.1}
  #allocation0 [shape = 'u32[]', space=smem, size = 0x4, offset = 0x4, fixed_abs, tag = 'smem constant byte address 0x4 - core index']
  #allocation1 [shape = 'u32[144,128]{1,0:T(1,128)}', space=vmem, size = 0x12000, scoped, tag = 'internal scratch']
  %s0 = inlined_call_operand.vmem [shape: f32[8,256], index: 0, kind: input, shape index: {}]
  %s1 = inlined_call_operand.vmem [shape: f32[256,32], index: 1, kind: input, shape index: {}]
  %s2 = inlined_call_operand.vmem [shape: f32[1,32], index: 2, kind: input, shape index: {}]
  %s3 = inlined_call_operand.vmem [shape: f32[4,32], index: 3, kind: input, shape index: {}]
  %s4 = inlined_call_operand.vmem [shape: f32[8,32], index: 4, kind: input, shape index: {}]
  %s5 = inlined_call_operand.vmem [shape: f32[2,1,32], index: 5, kind: input, shape index: {}]
  %s6 = inlined_call_operand.vmem [shape: f32[2,1,32], index: 6, kind: input, shape index: {}]
  %s7 = inlined_call_operand.vmem [shape: f32[2,32,96], index: 7, kind: input, shape index: {}]
  %s8 = inlined_call_operand.vmem [shape: f32[2,1,96], index: 8, kind: input, shape index: {}]
  %s9 = inlined_call_operand.vmem [shape: f32[2,32,32], index: 9, kind: input, shape index: {}]
  %s10 = inlined_call_operand.vmem [shape: f32[2,1,32], index: 10, kind: input, shape index: {}]
  %s11 = inlined_call_operand.vmem [shape: f32[2,1,32], index: 11, kind: input, shape index: {}]
  %s12 = inlined_call_operand.vmem [shape: f32[2,1,32], index: 12, kind: input, shape index: {}]
  %s13 = inlined_call_operand.vmem [shape: f32[2,32,64], index: 13, kind: input, shape index: {}]
  %s14 = inlined_call_operand.vmem [shape: f32[2,1,64], index: 14, kind: input, shape index: {}]
  %s15 = inlined_call_operand.vmem [shape: f32[2,64,32], index: 15, kind: input, shape index: {}]
  %s16 = inlined_call_operand.vmem [shape: f32[2,1,32], index: 16, kind: input, shape index: {}]
  %s17 = inlined_call_operand.vmem [shape: f32[16,32], index: 17, kind: output, shape index: {}]
  %s18 = sld [smem:[#allocation0]]
  $region78: #{vit_forward.1} parent=0
    _
  %s20 = ssub.s32 1, %s18
  %s21 = scalar_select 0, %s20, %s18
  // Predicated region
  $region2: #{vit_forward.1} parent=0 // pred_check
    _
  $region3: #{vit_forward.1} parent=0 // pred_check_branch
    %23 = sbr.rel (0) target = $region5
  $region4: #{vit_forward.1} parent=0 // pred_region
    _
  $region5: #{vit_forward.1} parent=0 // pred_fallthru
    _
  // Predicated region
  $region6: #{vit_forward.1} parent=0 // pred_check
    _
  $region7: #{vit_forward.1} parent=0 // pred_check_branch
    %25 = sbr.rel (0) target = $region9
  $region8: #{vit_forward.1} parent=0 // pred_region
    _
  $region9: #{vit_forward.1} parent=0 // pred_fallthru
    _
  // Predicated region
  $region10: #{vit_forward.1} parent=0 // pred_check
    _
  $region11: #{vit_forward.1} parent=0 // pred_check_branch
    %27 = sbr.rel (0) target = $region13
  $region12: #{vit_forward.1} parent=0 // pred_region
    _
  $region13: #{vit_forward.1} parent=0 // pred_fallthru
    _
  // Predicated region
  $region14: #{vit_forward.1} parent=0 // pred_check
    _
  $region15: #{vit_forward.1} parent=0 // pred_check_branch
    %29 = sbr.rel (0) target = $region17
  $region16: #{vit_forward.1} parent=0 // pred_region
    _
  $region17: #{vit_forward.1} parent=0 // pred_fallthru
    _
  // Predicated region
  $region18: #{vit_forward.1} parent=0 // pred_check
    _
  $region19: #{vit_forward.1} parent=0 // pred_check_branch
    %31 = sbr.rel (0) target = $region21
  $region20: #{vit_forward.1} parent=0 // pred_region
    _
  $region21: #{vit_forward.1} parent=0 // pred_fallthru
    _
  // Predicated region
  $region22: #{vit_forward.1} parent=0 // pred_check
    _
  $region23: #{vit_forward.1} parent=0 // pred_check_branch
    %33 = sbr.rel (0) target = $region25
  $region24: #{vit_forward.1} parent=0 // pred_region
    _
  $region25: #{vit_forward.1} parent=0 // pred_fallthru
    _
  // Predicated region
  $region26: #{vit_forward.1} parent=0 // pred_check
    _
  $region27: #{vit_forward.1} parent=0 // pred_check_branch
    %35 = sbr.rel (0) target = $region29
  $region28: #{vit_forward.1} parent=0 // pred_region
    _
  $region29: #{vit_forward.1} parent=0 // pred_fallthru
    _
  // Predicated region
  $region30: #{vit_forward.1} parent=0 // pred_check
    _
  $region31: #{vit_forward.1} parent=0 // pred_check_branch
    %37 = sbr.rel (0) target = $region33
  $region32: #{vit_forward.1} parent=0 // pred_region
    _
  $region33: #{vit_forward.1} parent=0 // pred_fallthru
    _
  // Predicated region
  $region34: #{vit_forward.1} parent=0 // pred_check
    _
  $region35: #{vit_forward.1} parent=0 // pred_check_branch
    %39 = sbr.rel (0) target = $region37
  $region36: #{vit_forward.1} parent=0 // pred_region
    _
  $region37: #{vit_forward.1} parent=0 // pred_fallthru
    _
  // Predicated region
  $region38: #{vit_forward.1} parent=0 // pred_check
    _
  $region39: #{vit_forward.1} parent=0 // pred_check_branch
    %41 = sbr.rel (0) target = $region41
  $region40: #{vit_forward.1} parent=0 // pred_region
    _
  $region41: #{vit_forward.1} parent=0 // pred_fallthru
    _
  // Predicated region
  $region42: #{vit_forward.1} parent=0 // pred_check
    _
  $region43: #{vit_forward.1} parent=0 // pred_check_branch
    %43 = sbr.rel (0) target = $region45
  $region44: #{vit_forward.1} parent=0 // pred_region
    _
  $region45: #{vit_forward.1} parent=0 // pred_fallthru
    _
  // Predicated region
  $region46: #{vit_forward.1} parent=0 // pred_check
    _
  $region47: #{vit_forward.1} parent=0 // pred_check_branch
    %45 = sbr.rel (0) target = $region49
  $region48: #{vit_forward.1} parent=0 // pred_region
    _
  $region49: #{vit_forward.1} parent=0 // pred_fallthru
    _
  // Predicated region
  $region50: #{vit_forward.1} parent=0 // pred_check
    _
  $region51: #{vit_forward.1} parent=0 // pred_check_branch
    %47 = sbr.rel (0) target = $region53
  $region52: #{vit_forward.1} parent=0 // pred_region
    _
  $region53: #{vit_forward.1} parent=0 // pred_fallthru
    _
  // Predicated region
  $region54: #{vit_forward.1} parent=0 // pred_check
    _
  $region55: #{vit_forward.1} parent=0 // pred_check_branch
    %49 = sbr.rel (0) target = $region57
  $region56: #{vit_forward.1} parent=0 // pred_region
    _
  $region57: #{vit_forward.1} parent=0 // pred_fallthru
    _
  // Predicated region
  $region58: #{vit_forward.1} parent=0 // pred_check
    _
  $region59: #{vit_forward.1} parent=0 // pred_check_branch
    %51 = sbr.rel (0) target = $region61
  $region60: #{vit_forward.1} parent=0 // pred_region
    _
  $region61: #{vit_forward.1} parent=0 // pred_fallthru
    _
  // Predicated region
  $region62: #{vit_forward.1} parent=0 // pred_check
    _
  $region63: #{vit_forward.1} parent=0 // pred_check_branch
    %53 = sbr.rel (0) target = $region65
  $region64: #{vit_forward.1} parent=0 // pred_region
    _
  $region65: #{vit_forward.1} parent=0 // pred_fallthru
    _
  // Predicated region
  $region66: #{vit_forward.1} parent=0 // pred_check
    _
  $region67: #{vit_forward.1} parent=0 // pred_check_branch
    %55 = sbr.rel (0) target = $region69
  $region68: #{vit_forward.1} parent=0 // pred_region
    _
  $region69: #{vit_forward.1} parent=0 // pred_fallthru
    _
  %v56 = vld [vmem:[%s0] sm:$0xff]
  %v57 = vld [vmem:[%s0 + $0x8] sm:$0xff]
  %v58 = vld [vmem:[%s1] sm:$0xff]
  %v59 = vld [vmem:[%s1 + $0x8] sm:$0xff]
  %v60 = vld [vmem:[%s1 + $0x10] sm:$0xff]
  %v61 = vld [vmem:[%s1 + $0x18] sm:$0xff]
  %v62 = vld [vmem:[%s1 + $0x20] sm:$0xff]
  %v63 = vld [vmem:[%s1 + $0x28] sm:$0xff]
  %v64 = vld [vmem:[%s1 + $0x30] sm:$0xff]
  %v65 = vld [vmem:[%s1 + $0x38] sm:$0xff]
  %v66 = vld [vmem:[%s1 + $0x40] sm:$0xff]
  %v67 = vld [vmem:[%s1 + $0x48] sm:$0xff]
  %v68 = vld [vmem:[%s1 + $0x50] sm:$0xff]
  %v69 = vld [vmem:[%s1 + $0x58] sm:$0xff]
  %v70 = vld [vmem:[%s1 + $0x60] sm:$0xff]
  %v71 = vld [vmem:[%s1 + $0x68] sm:$0xff]
  %v72 = vld [vmem:[%s1 + $0x70] sm:$0xff]
  %v73 = vld [vmem:[%s1 + $0x78] sm:$0xff]
  %v74 = vld [vmem:[%s1 + $0x80] sm:$0xff]
  %v75 = vld [vmem:[%s1 + $0x88] sm:$0xff]
  %v76 = vld [vmem:[%s1 + $0x90] sm:$0xff]
  %v77 = vld [vmem:[%s1 + $0x98] sm:$0xff]
  %v78 = vld [vmem:[%s1 + $0xa0] sm:$0xff]
  %v79 = vld [vmem:[%s1 + $0xa8] sm:$0xff]
  %v80 = vld [vmem:[%s1 + $0xb0] sm:$0xff]
  %v81 = vld [vmem:[%s1 + $0xb8] sm:$0xff]
  %v82 = vld [vmem:[%s1 + $0xc0] sm:$0xff]
  %v83 = vld [vmem:[%s1 + $0xc8] sm:$0xff]
  %v84 = vld [vmem:[%s1 + $0xd0] sm:$0xff]
  %v85 = vld [vmem:[%s1 + $0xd8] sm:$0xff]
  %v86 = vld [vmem:[%s1 + $0xe0] sm:$0xff]
  %v87 = vld [vmem:[%s1 + $0xe8] sm:$0xff]
  %v88 = vld [vmem:[%s1 + $0xf0] sm:$0xff]
  %v89 = vld [vmem:[%s1 + $0xf8] sm:$0xff]
  %v90 = vld [vmem:[%s2] sm:$0x1]
  %v92 = vlaneseq
  %v93 = vshrl.u32 %v92, 7
  %v94 = vsub.s32 0, %v93
  %v95 = vrot.slane %v90, %v94
  %97 = vmatprep.subr.mxu0 0.0
  %98 = vmatpush1.msra.mxu0 %v58
  %99 = vmatprep.subr.mxu0 0.0
  %100 = vmatpush1.msra.mxu0 %v59
  %101 = vmatprep.subr.mxu0 0.0
  %102 = vmatpush1.msra.mxu0 %v60
  %103 = vmatprep.subr.mxu0 0.0
  %104 = vmatpush1.msra.mxu0 %v61
  %105 = vmatprep.subr.mxu0 0.0
  %106 = vmatpush1.msra.mxu0 %v62
  %107 = vmatprep.subr.mxu0 0.0
  %108 = vmatpush1.msra.mxu0 %v63
  %109 = vmatprep.subr.mxu0 0.0
  %110 = vmatpush1.msra.mxu0 %v64
  %111 = vmatprep.subr.mxu0 0.0
  %112 = vmatpush1.msra.mxu0 %v65
  %113 = vmatprep.subr.mxu0 0.0
  %114 = vmatpush1.msra.mxu0 %v66
  %115 = vmatprep.subr.mxu0 0.0
  %116 = vmatpush1.msra.mxu0 %v67
  %117 = vmatprep.subr.mxu0 0.0
  %118 = vmatpush1.msra.mxu0 %v68
  %119 = vmatprep.subr.mxu0 0.0
  %120 = vmatpush1.msra.mxu0 %v69
  %121 = vmatprep.subr.mxu0 0.0
  %122 = vmatpush1.msra.mxu0 %v70
  %123 = vmatprep.subr.mxu0 0.0
  %124 = vmatpush1.msra.mxu0 %v71
  %125 = vmatprep.subr.mxu0 0.0
  %126 = vmatpush1.msra.mxu0 %v72
  %127 = vmatprep.subr.mxu0 0.0
  %128 = vmatpush1.msra.mxu0 %v73
  %129 = vmatprep.subr.mxu0 0.0
  %130 = vmatpush1.msra.mxu0 %v74
  %131 = vmatprep.subr.mxu0 0.0
  %132 = vmatpush1.msra.mxu0 %v75
  %133 = vmatprep.subr.mxu0 0.0
  %134 = vmatpush1.msra.mxu0 %v76
  %135 = vmatprep.subr.mxu0 0.0
  %136 = vmatpush1.msra.mxu0 %v77
  %137 = vmatprep.subr.mxu0 0.0
  %138 = vmatpush1.msra.mxu0 %v78
  %139 = vmatprep.subr.mxu0 0.0
  %140 = vmatpush1.msra.mxu0 %v79
  %141 = vmatprep.subr.mxu0 0.0
  %142 = vmatpush1.msra.mxu0 %v80
  %143 = vmatprep.subr.mxu0 0.0
  %144 = vmatpush1.msra.mxu0 %v81
  %145 = vmatprep.subr.mxu0 0.0
  %146 = vmatpush1.msra.mxu0 %v82
  %147 = vmatprep.subr.mxu0 0.0
  %148 = vmatpush1.msra.mxu0 %v83
  %149 = vmatprep.subr.mxu0 0.0
  %150 = vmatpush1.msra.mxu0 %v84
  %151 = vmatprep.subr.mxu0 0.0
  %152 = vmatpush1.msra.mxu0 %v85
  %153 = vmatprep.subr.mxu0 0.0
  %154 = vmatpush1.msra.mxu0 %v86
  %155 = vmatprep.subr.mxu0 0.0
  %156 = vmatpush1.msra.mxu0 %v87
  %157 = vmatprep.subr.mxu0 0.0
  %158 = vmatpush1.msra.mxu0 %v88
  %159 = vmatprep.subr.mxu0 0.0
  %160 = vmatpush1.msra.mxu0 %v89
  %161 = vmatprep.mubr.f32.mxu0 %v57
  %162 = vmatmul.mubr.f32.gmra.mrb[0].mxu0 %v56
  %v163 = vpop.f32.mrb[0].mxu0
  %v164 = vadd.f32 %v95, %v163
  %v165 = vpop.f32.mrb[0].mxu0
  %166 = vdwg.mxu0
  %v167 = vld [vmem:[%s3] sm:$0xf]
  %v169 = vrot.slane %v164, 4
  %vm171 = vcmask 1043456
  %v172 = vsel %vm171, %v167, %v169
  %v173 = vld [vmem:[%s4] sm:$0xff]
  %v174 = vadd.f32 %v172, %v173
  %v175 = vsel %vm171, %v167, %v164
  %v176 = vadd.f32 %v175, %v173
  %v177 = vld [vmem:[%s5] sm:$0x1]
  %v178 = vld [vmem:[%s6] sm:$0x1]
  %vm179 = vcmask 261120
  %v180 = vsel %vm179, %v174, 0.0
  %181 = vadd.xlane.f32.xlu0 %v180
  %v182 = vpop.xlane.xlu0 %181
  %v183 = vsel %vm179, %v176, 0.0
  %184 = vadd.xlane.f32.xlu0 %v183
  %v185 = vpop.xlane.xlu0 %184
  %v186 = vrcp.pop 32.0
  %v187 = vmul.f32 %v182, %v186
  %v188 = vmul.f32 %v185, %v186
  %v189 = vsub.f32 %v174, %v187
  %v190 = vsub.f32 %v176, %v188
  %v191 = vmul.f32 %v189, %v189
  %v192 = vmul.f32 %v190, %v190
  %v193 = vsel %vm179, %v191, 0.0
  %194 = vadd.xlane.f32.xlu0 %v193
  %v195 = vpop.xlane.xlu0 %194
  %v196 = vsel %vm179, %v192, 0.0
  %197 = vadd.xlane.f32.xlu0 %v196
  %v198 = vpop.xlane.xlu0 %197
  %v199 = vmul.f32 %v195, %v186
  %v200 = vmul.f32 %v198, %v186
  %v201 = vadd.f32 %v199, 1e-06
  %v202 = vadd.f32 %v200, 1e-06
  %v203 = vrsqrt.pop %v201
  %v204 = vrsqrt.pop %v202
  %v205 = vmul.f32 %v189, %v203
  %v206 = vmul.f32 %v190, %v204
  %v208 = vlaneseq
  %v209 = vshrl.u32 %v208, 7
  %v210 = vsub.s32 0, %v209
  %v211 = vrot.slane %v177, %v210
  %v213 = vmul.f32 %v205, %v211
  %v214 = vmul.f32 %v206, %v211
  %v216 = vlaneseq
  %v217 = vshrl.u32 %v216, 7
  %v218 = vsub.s32 0, %v217
  %v219 = vrot.slane %v178, %v218
  %v221 = vadd.f32 %v213, %v219
  %v222 = vadd.f32 %v214, %v219
  %v223 = vld [vmem:[%s7] sm:$0xff]
  %v224 = vld [vmem:[%s7 + $0x8] sm:$0xff]
  %v225 = vld [vmem:[%s7 + $0x10] sm:$0xff]
  %v226 = vld [vmem:[%s7 + $0x18] sm:$0xff]
  %v227 = vld [vmem:[%s8] sm:$0x1]
  %v229 = vlaneseq
  %v230 = vshrl.u32 %v229, 7
  %v231 = vsub.s32 0, %v230
  %v232 = vrot.slane %v227, %v231
  %v235 = vsel %vm179, %v221, 0
  %v238 = vsel %vm179, %v222, 0
  %240 = vmatprep.subr.mxu0 0.0
  %241 = vmatpush1.msra.mxu0 %v223
  %242 = vmatprep.subr.mxu0 0.0
  %243 = vmatpush1.msra.mxu0 %v224
  %244 = vmatprep.subr.mxu0 0.0
  %245 = vmatpush1.msra.mxu0 %v225
  %246 = vmatprep.subr.mxu0 0.0
  %247 = vmatpush1.msra.mxu0 %v226
  %248 = vmatprep.subr.mxu0 0.0
  %249 = vmatpush1.msra.mxu0 0.0
  %250 = vmatprep.subr.mxu0 0.0
  %251 = vmatpush1.msra.mxu0 0.0
  %252 = vmatprep.subr.mxu0 0.0
  %253 = vmatpush1.msra.mxu0 0.0
  %254 = vmatprep.subr.mxu0 0.0
  %255 = vmatpush1.msra.mxu0 0.0
  %256 = vmatprep.subr.mxu0 0.0
  %257 = vmatpush1.msra.mxu0 0.0
  %258 = vmatprep.subr.mxu0 0.0
  %259 = vmatpush1.msra.mxu0 0.0
  %260 = vmatprep.subr.mxu0 0.0
  %261 = vmatpush1.msra.mxu0 0.0
  %262 = vmatprep.subr.mxu0 0.0
  %263 = vmatpush1.msra.mxu0 0.0
  %264 = vmatprep.subr.mxu0 0.0
  %265 = vmatpush1.msra.mxu0 0.0
  %266 = vmatprep.subr.mxu0 0.0
  %267 = vmatpush1.msra.mxu0 0.0
  %268 = vmatprep.subr.mxu0 0.0
  %269 = vmatpush1.msra.mxu0 0.0
  %270 = vmatprep.subr.mxu0 0.0
  %271 = vmatpush1.msra.mxu0 0.0
  %272 = vmatprep.subr.mxu0 0.0
  %273 = vmatpush1.msra.mxu0 0.0
  %274 = vmatprep.subr.mxu0 0.0
  %275 = vmatpush1.msra.mxu0 0.0
  %276 = vmatprep.subr.mxu0 0.0
  %277 = vmatpush1.msra.mxu0 0.0
  %278 = vmatprep.subr.mxu0 0.0
  %279 = vmatpush1.msra.mxu0 0.0
  %280 = vmatprep.subr.mxu0 0.0
  %281 = vmatpush1.msra.mxu0 0.0
  %282 = vmatprep.subr.mxu0 0.0
  %283 = vmatpush1.msra.mxu0 0.0
  %284 = vmatprep.subr.mxu0 0.0
  %285 = vmatpush1.msra.mxu0 0.0
  %286 = vmatprep.subr.mxu0 0.0
  %287 = vmatpush1.msra.mxu0 0.0
  %288 = vmatprep.subr.mxu0 0.0
  %289 = vmatpush1.msra.mxu0 0.0
  %290 = vmatprep.subr.mxu0 0.0
  %291 = vmatpush1.msra.mxu0 0.0
  %292 = vmatprep.subr.mxu0 0.0
  %293 = vmatpush1.msra.mxu0 0.0
  %294 = vmatprep.subr.mxu0 0.0
  %295 = vmatpush1.msra.mxu0 0.0
  %296 = vmatprep.subr.mxu0 0.0
  %297 = vmatpush1.msra.mxu0 0.0
  %298 = vmatprep.subr.mxu0 0.0
  %299 = vmatpush1.msra.mxu0 0.0
  %300 = vmatprep.subr.mxu0 0.0
  %301 = vmatpush1.msra.mxu0 0.0
  %302 = vmatprep.subr.mxu0 0.0
  %303 = vmatpush1.msra.mxu0 0.0
  %304 = vmatprep.mubr.f32.mxu0 0.0
  %305 = vmatmul.mubr.f32.gmra.mrb[0].mxu0 %v235
  %v306 = vpop.f32.mrb[0].mxu0
  %v307 = vadd.f32 %v232, %v306
  %v308 = vpop.f32.mrb[0].mxu0
  %309 = vmatprep.mubr.f32.mxu0 0.0
  %310 = vmatmul.mubr.f32.gmra.mrb[0].mxu0 %v238
  %v311 = vpop.f32.mrb[0].mxu0
  %v312 = vadd.f32 %v232, %v311
  %v313 = vpop.f32.mrb[0].mxu0
  %314 = vdwg.mxu0
  %316 = vrot.lane.b32.xlu0 %v307, 120
  %v317 = vpop.permute.xlu0 %316
  %318 = vrot.lane.b32.xlu0 %v307, 112
  %v319 = vpop.permute.xlu0 %318
  %320 = vrot.lane.b32.xlu0 %v307, 104
  %v321 = vpop.permute.xlu0 %320
  %323 = vrot.lane.b32.xlu0 %v312, 120
  %v324 = vpop.permute.xlu0 %323
  %325 = vrot.lane.b32.xlu0 %v312, 112
  %v326 = vpop.permute.xlu0 %325
  %327 = vrot.lane.b32.xlu0 %v312, 104
  %v328 = vpop.permute.xlu0 %327
  %329 = vrot.lane.b32.xlu0 %v307, 96
  %v330 = vpop.permute.xlu0 %329
  %vm331 = vcmask 64512
  %v332 = vsel %vm331, %v307, 0
  %v334 = vsel %vm331, %v330, 0
  %336 = vmatprep.subr.mxu0 0.0
  %337 = vmatpush1.xpose.msra.mxu0 %v334
  %338 = vmatprep.subr.mxu0 0.0
  %339 = vmatpush1.xpose.msra.mxu0 0.0
  %340 = vmatprep.subr.mxu0 0.0
  %341 = vmatpush1.xpose.msra.mxu0 0.0
  %342 = vmatprep.subr.mxu0 0.0
  %343 = vmatpush1.xpose.msra.mxu0 0.0
  %344 = vmatprep.subr.mxu0 0.0
  %345 = vmatpush1.xpose.msra.mxu0 0.0
  %346 = vmatprep.subr.mxu0 0.0
  %347 = vmatpush1.xpose.msra.mxu0 0.0
  %348 = vmatprep.subr.mxu0 0.0
  %349 = vmatpush1.xpose.msra.mxu0 0.0
  %350 = vmatprep.subr.mxu0 0.0
  %351 = vmatpush1.xpose.msra.mxu0 0.0
  %352 = vmatprep.subr.mxu0 0.0
  %353 = vmatpush1.xpose.msra.mxu0 0.0
  %354 = vmatprep.subr.mxu0 0.0
  %355 = vmatpush1.xpose.msra.mxu0 0.0
  %356 = vmatprep.subr.mxu0 0.0
  %357 = vmatpush1.xpose.msra.mxu0 0.0
  %358 = vmatprep.subr.mxu0 0.0
  %359 = vmatpush1.xpose.msra.mxu0 0.0
  %360 = vmatprep.subr.mxu0 0.0
  %361 = vmatpush1.xpose.msra.mxu0 0.0
  %362 = vmatprep.subr.mxu0 0.0
  %363 = vmatpush1.xpose.msra.mxu0 0.0
  %364 = vmatprep.subr.mxu0 0.0
  %365 = vmatpush1.xpose.msra.mxu0 0.0
  %366 = vmatprep.subr.mxu0 0.0
  %367 = vmatpush1.xpose.msra.mxu0 0.0
  %368 = vmatprep.subr.mxu0 0.0
  %369 = vmatpush1.xpose.msra.mxu0 0.0
  %370 = vmatprep.subr.mxu0 0.0
  %371 = vmatpush1.xpose.msra.mxu0 0.0
  %372 = vmatprep.subr.mxu0 0.0
  %373 = vmatpush1.xpose.msra.mxu0 0.0
  %374 = vmatprep.subr.mxu0 0.0
  %375 = vmatpush1.xpose.msra.mxu0 0.0
  %376 = vmatprep.subr.mxu0 0.0
  %377 = vmatpush1.xpose.msra.mxu0 0.0
  %378 = vmatprep.subr.mxu0 0.0
  %379 = vmatpush1.xpose.msra.mxu0 0.0
  %380 = vmatprep.subr.mxu0 0.0
  %381 = vmatpush1.xpose.msra.mxu0 0.0
  %382 = vmatprep.subr.mxu0 0.0
  %383 = vmatpush1.xpose.msra.mxu0 0.0
  %384 = vmatprep.subr.mxu0 0.0
  %385 = vmatpush1.xpose.msra.mxu0 0.0
  %386 = vmatprep.subr.mxu0 0.0
  %387 = vmatpush1.xpose.msra.mxu0 0.0
  %388 = vmatprep.subr.mxu0 0.0
  %389 = vmatpush1.xpose.msra.mxu0 0.0
  %390 = vmatprep.subr.mxu0 0.0
  %391 = vmatpush1.xpose.msra.mxu0 0.0
  %392 = vmatprep.subr.mxu0 0.0
  %393 = vmatpush1.xpose.msra.mxu0 0.0
  %394 = vmatprep.subr.mxu0 0.0
  %395 = vmatpush1.xpose.msra.mxu0 0.0
  %396 = vmatprep.subr.mxu0 0.0
  %397 = vmatpush1.xpose.msra.mxu0 0.0
  %398 = vmatprep.subr.mxu0 0.0
  %399 = vmatpush1.xpose.msra.mxu0 0.0
  %400 = vmatprep.mubr.f32.mxu0 0.0
  %401 = vmatmul.mubr.f32.gmra.mrb[0].mxu0 %v332
  %v402 = vpop.f32.mrb[0].mxu0
  %v403 = vadd.f32 0.0, %v402
  %v404 = vpop.f32.mrb[0].mxu0
  %405 = vdwg.mxu0
  %406 = vrot.lane.b32.xlu0 %v317, 96
  %v407 = vpop.permute.xlu0 %406
  %v408 = vsel %vm331, %v317, 0
  %v410 = vsel %vm331, %v407, 0
  %412 = vmatprep.subr.mxu0 0.0
  %413 = vmatpush1.xpose.msra.mxu0 %v410
  %414 = vmatprep.subr.mxu0 0.0
  %415 = vmatpush1.xpose.msra.mxu0 0.0
  %416 = vmatprep.subr.mxu0 0.0
  %417 = vmatpush1.xpose.msra.mxu0 0.0
  %418 = vmatprep.subr.mxu0 0.0
  %419 = vmatpush1.xpose.msra.mxu0 0.0
  %420 = vmatprep.subr.mxu0 0.0
  %421 = vmatpush1.xpose.msra.mxu0 0.0
  %422 = vmatprep.subr.mxu0 0.0
  %423 = vmatpush1.xpose.msra.mxu0 0.0
  %424 = vmatprep.subr.mxu0 0.0
  %425 = vmatpush1.xpose.msra.mxu0 0.0
  %426 = vmatprep.subr.mxu0 0.0
  %427 = vmatpush1.xpose.msra.mxu0 0.0
  %428 = vmatprep.subr.mxu0 0.0
  %429 = vmatpush1.xpose.msra.mxu0 0.0
  %430 = vmatprep.subr.mxu0 0.0
  %431 = vmatpush1.xpose.msra.mxu0 0.0
  %432 = vmatprep.subr.mxu0 0.0
  %433 = vmatpush1.xpose.msra.mxu0 0.0
  %434 = vmatprep.subr.mxu0 0.0
  %435 = vmatpush1.xpose.msra.mxu0 0.0
  %436 = vmatprep.subr.mxu0 0.0
  %437 = vmatpush1.xpose.msra.mxu0 0.0
  %438 = vmatprep.subr.mxu0 0.0
  %439 = vmatpush1.xpose.msra.mxu0 0.0
  %440 = vmatprep.subr.mxu0 0.0
  %441 = vmatpush1.xpose.msra.mxu0 0.0
  %442 = vmatprep.subr.mxu0 0.0
  %443 = vmatpush1.xpose.msra.mxu0 0.0
  %444 = vmatprep.subr.mxu0 0.0
  %445 = vmatpush1.xpose.msra.mxu0 0.0
  %446 = vmatprep.subr.mxu0 0.0
  %447 = vmatpush1.xpose.msra.mxu0 0.0
  %448 = vmatprep.subr.mxu0 0.0
  %449 = vmatpush1.xpose.msra.mxu0 0.0
  %450 = vmatprep.subr.mxu0 0.0
  %451 = vmatpush1.xpose.msra.mxu0 0.0
  %452 = vmatprep.subr.mxu0 0.0
  %453 = vmatpush1.xpose.msra.mxu0 0.0
  %454 = vmatprep.subr.mxu0 0.0
  %455 = vmatpush1.xpose.msra.mxu0 0.0
  %456 = vmatprep.subr.mxu0 0.0
  %457 = vmatpush1.xpose.msra.mxu0 0.0
  %458 = vmatprep.subr.mxu0 0.0
  %459 = vmatpush1.xpose.msra.mxu0 0.0
  %460 = vmatprep.subr.mxu0 0.0
  %461 = vmatpush1.xpose.msra.mxu0 0.0
  %462 = vmatprep.subr.mxu0 0.0
  %463 = vmatpush1.xpose.msra.mxu0 0.0
  %464 = vmatprep.subr.mxu0 0.0
  %465 = vmatpush1.xpose.msra.mxu0 0.0
  %466 = vmatprep.subr.mxu0 0.0
  %467 = vmatpush1.xpose.msra.mxu0 0.0
  %468 = vmatprep.subr.mxu0 0.0
  %469 = vmatpush1.xpose.msra.mxu0 0.0
  %470 = vmatprep.subr.mxu0 0.0
  %471 = vmatpush1.xpose.msra.mxu0 0.0
  %472 = vmatprep.subr.mxu0 0.0
  %473 = vmatpush1.xpose.msra.mxu0 0.0
  %474 = vmatprep.subr.mxu0 0.0
  %475 = vmatpush1.xpose.msra.mxu0 0.0
  %476 = vmatprep.mubr.f32.mxu0 0.0
  %477 = vmatmul.mubr.f32.gmra.mrb[0].mxu0 %v408
  %v478 = vpop.f32.mrb[0].mxu0
  %v479 = vadd.f32 0.0, %v478
  %v480 = vpop.f32.mrb[0].mxu0
  %481 = vdwg.mxu0
  %482 = vrot.lane.b32.xlu0 %v319, 96
  %v483 = vpop.permute.xlu0 %482
  %v484 = vsel %vm331, %v319, 0
  %v486 = vsel %vm331, %v483, 0
  %488 = vmatprep.subr.mxu0 0.0
  %489 = vmatpush1.xpose.msra.mxu0 %v486
  %490 = vmatprep.subr.mxu0 0.0
  %491 = vmatpush1.xpose.msra.mxu0 0.0
  %492 = vmatprep.subr.mxu0 0.0
  %493 = vmatpush1.xpose.msra.mxu0 0.0
  %494 = vmatprep.subr.mxu0 0.0
  %495 = vmatpush1.xpose.msra.mxu0 0.0
  %496 = vmatprep.subr.mxu0 0.0
  %497 = vmatpush1.xpose.msra.mxu0 0.0
  %498 = vmatprep.subr.mxu0 0.0
  %499 = vmatpush1.xpose.msra.mxu0 0.0
  %500 = vmatprep.subr.mxu0 0.0
  %501 = vmatpush1.xpose.msra.mxu0 0.0
  %502 = vmatprep.subr.mxu0 0.0
  %503 = vmatpush1.xpose.msra.mxu0 0.0
  %504 = vmatprep.subr.mxu0 0.0
  %505 = vmatpush1.xpose.msra.mxu0 0.0
  %506 = vmatprep.subr.mxu0 0.0
  %507 = vmatpush1.xpose.msra.mxu0 0.0
  %508 = vmatprep.subr.mxu0 0.0
  %509 = vmatpush1.xpose.msra.mxu0 0.0
  %510 = vmatprep.subr.mxu0 0.0
  %511 = vmatpush1.xpose.msra.mxu0 0.0
  %512 = vmatprep.subr.mxu0 0.0
  %513 = vmatpush1.xpose.msra.mxu0 0.0
  %514 = vmatprep.subr.mxu0 0.0
  %515 = vmatpush1.xpose.msra.mxu0 0.0
  %516 = vmatprep.subr.mxu0 0.0
  %517 = vmatpush1.xpose.msra.mxu0 0.0
  %518 = vmatprep.subr.mxu0 0.0
  %519 = vmatpush1.xpose.msra.mxu0 0.0
  %520 = vmatprep.subr.mxu0 0.0
  %521 = vmatpush1.xpose.msra.mxu0 0.0
  %522 = vmatprep.subr.mxu0 0.0
  %523 = vmatpush1.xpose.msra.mxu0 0.0
  %524 = vmatprep.subr.mxu0 0.0
  %525 = vmatpush1.xpose.msra.mxu0 0.0
  %526 = vmatprep.subr.mxu0 0.0
  %527 = vmatpush1.xpose.msra.mxu0 0.0
  %528 = vmatprep.subr.mxu0 0.0
  %529 = vmatpush1.xpose.msra.mxu0 0.0
  %530 = vmatprep.subr.mxu0 0.0
  %531 = vmatpush1.xpose.msra.mxu0 0.0
  %532 = vmatprep.subr.mxu0 0.0
  %533 = vmatpush1.xpose.msra.mxu0 0.0
  %534 = vmatprep.subr.mxu0 0.0
  %535 = vmatpush1.xpose.msra.mxu0 0.0
  %536 = vmatprep.subr.mxu0 0.0
  %537 = vmatpush1.xpose.msra.mxu0 0.0
  %538 = vmatprep.subr.mxu0 0.0
  %539 = vmatpush1.xpose.msra.mxu0 0.0
  %540 = vmatprep.subr.mxu0 0.0
  %541 = vmatpush1.xpose.msra.mxu0 0.0
  %542 = vmatprep.subr.mxu0 0.0
  %543 = vmatpush1.xpose.msra.mxu0 0.0
  %544 = vmatprep.subr.mxu0 0.0
  %545 = vmatpush1.xpose.msra.mxu0 0.0
  %546 = vmatprep.subr.mxu0 0.0
  %547 = vmatpush1.xpose.msra.mxu0 0.0
  %548 = vmatprep.subr.mxu0 0.0
  %549 = vmatpush1.xpose.msra.mxu0 0.0
  %550 = vmatprep.subr.mxu0 0.0
  %551 = vmatpush1.xpose.msra.mxu0 0.0
  %552 = vmatprep.mubr.f32.mxu0 0.0
  %553 = vmatmul.mubr.f32.gmra.mrb[0].mxu0 %v484
  %v554 = vpop.f32.mrb[0].mxu0
  %v555 = vadd.f32 0.0, %v554
  %v556 = vpop.f32.mrb[0].mxu0
  %557 = vdwg.mxu0
  %558 = vrot.lane.b32.xlu0 %v321, 96
  %v559 = vpop.permute.xlu0 %558
  %v560 = vsel %vm331, %v321, 0
  %v562 = vsel %vm331, %v559, 0
  %564 = vmatprep.subr.mxu0 0.0
  %565 = vmatpush1.xpose.msra.mxu0 %v562
  %566 = vmatprep.subr.mxu0 0.0
  %567 = vmatpush1.xpose.msra.mxu0 0.0
  %568 = vmatprep.subr.mxu0 0.0
  %569 = vmatpush1.xpose.msra.mxu0 0.0
  %570 = vmatprep.subr.mxu0 0.0
  %571 = vmatpush1.xpose.msra.mxu0 0.0
  %572 = vmatprep.subr.mxu0 0.0
  %573 = vmatpush1.xpose.msra.mxu0 0.0
  %574 = vmatprep.subr.mxu0 0.0
  %575 = vmatpush1.xpose.msra.mxu0 0.0
  %576 = vmatprep.subr.mxu0 0.0
  %577 = vmatpush1.xpose.msra.mxu0 0.0
  %578 = vmatprep.subr.mxu0 0.0
  %579 = vmatpush1.xpose.msra.mxu0 0.0
  %580 = vmatprep.subr.mxu0 0.0
  %581 = vmatpush1.xpose.msra.mxu0 0.0
  %582 = vmatprep.subr.mxu0 0.0
  %583 = vmatpush1.xpose.msra.mxu0 0.0
  %584 = vmatprep.subr.mxu0 0.0
  %585 = vmatpush1.xpose.msra.mxu0 0.0
  %586 = vmatprep.subr.mxu0 0.0
  %587 = vmatpush1.xpose.msra.mxu0 0.0
  %588 = vmatprep.subr.mxu0 0.0
  %589 = vmatpush1.xpose.msra.mxu0 0.0
  %590 = vmatprep.subr.mxu0 0.0
  %591 = vmatpush1.xpose.msra.mxu0 0.0
  %592 = vmatprep.subr.mxu0 0.0
  %593 = vmatpush1.xpose.msra.mxu0 0.0
  %594 = vmatprep.subr.mxu0 0.0
  %595 = vmatpush1.xpose.msra.mxu0 0.0
  %596 = vmatprep.subr.mxu0 0.0
  %597 = vmatpush1.xpose.msra.mxu0 0.0
  %598 = vmatprep.subr.mxu0 0.0
  %599 = vmatpush1.xpose.msra.mxu0 0.0
  %600 = vmatprep.subr.mxu0 0.0
  %601 = vmatpush1.xpose.msra.mxu0 0.0
  %602 = vmatprep.subr.mxu0 0.0
  %603 = vmatpush1.xpose.msra.mxu0 0.0
  %604 = vmatprep.subr.mxu0 0.0
  %605 = vmatpush1.xpose.msra.mxu0 0.0
  %606 = vmatprep.subr.mxu0 0.0
  %607 = vmatpush1.xpose.msra.mxu0 0.0
  %608 = vmatprep.subr.mxu0 0.0
  %609 = vmatpush1.xpose.msra.mxu0 0.0
  %610 = vmatprep.subr.mxu0 0.0
  %611 = vmatpush1.xpose.msra.mxu0 0.0
  %612 = vmatprep.subr.mxu0 0.0
  %613 = vmatpush1.xpose.msra.mxu0 0.0
  %614 = vmatprep.subr.mxu0 0.0
  %615 = vmatpush1.xpose.msra.mxu0 0.0
  %616 = vmatprep.subr.mxu0 0.0
  %617 = vmatpush1.xpose.msra.mxu0 0.0
  %618 = vmatprep.subr.mxu0 0.0
  %619 = vmatpush1.xpose.msra.mxu0 0.0
  %620 = vmatprep.subr.mxu0 0.0
  %621 = vmatpush1.xpose.msra.mxu0 0.0
  %622 = vmatprep.subr.mxu0 0.0
  %623 = vmatpush1.xpose.msra.mxu0 0.0
  %624 = vmatprep.subr.mxu0 0.0
  %625 = vmatpush1.xpose.msra.mxu0 0.0
  %626 = vmatprep.subr.mxu0 0.0
  %627 = vmatpush1.xpose.msra.mxu0 0.0
  %628 = vmatprep.mubr.f32.mxu0 0.0
  %629 = vmatmul.mubr.f32.gmra.mrb[0].mxu0 %v560
  %v630 = vpop.f32.mrb[0].mxu0
  %v631 = vadd.f32 0.0, %v630
  %v632 = vpop.f32.mrb[0].mxu0
  %633 = vdwg.mxu0
  %634 = vrot.lane.b32.xlu0 %v312, 96
  %v635 = vpop.permute.xlu0 %634
  %v636 = vsel %vm331, %v312, 0
  %v638 = vsel %vm331, %v635, 0
  %640 = vmatprep.subr.mxu0 0.0
  %641 = vmatpush1.xpose.msra.mxu0 %v638
  %642 = vmatprep.subr.mxu0 0.0
  %643 = vmatpush1.xpose.msra.mxu0 0.0
  %644 = vmatprep.subr.mxu0 0.0
  %645 = vmatpush1.xpose.msra.mxu0 0.0
  %646 = vmatprep.subr.mxu0 0.0
  %647 = vmatpush1.xpose.msra.mxu0 0.0
  %648 = vmatprep.subr.mxu0 0.0
  %649 = vmatpush1.xpose.msra.mxu0 0.0
  %650 = vmatprep.subr.mxu0 0.0
  %651 = vmatpush1.xpose.msra.mxu0 0.0
  %652 = vmatprep.subr.mxu0 0.0
  %653 = vmatpush1.xpose.msra.mxu0 0.0
  %654 = vmatprep.subr.mxu0 0.0
  %655 = vmatpush1.xpose.msra.mxu0 0.0
  %656 = vmatprep.subr.mxu0 0.0
  %657 = vmatpush1.xpose.msra.mxu0 0.0
  %658 = vmatprep.subr.mxu0 0.0
  %659 = vmatpush1.xpose.msra.mxu0 0.0
  %660 = vmatprep.subr.mxu0 0.0
  %661 = vmatpush1.xpose.msra.mxu0 0.0
  %662 = vmatprep.subr.mxu0 0.0
  %663 = vmatpush1.xpose.msra.mxu0 0.0
  %664 = vmatprep.subr.mxu0 0.0
  %665 = vmatpush1.xpose.msra.mxu0 0.0
  %666 = vmatprep.subr.mxu0 0.0
  %667 = vmatpush1.xpose.msra.mxu0 0.0
  %668 = vmatprep.subr.mxu0 0.0
  %669 = vmatpush1.xpose.msra.mxu0 0.0
  %670 = vmatprep.subr.mxu0 0.0
  %671 = vmatpush1.xpose.msra.mxu0 0.0
  %672 = vmatprep.subr.mxu0 0.0
  %673 = vmatpush1.xpose.msra.mxu0 0.0
  %674 = vmatprep.subr.mxu0 0.0
  %675 = vmatpush1.xpose.msra.mxu0 0.0
  %676 = vmatprep.subr.mxu0 0.0
  %677 = vmatpush1.xpose.msra.mxu0 0.0
  %678 = vmatprep.subr.mxu0 0.0
  %679 = vmatpush1.xpose.msra.mxu0 0.0
  %680 = vmatprep.subr.mxu0 0.0
  %681 = vmatpush1.xpose.msra.mxu0 0.0
  %682 = vmatprep.subr.mxu0 0.0
  %683 = vmatpush1.xpose.msra.mxu0 0.0
  %684 = vmatprep.subr.mxu0 0.0
  %685 = vmatpush1.xpose.msra.mxu0 0.0
  %686 = vmatprep.subr.mxu0 0.0
  %687 = vmatpush1.xpose.msra.mxu0 0.0
  %688 = vmatprep.subr.mxu0 0.0
  %689 = vmatpush1.xpose.msra.mxu0 0.0
  %690 = vmatprep.subr.mxu0 0.0
  %691 = vmatpush1.xpose.msra.mxu0 0.0
  %692 = vmatprep.subr.mxu0 0.0
  %693 = vmatpush1.xpose.msra.mxu0 0.0
  %694 = vmatprep.subr.mxu0 0.0
  %695 = vmatpush1.xpose.msra.mxu0 0.0
  %696 = vmatprep.subr.mxu0 0.0
  %697 = vmatpush1.xpose.msra.mxu0 0.0
  %698 = vmatprep.subr.mxu0 0.0
  %699 = vmatpush1.xpose.msra.mxu0 0.0
  %700 = vmatprep.subr.mxu0 0.0
  %701 = vmatpush1.xpose.msra.mxu0 0.0
  %702 = vmatprep.subr.mxu0 0.0
  %703 = vmatpush1.xpose.msra.mxu0 0.0
  %704 = vmatprep.mubr.f32.mxu0 0.0
  %705 = vmatmul.mubr.f32.gmra.mrb[0].mxu0 %v636
  %v706 = vpop.f32.mrb[0].mxu0
  %v707 = vadd.f32 0.0, %v706
  %v708 = vpop.f32.mrb[0].mxu0
  %709 = vdwg.mxu0
  %710 = vrot.lane.b32.xlu0 %v324, 96
  %v711 = vpop.permute.xlu0 %710
  %v712 = vsel %vm331, %v324, 0
  %v714 = vsel %vm331, %v711, 0
  %716 = vmatprep.subr.mxu0 0.0
  %717 = vmatpush1.xpose.msra.mxu0 %v714
  %718 = vmatprep.subr.mxu0 0.0
  %719 = vmatpush1.xpose.msra.mxu0 0.0
  %720 = vmatprep.subr.mxu0 0.0
  %721 = vmatpush1.xpose.msra.mxu0 0.0
  %722 = vmatprep.subr.mxu0 0.0
  %723 = vmatpush1.xpose.msra.mxu0 0.0
  %724 = vmatprep.subr.mxu0 0.0
  %725 = vmatpush1.xpose.msra.mxu0 0.0
  %726 = vmatprep.subr.mxu0 0.0
  %727 = vmatpush1.xpose.msra.mxu0 0.0
  %728 = vmatprep.subr.mxu0 0.0
  %729 = vmatpush1.xpose.msra.mxu0 0.0
  %730 = vmatprep.subr.mxu0 0.0
  %731 = vmatpush1.xpose.msra.mxu0 0.0
  %732 = vmatprep.subr.mxu0 0.0
  %733 = vmatpush1.xpose.msra.mxu0 0.0
  %734 = vmatprep.subr.mxu0 0.0
  %735 = vmatpush1.xpose.msra.mxu0 0.0
  %736 = vmatprep.subr.mxu0 0.0
  %737 = vmatpush1.xpose.msra.mxu0 0.0
  %738 = vmatprep.subr.mxu0 0.0
  %739 = vmatpush1.xpose.msra.mxu0 0.0
  %740 = vmatprep.subr.mxu0 0.0
  %741 = vmatpush1.xpose.msra.mxu0 0.0
  %742 = vmatprep.subr.mxu0 0.0
  %743 = vmatpush1.xpose.msra.mxu0 0.0
  %744 = vmatprep.subr.mxu0 0.0
  %745 = vmatpush1.xpose.msra.mxu0 0.0
  %746 = vmatprep.subr.mxu0 0.0
  %747 = vmatpush1.xpose.msra.mxu0 0.0
  %748 = vmatprep.subr.mxu0 0.0
  %749 = vmatpush1.xpose.msra.mxu0 0.0
  %750 = vmatprep.subr.mxu0 0.0
  %751 = vmatpush1.xpose.msra.mxu0 0.0
  %752 = vmatprep.subr.mxu0 0.0
  %753 = vmatpush1.xpose.msra.mxu0 0.0
  %754 = vmatprep.subr.mxu0 0.0
  %755 = vmatpush1.xpose.msra.mxu0 0.0
  %756 = vmatprep.subr.mxu0 0.0
  %757 = vmatpush1.xpose.msra.mxu0 0.0
  %758 = vmatprep.subr.mxu0 0.0
  %759 = vmatpush1.xpose.msra.mxu0 0.0
  %760 = vmatprep.subr.mxu0 0.0
  %761 = vmatpush1.xpose.msra.mxu0 0.0
  %762 = vmatprep.subr.mxu0 0.0
  %763 = vmatpush1.xpose.msra.mxu0 0.0
  %764 = vmatprep.subr.mxu0 0.0
  %765 = vmatpush1.xpose.msra.mxu0 0.0
  %766 = vmatprep.subr.mxu0 0.0
  %767 = vmatpush1.xpose.msra.mxu0 0.0
  %768 = vmatprep.subr.mxu0 0.0
  %769 = vmatpush1.xpose.msra.mxu0 0.0
  %770 = vmatprep.subr.mxu0 0.0
  %771 = vmatpush1.xpose.msra.mxu0 0.0
  %772 = vmatprep.subr.mxu0 0.0
  %773 = vmatpush1.xpose.msra.mxu0 0.0
  %774 = vmatprep.subr.mxu0 0.0
  %775 = vmatpush1.xpose.msra.mxu0 0.0
  %776 = vmatprep.subr.mxu0 0.0
  %777 = vmatpush1.xpose.msra.mxu0 0.0
  %778 = vmatprep.subr.mxu0 0.0
  %779 = vmatpush1.xpose.msra.mxu0 0.0
  %780 = vmatprep.mubr.f32.mxu0 0.0
  %781 = vmatmul.mubr.f32.gmra.mrb[0].mxu0 %v712
  %v782 = vpop.f32.mrb[0].mxu0
  %v783 = vadd.f32 0.0, %v782
  %v784 = vpop.f32.mrb[0].mxu0
  %785 = vdwg.mxu0
  %786 = vrot.lane.b32.xlu0 %v326, 96
  %v787 = vpop.permute.xlu0 %786
  %v788 = vsel %vm331, %v326, 0
  %v790 = vsel %vm331, %v787, 0
  %792 = vmatprep.subr.mxu0 0.0
  %793 = vmatpush1.xpose.msra.mxu0 %v790
  %794 = vmatprep.subr.mxu0 0.0
  %795 = vmatpush1.xpose.msra.mxu0 0.0
  %796 = vmatprep.subr.mxu0 0.0
  %797 = vmatpush1.xpose.msra.mxu0 0.0
  %798 = vmatprep.subr.mxu0 0.0
  %799 = vmatpush1.xpose.msra.mxu0 0.0
  %800 = vmatprep.subr.mxu0 0.0
  %801 = vmatpush1.xpose.msra.mxu0 0.0
  %802 = vmatprep.subr.mxu0 0.0
  %803 = vmatpush1.xpose.msra.mxu0 0.0
  %804 = vmatprep.subr.mxu0 0.0
  %805 = vmatpush1.xpose.msra.mxu0 0.0
  %806 = vmatprep.subr.mxu0 0.0
  %807 = vmatpush1.xpose.msra.mxu0 0.0
  %808 = vmatprep.subr.mxu0 0.0
  %809 = vmatpush1.xpose.msra.mxu0 0.0
  %810 = vmatprep.subr.mxu0 0.0
  %811 = vmatpush1.xpose.msra.mxu0 0.0
  %812 = vmatprep.subr.mxu0 0.0
  %813 = vmatpush1.xpose.msra.mxu0 0.0
  %814 = vmatprep.subr.mxu0 0.0
  %815 = vmatpush1.xpose.msra.mxu0 0.0
  %816 = vmatprep.subr.mxu0 0.0
  %817 = vmatpush1.xpose.msra.mxu0 0.0
  %818 = vmatprep.subr.mxu0 0.0
  %819 = vmatpush1.xpose.msra.mxu0 0.0
  %820 = vmatprep.subr.mxu0 0.0
  %821 = vmatpush1.xpose.msra.mxu0 0.0
  %822 = vmatprep.subr.mxu0 0.0
  %823 = vmatpush1.xpose.msra.mxu0 0.0
  %824 = vmatprep.subr.mxu0 0.0
  %825 = vmatpush1.xpose.msra.mxu0 0.0
  %826 = vmatprep.subr.mxu0 0.0
  %827 = vmatpush1.xpose.msra.mxu0 0.0
  %828 = vmatprep.subr.mxu0 0.0
  %829 = vmatpush1.xpose.msra.mxu0 0.0
  %830 = vmatprep.subr.mxu0 0.0
  %831 = vmatpush1.xpose.msra.mxu0 0.0
  %832 = vmatprep.subr.mxu0 0.0
  %833 = vmatpush1.xpose.msra.mxu0 0.0
  %834 = vmatprep.subr.mxu0 0.0
  %835 = vmatpush1.xpose.msra.mxu0 0.0
  %836 = vmatprep.subr.mxu0 0.0
  %837 = vmatpush1.xpose.msra.mxu0 0.0
  %838 = vmatprep.subr.mxu0 0.0
  %839 = vmatpush1.xpose.msra.mxu0 0.0
  %840 = vmatprep.subr.mxu0 0.0
  %841 = vmatpush1.xpose.msra.mxu0 0.0
  %842 = vmatprep.subr.mxu0 0.0
  %843 = vmatpush1.xpose.msra.mxu0 0.0
  %844 = vmatprep.subr.mxu0 0.0
  %845 = vmatpush1.xpose.msra.mxu0 0.0
  %846 = vmatprep.subr.mxu0 0.0
  %847 = vmatpush1.xpose.msra.mxu0 0.0
  %848 = vmatprep.subr.mxu0 0.0
  %849 = vmatpush1.xpose.msra.mxu0 0.0
  %850 = vmatprep.subr.mxu0 0.0
  %851 = vmatpush1.xpose.msra.mxu0 0.0
  %852 = vmatprep.subr.mxu0 0.0
  %853 = vmatpush1.xpose.msra.mxu0 0.0
  %854 = vmatprep.subr.mxu0 0.0
  %855 = vmatpush1.xpose.msra.mxu0 0.0
  %856 = vmatprep.mubr.f32.mxu0 0.0
  %857 = vmatmul.mubr.f32.gmra.mrb[0].mxu0 %v788
  %v858 = vpop.f32.mrb[0].mxu0
  %v859 = vadd.f32 0.0, %v858
  %v860 = vpop.f32.mrb[0].mxu0
  %861 = vdwg.mxu0
  %862 = vrot.lane.b32.xlu0 %v328, 96
  %v863 = vpop.permute.xlu0 %862
  %v864 = vsel %vm331, %v328, 0
  %v866 = vsel %vm331, %v863, 0
  %868 = vmatprep.subr.mxu0 0.0
  %869 = vmatpush1.xpose.msra.mxu0 %v866
  %870 = vmatprep.subr.mxu0 0.0
  %871 = vmatpush1.xpose.msra.mxu0 0.0
  %872 = vmatprep.subr.mxu0 0.0
  %873 = vmatpush1.xpose.msra.mxu0 0.0
  %874 = vmatprep.subr.mxu0 0.0
  %875 = vmatpush1.xpose.msra.mxu0 0.0
  %876 = vmatprep.subr.mxu0 0.0
  %877 = vmatpush1.xpose.msra.mxu0 0.0
  %878 = vmatprep.subr.mxu0 0.0
  %879 = vmatpush1.xpose.msra.mxu0 0.0
  %880 = vmatprep.subr.mxu0 0.0
  %881 = vmatpush1.xpose.msra.mxu0 0.0
  %882 = vmatprep.subr.mxu0 0.0
  %883 = vmatpush1.xpose.msra.mxu0 0.0
  %884 = vmatprep.subr.mxu0 0.0
  %885 = vmatpush1.xpose.msra.mxu0 0.0
  %886 = vmatprep.subr.mxu0 0.0
  %887 = vmatpush1.xpose.msra.mxu0 0.0
  %888 = vmatprep.subr.mxu0 0.0
  %889 = vmatpush1.xpose.msra.mxu0 0.0
  %890 = vmatprep.subr.mxu0 0.0
  %891 = vmatpush1.xpose.msra.mxu0 0.0
  %892 = vmatprep.subr.mxu0 0.0
  %893 = vmatpush1.xpose.msra.mxu0 0.0
  %894 = vmatprep.subr.mxu0 0.0
  %895 = vmatpush1.xpose.msra.mxu0 0.0
  %896 = vmatprep.subr.mxu0 0.0
  %897 = vmatpush1.xpose.msra.mxu0 0.0
  %898 = vmatprep.subr.mxu0 0.0
  %899 = vmatpush1.xpose.msra.mxu0 0.0
  %900 = vmatprep.subr.mxu0 0.0
  %901 = vmatpush1.xpose.msra.mxu0 0.0
  %902 = vmatprep.subr.mxu0 0.0
  %903 = vmatpush1.xpose.msra.mxu0 0.0
  %904 = vmatprep.subr.mxu0 0.0
  %905 = vmatpush1.xpose.msra.mxu0 0.0
  %906 = vmatprep.subr.mxu0 0.0
  %907 = vmatpush1.xpose.msra.mxu0 0.0
  %908 = vmatprep.subr.mxu0 0.0
  %909 = vmatpush1.xpose.msra.mxu0 0.0
  %910 = vmatprep.subr.mxu0 0.0
  %911 = vmatpush1.xpose.msra.mxu0 0.0
  %912 = vmatprep.subr.mxu0 0.0
  %913 = vmatpush1.xpose.msra.mxu0 0.0
  %914 = vmatprep.subr.mxu0 0.0
  %915 = vmatpush1.xpose.msra.mxu0 0.0
  %916 = vmatprep.subr.mxu0 0.0
  %917 = vmatpush1.xpose.msra.mxu0 0.0
  %918 = vmatprep.subr.mxu0 0.0
  %919 = vmatpush1.xpose.msra.mxu0 0.0
  %920 = vmatprep.subr.mxu0 0.0
  %921 = vmatpush1.xpose.msra.mxu0 0.0
  %922 = vmatprep.subr.mxu0 0.0
  %923 = vmatpush1.xpose.msra.mxu0 0.0
  %924 = vmatprep.subr.mxu0 0.0
  %925 = vmatpush1.xpose.msra.mxu0 0.0
  %926 = vmatprep.subr.mxu0 0.0
  %927 = vmatpush1.xpose.msra.mxu0 0.0
  %928 = vmatprep.subr.mxu0 0.0
  %929 = vmatpush1.xpose.msra.mxu0 0.0
  %930 = vmatprep.subr.mxu0 0.0
  %931 = vmatpush1.xpose.msra.mxu0 0.0
  %932 = vmatprep.mubr.f32.mxu0 0.0
  %933 = vmatmul.mubr.f32.gmra.mrb[0].mxu0 %v864
  %v934 = vpop.f32.mrb[0].mxu0
  %v935 = vadd.f32 0.0, %v934
  %v936 = vpop.f32.mrb[0].mxu0
  %937 = vdwg.mxu0
  %v938 = vmul.f32 %v403, 0.35355338
  %v939 = vmul.f32 %v479, 0.35355338
  %v940 = vmul.f32 %v555, 0.35355338
  %v941 = vmul.f32 %v631, 0.35355338
  %v942 = vmul.f32 %v707, 0.35355338
  %v943 = vmul.f32 %v783, 0.35355338
  %v944 = vmul.f32 %v859, 0.35355338
  %v945 = vmul.f32 %v935, 0.35355338
  %v946 = vsel %vm331, %v938, -inf
  %947 = vmax.xlane.f32.xlu0 %v946
  %v948 = vpop.xlane.xlu0 %947
  %v949 = vsel %vm331, %v939, -inf
  %950 = vmax.xlane.f32.xlu0 %v949
  %v951 = vpop.xlane.xlu0 %950
  %v952 = vsel %vm331, %v940, -inf
  %953 = vmax.xlane.f32.xlu0 %v952
  %v954 = vpop.xlane.xlu0 %953
  %v955 = vsel %vm331, %v941, -inf
  %956 = vmax.xlane.f32.xlu0 %v955
  %v957 = vpop.xlane.xlu0 %956
  %v958 = vsel %vm331, %v942, -inf
  %959 = vmax.xlane.f32.xlu0 %v958
  %v960 = vpop.xlane.xlu0 %959
  %v961 = vsel %vm331, %v943, -inf
  %962 = vmax.xlane.f32.xlu0 %v961
  %v963 = vpop.xlane.xlu0 %962
  %v964 = vsel %vm331, %v944, -inf
  %965 = vmax.xlane.f32.xlu0 %v964
  %v966 = vpop.xlane.xlu0 %965
  %v967 = vsel %vm331, %v945, -inf
  %968 = vmax.xlane.f32.xlu0 %v967
  %v969 = vpop.xlane.xlu0 %968
  %v970 = vsub.f32 %v938, %v948
  %v971 = vsub.f32 %v939, %v951
  %v972 = vsub.f32 %v940, %v954
  %v973 = vsub.f32 %v941, %v957
  %v974 = vsub.f32 %v942, %v960
  %v975 = vsub.f32 %v943, %v963
  %v976 = vsub.f32 %v944, %v966
  %v977 = vsub.f32 %v945, %v969
  %v978 = vmul.f32 %v970, 1.442695
  %v979 = vpow.pop %v978
  %v980 = vmul.f32 %v971, 1.442695
  %v981 = vpow.pop %v980
  %v982 = vmul.f32 %v972, 1.442695
  %v983 = vpow.pop %v982
  %v984 = vmul.f32 %v973, 1.442695
  %v985 = vpow.pop %v984
  %v986 = vmul.f32 %v974, 1.442695
  %v987 = vpow.pop %v986
  %v988 = vmul.f32 %v975, 1.442695
  %v989 = vpow.pop %v988
  %v990 = vmul.f32 %v976, 1.442695
  %v991 = vpow.pop %v990
  %v992 = vmul.f32 %v977, 1.442695
  %v993 = vpow.pop %v992
  %v994 = vsel %vm331, %v979, 0.0
  %995 = vadd.xlane.f32.xlu0 %v994
  %v996 = vpop.xlane.xlu0 %995
  %v997 = vsel %vm331, %v981, 0.0
  %998 = vadd.xlane.f32.xlu0 %v997
  %v999 = vpop.xlane.xlu0 %998
  %v1000 = vsel %vm331, %v983, 0.0
  %1001 = vadd.xlane.f32.xlu0 %v1000
  %v1002 = vpop.xlane.xlu0 %1001
  %v1003 = vsel %vm331, %v985, 0.0
  %1004 = vadd.xlane.f32.xlu0 %v1003
  %v1005 = vpop.xlane.xlu0 %1004
  %v1006 = vsel %vm331, %v987, 0.0
  %1007 = vadd.xlane.f32.xlu0 %v1006
  %v1008 = vpop.xlane.xlu0 %1007
  %v1009 = vsel %vm331, %v989, 0.0
  %1010 = vadd.xlane.f32.xlu0 %v1009
  %v1011 = vpop.xlane.xlu0 %1010
  %v1012 = vsel %vm331, %v991, 0.0
  %1013 = vadd.xlane.f32.xlu0 %v1012
  %v1014 = vpop.xlane.xlu0 %1013
  %v1015 = vsel %vm331, %v993, 0.0
  %1016 = vadd.xlane.f32.xlu0 %v1015
  %v1017 = vpop.xlane.xlu0 %1016
  %v1018 = vrcp.pop %v996
  %v1019 = vrcp.pop %v999
  %v1020 = vrcp.pop %v1002
  %v1021 = vrcp.pop %v1005
  %v1022 = vrcp.pop %v1008
  %v1023 = vrcp.pop %v1011
  %v1024 = vrcp.pop %v1014
  %v1025 = vrcp.pop %v1017
  %v1026 = vmul.f32 %v979, %v1018
  %v1027 = vmul.f32 %v981, %v1019
  %v1028 = vmul.f32 %v983, %v1020
  %v1029 = vmul.f32 %v985, %v1021
  %v1030 = vmul.f32 %v987, %v1022
  %v1031 = vmul.f32 %v989, %v1023
  %v1032 = vmul.f32 %v991, %v1024
  %v1033 = vmul.f32 %v993, %v1025
  %1034 = vrot.lane.b32.xlu0 %v307, 64
  %v1035 = vpop.permute.xlu0 %1034
  %v1038 = vsel %vm331, %v1026, 0
  %1040 = vmatprep.subr.mxu0 0.0
  %1041 = vmatpush1.msra.mxu0 %v1035
  %1042 = vmatprep.subr.mxu0 0.0
  %1043 = vmatpush1.msra.mxu0 0.0
  %1044 = vmatprep.subr.mxu0 0.0
  %1045 = vmatpush1.msra.mxu0 0.0
  %1046 = vmatprep.subr.mxu0 0.0
  %1047 = vmatpush1.msra.mxu0 0.0
  %1048 = vmatprep.subr.mxu0 0.0
  %1049 = vmatpush1.msra.mxu0 0.0
  %1050 = vmatprep.subr.mxu0 0.0
  %1051 = vmatpush1.msra.mxu0 0.0
  %1052 = vmatprep.subr.mxu0 0.0
  %1053 = vmatpush1.msra.mxu0 0.0
  %1054 = vmatprep.subr.mxu0 0.0
  %1055 = vmatpush1.msra.mxu0 0.0
  %1056 = vmatprep.subr.mxu0 0.0
  %1057 = vmatpush1.msra.mxu0 0.0
  %1058 = vmatprep.subr.mxu0 0.0
  %1059 = vmatpush1.msra.mxu0 0.0
  %1060 = vmatprep.subr.mxu0 0.0
  %1061 = vmatpush1.msra.mxu0 0.0
  %1062 = vmatprep.subr.mxu0 0.0
  %1063 = vmatpush1.msra.mxu0 0.0
  %1064 = vmatprep.subr.mxu0 0.0
  %1065 = vmatpush1.msra.mxu0 0.0
  %1066 = vmatprep.subr.mxu0 0.0
  %1067 = vmatpush1.msra.mxu0 0.0
  %1068 = vmatprep.subr.mxu0 0.0
  %1069 = vmatpush1.msra.mxu0 0.0
  %1070 = vmatprep.subr.mxu0 0.0
  %1071 = vmatpush1.msra.mxu0 0.0
  %1072 = vmatprep.subr.mxu0 0.0
  %1073 = vmatpush1.msra.mxu0 0.0
  %1074 = vmatprep.subr.mxu0 0.0
  %1075 = vmatpush1.msra.mxu0 0.0
  %1076 = vmatprep.subr.mxu0 0.0
  %1077 = vmatpush1.msra.mxu0 0.0
  %1078 = vmatprep.subr.mxu0 0.0
  %1079 = vmatpush1.msra.mxu0 0.0
  %1080 = vmatprep.subr.mxu0 0.0
  %1081 = vmatpush1.msra.mxu0 0.0
  %1082 = vmatprep.subr.mxu0 0.0
  %1083 = vmatpush1.msra.mxu0 0.0
  %1084 = vmatprep.subr.mxu0 0.0
  %1085 = vmatpush1.msra.mxu0 0.0
  %1086 = vmatprep.subr.mxu0 0.0
  %1087 = vmatpush1.msra.mxu0 0.0
  %1088 = vmatprep.subr.mxu0 0.0
  %1089 = vmatpush1.msra.mxu0 0.0
  %1090 = vmatprep.subr.mxu0 0.0
  %1091 = vmatpush1.msra.mxu0 0.0
  %1092 = vmatprep.subr.mxu0 0.0
  %1093 = vmatpush1.msra.mxu0 0.0
  %1094 = vmatprep.subr.mxu0 0.0
  %1095 = vmatpush1.msra.mxu0 0.0
  %1096 = vmatprep.subr.mxu0 0.0
  %1097 = vmatpush1.msra.mxu0 0.0
  %1098 = vmatprep.subr.mxu0 0.0
  %1099 = vmatpush1.msra.mxu0 0.0
  %1100 = vmatprep.subr.mxu0 0.0
  %1101 = vmatpush1.msra.mxu0 0.0
  %1102 = vmatprep.subr.mxu0 0.0
  %1103 = vmatpush1.msra.mxu0 0.0
  %1104 = vmatprep.mubr.f32.mxu0 0.0
  %1105 = vmatmul.mubr.f32.gmra.mrb[0].mxu0 %v1038
  %v1106 = vpop.f32.mrb[0].mxu0
  %v1107 = vadd.f32 0.0, %v1106
  %v1108 = vpop.f32.mrb[0].mxu0
  %1109 = vdwg.mxu0
  %1110 = vrot.lane.b32.xlu0 %v317, 64
  %v1111 = vpop.permute.xlu0 %1110
  %v1114 = vsel %vm331, %v1027, 0
  %1116 = vmatprep.subr.mxu0 0.0
  %1117 = vmatpush1.msra.mxu0 %v1111
  %1118 = vmatprep.subr.mxu0 0.0
  %1119 = vmatpush1.msra.mxu0 0.0
  %1120 = vmatprep.subr.mxu0 0.0
  %1121 = vmatpush1.msra.mxu0 0.0
  %1122 = vmatprep.subr.mxu0 0.0
  %1123 = vmatpush1.msra.mxu0 0.0
  %1124 = vmatprep.subr.mxu0 0.0
  %1125 = vmatpush1.msra.mxu0 0.0
  %1126 = vmatprep.subr.mxu0 0.0
  %1127 = vmatpush1.msra.mxu0 0.0
  %1128 = vmatprep.subr.mxu0 0.0
  %1129 = vmatpush1.msra.mxu0 0.0
  %1130 = vmatprep.subr.mxu0 0.0
  %1131 = vmatpush1.msra.mxu0 0.0
  %1132 = vmatprep.subr.mxu0 0.0
  %1133 = vmatpush1.msra.mxu0 0.0
  %1134 = vmatprep.subr.mxu0 0.0
  %1135 = vmatpush1.msra.mxu0 0.0
  %1136 = vmatprep.subr.mxu0 0.0
  %1137 = vmatpush1.msra.mxu0 0.0
  %1138 = vmatprep.subr.mxu0 0.0
  %1139 = vmatpush1.msra.mxu0 0.0
  %1140 = vmatprep.subr.mxu0 0.0
  %1141 = vmatpush1.msra.mxu0 0.0
  %1142 = vmatprep.subr.mxu0 0.0
  %1143 = vmatpush1.msra.mxu0 0.0
  %1144 = vmatprep.subr.mxu0 0.0
  %1145 = vmatpush1.msra.mxu0 0.0
  %1146 = vmatprep.subr.mxu0 0.0
  %1147 = vmatpush1.msra.mxu0 0.0
  %1148 = vmatprep.subr.mxu0 0.0
  %1149 = vmatpush1.msra.mxu0 0.0
  %1150 = vmatprep.subr.mxu0 0.0
  %1151 = vmatpush1.msra.mxu0 0.0
  %1152 = vmatprep.subr.mxu0 0.0
  %1153 = vmatpush1.msra.mxu0 0.0
  %1154 = vmatprep.subr.mxu0 0.0
  %1155 = vmatpush1.msra.mxu0 0.0
  %1156 = vmatprep.subr.mxu0 0.0
  %1157 = vmatpush1.msra.mxu0 0.0
  %1158 = vmatprep.subr.mxu0 0.0
  %1159 = vmatpush1.msra.mxu0 0.0
  %1160 = vmatprep.subr.mxu0 0.0
  %1161 = vmatpush1.msra.mxu0 0.0
  %1162 = vmatprep.subr.mxu0 0.0
  %1163 = vmatpush1.msra.mxu0 0.0
  %1164 = vmatprep.subr.mxu0 0.0
  %1165 = vmatpush1.msra.mxu0 0.0
  %1166 = vmatprep.subr.mxu0 0.0
  %1167 = vmatpush1.msra.mxu0 0.0
  %1168 = vmatprep.subr.mxu0 0.0
  %1169 = vmatpush1.msra.mxu0 0.0
  %1170 = vmatprep.subr.mxu0 0.0
  %1171 = vmatpush1.msra.mxu0 0.0
  %1172 = vmatprep.subr.mxu0 0.0
  %1173 = vmatpush1.msra.mxu0 0.0
  %1174 = vmatprep.subr.mxu0 0.0
  %1175 = vmatpush1.msra.mxu0 0.0
  %1176 = vmatprep.subr.mxu0 0.0
  %1177 = vmatpush1.msra.mxu0 0.0
  %1178 = vmatprep.subr.mxu0 0.0
  %1179 = vmatpush1.msra.mxu0 0.0
  %1180 = vmatprep.mubr.f32.mxu0 0.0
  %1181 = vmatmul.mubr.f32.gmra.mrb[0].mxu0 %v1114
  %v1182 = vpop.f32.mrb[0].mxu0
  %v1183 = vadd.f32 0.0, %v1182
  %v1184 = vpop.f32.mrb[0].mxu0
  %1185 = vdwg.mxu0
  %1186 = vrot.lane.b32.xlu0 %v319, 64
  %v1187 = vpop.permute.xlu0 %1186
  %v1190 = vsel %vm331, %v1028, 0
  %1192 = vmatprep.subr.mxu0 0.0
  %1193 = vmatpush1.msra.mxu0 %v1187
  %1194 = vmatprep.subr.mxu0 0.0
  %1195 = vmatpush1.msra.mxu0 0.0
  %1196 = vmatprep.subr.mxu0 0.0
  %1197 = vmatpush1.msra.mxu0 0.0
  %1198 = vmatprep.subr.mxu0 0.0
  %1199 = vmatpush1.msra.mxu0 0.0
  %1200 = vmatprep.subr.mxu0 0.0
  %1201 = vmatpush1.msra.mxu0 0.0
  %1202 = vmatprep.subr.mxu0 0.0
  %1203 = vmatpush1.msra.mxu0 0.0
  %1204 = vmatprep.subr.mxu0 0.0
  %1205 = vmatpush1.msra.mxu0 0.0
  %1206 = vmatprep.subr.mxu0 0.0
  %1207 = vmatpush1.msra.mxu0 0.0
  %1208 = vmatprep.subr.mxu0 0.0
  %1209 = vmatpush1.msra.mxu0 0.0
  %1210 = vmatprep.subr.mxu0 0.0
  %1211 = vmatpush1.msra.mxu0 0.0
  %1212 = vmatprep.subr.mxu0 0.0
  %1213 = vmatpush1.msra.mxu0 0.0
  %1214 = vmatprep.subr.mxu0 0.0
  %1215 = vmatpush1.msra.mxu0 0.0
  %1216 = vmatprep.subr.mxu0 0.0
  %1217 = vmatpush1.msra.mxu0 0.0
  %1218 = vmatprep.subr.mxu0 0.0
  %1219 = vmatpush1.msra.mxu0 0.0
  %1220 = vmatprep.subr.mxu0 0.0
  %1221 = vmatpush1.msra.mxu0 0.0
  %1222 = vmatprep.subr.mxu0 0.0
  %1223 = vmatpush1.msra.mxu0 0.0
  %1224 = vmatprep.subr.mxu0 0.0
  %1225 = vmatpush1.msra.mxu0 0.0
  %1226 = vmatprep.subr.mxu0 0.0
  %1227 = vmatpush1.msra.mxu0 0.0
  %1228 = vmatprep.subr.mxu0 0.0
  %1229 = vmatpush1.msra.mxu0 0.0
  %1230 = vmatprep.subr.mxu0 0.0
  %1231 = vmatpush1.msra.mxu0 0.0
  %1232 = vmatprep.subr.mxu0 0.0
  %1233 = vmatpush1.msra.mxu0 0.0
  %1234 = vmatprep.subr.mxu0 0.0
  %1235 = vmatpush1.msra.mxu0 0.0
  %1236 = vmatprep.subr.mxu0 0.0
  %1237 = vmatpush1.msra.mxu0 0.0
  %1238 = vmatprep.subr.mxu0 0.0
  %1239 = vmatpush1.msra.mxu0 0.0
  %1240 = vmatprep.subr.mxu0 0.0
  %1241 = vmatpush1.msra.mxu0 0.0
  %1242 = vmatprep.subr.mxu0 0.0
  %1243 = vmatpush1.msra.mxu0 0.0
  %1244 = vmatprep.subr.mxu0 0.0
  %1245 = vmatpush1.msra.mxu0 0.0
  %1246 = vmatprep.subr.mxu0 0.0
  %1247 = vmatpush1.msra.mxu0 0.0
  %1248 = vmatprep.subr.mxu0 0.0
  %1249 = vmatpush1.msra.mxu0 0.0
  %1250 = vmatprep.subr.mxu0 0.0
  %1251 = vmatpush1.msra.mxu0 0.0
  %1252 = vmatprep.subr.mxu0 0.0
  %1253 = vmatpush1.msra.mxu0 0.0
  %1254 = vmatprep.subr.mxu0 0.0
  %1255 = vmatpush1.msra.mxu0 0.0
  %1256 = vmatprep.mubr.f32.mxu0 0.0
  %1257 = vmatmul.mubr.f32.gmra.mrb[0].mxu0 %v1190
  %v1258 = vpop.f32.mrb[0].mxu0
  %v1259 = vadd.f32 0.0, %v1258
  %v1260 = vpop.f32.mrb[0].mxu0
  %1261 = vdwg.mxu0
  %1262 = vrot.lane.b32.xlu0 %v321, 64
  %v1263 = vpop.permute.xlu0 %1262
  %v1266 = vsel %vm331, %v1029, 0
  %1268 = vmatprep.subr.mxu0 0.0
  %1269 = vmatpush1.msra.mxu0 %v1263
  %1270 = vmatprep.subr.mxu0 0.0
  %1271 = vmatpush1.msra.mxu0 0.0
  %1272 = vmatprep.subr.mxu0 0.0
  %1273 = vmatpush1.msra.mxu0 0.0
  %1274 = vmatprep.subr.mxu0 0.0
  %1275 = vmatpush1.msra.mxu0 0.0
  %1276 = vmatprep.subr.mxu0 0.0
  %1277 = vmatpush1.msra.mxu0 0.0
  %1278 = vmatprep.subr.mxu0 0.0
  %1279 = vmatpush1.msra.mxu0 0.0
  %1280 = vmatprep.subr.mxu0 0.0
  %1281 = vmatpush1.msra.mxu0 0.0
  %1282 = vmatprep.subr.mxu0 0.0
  %1283 = vmatpush1.msra.mxu0 0.0
  %1284 = vmatprep.subr.mxu0 0.0
  %1285 = vmatpush1.msra.mxu0 0.0
  %1286 = vmatprep.subr.mxu0 0.0
  %1287 = vmatpush1.msra.mxu0 0.0
  %1288 = vmatprep.subr.mxu0 0.0
  %1289 = vmatpush1.msra.mxu0 0.0
  %1290 = vmatprep.subr.mxu0 0.0
  %1291 = vmatpush1.msra.mxu0 0.0
  %1292 = vmatprep.subr.mxu0 0.0
  %1293 = vmatpush1.msra.mxu0 0.0
  %1294 = vmatprep.subr.mxu0 0.0
  %1295 = vmatpush1.msra.mxu0 0.0
  %1296 = vmatprep.subr.mxu0 0.0
  %1297 = vmatpush1.msra.mxu0 0.0
  %1298 = vmatprep.subr.mxu0 0.0
  %1299 = vmatpush1.msra.mxu0 0.0
  %1300 = vmatprep.subr.mxu0 0.0
  %1301 = vmatpush1.msra.mxu0 0.0
  %1302 = vmatprep.subr.mxu0 0.0
  %1303 = vmatpush1.msra.mxu0 0.0
  %1304 = vmatprep.subr.mxu0 0.0
  %1305 = vmatpush1.msra.mxu0 0.0
  %1306 = vmatprep.subr.mxu0 0.0
  %1307 = vmatpush1.msra.mxu0 0.0
  %1308 = vmatprep.subr.mxu0 0.0
  %1309 = vmatpush1.msra.mxu0 0.0
  %1310 = vmatprep.subr.mxu0 0.0
  %1311 = vmatpush1.msra.mxu0 0.0
  %1312 = vmatprep.subr.mxu0 0.0
  %1313 = vmatpush1.msra.mxu0 0.0
  %1314 = vmatprep.subr.mxu0 0.0
  %1315 = vmatpush1.msra.mxu0 0.0
  %1316 = vmatprep.subr.mxu0 0.0
  %1317 = vmatpush1.msra.mxu0 0.0
  %1318 = vmatprep.subr.mxu0 0.0
  %1319 = vmatpush1.msra.mxu0 0.0
  %1320 = vmatprep.subr.mxu0 0.0
  %1321 = vmatpush1.msra.mxu0 0.0
  %1322 = vmatprep.subr.mxu0 0.0
  %1323 = vmatpush1.msra.mxu0 0.0
  %1324 = vmatprep.subr.mxu0 0.0
  %1325 = vmatpush1.msra.mxu0 0.0
  %1326 = vmatprep.subr.mxu0 0.0
  %1327 = vmatpush1.msra.mxu0 0.0
  %1328 = vmatprep.subr.mxu0 0.0
  %1329 = vmatpush1.msra.mxu0 0.0
  %1330 = vmatprep.subr.mxu0 0.0
  %1331 = vmatpush1.msra.mxu0 0.0
  %1332 = vmatprep.mubr.f32.mxu0 0.0
  %1333 = vmatmul.mubr.f32.gmra.mrb[0].mxu0 %v1266
  %v1334 = vpop.f32.mrb[0].mxu0
  %v1335 = vadd.f32 0.0, %v1334
  %v1336 = vpop.f32.mrb[0].mxu0
  %1337 = vdwg.mxu0
  %1338 = vrot.lane.b32.xlu0 %v312, 64
  %v1339 = vpop.permute.xlu0 %1338
  %v1342 = vsel %vm331, %v1030, 0
  %1344 = vmatprep.subr.mxu0 0.0
  %1345 = vmatpush1.msra.mxu0 %v1339
  %1346 = vmatprep.subr.mxu0 0.0
  %1347 = vmatpush1.msra.mxu0 0.0
  %1348 = vmatprep.subr.mxu0 0.0
  %1349 = vmatpush1.msra.mxu0 0.0
  %1350 = vmatprep.subr.mxu0 0.0
  %1351 = vmatpush1.msra.mxu0 0.0
  %1352 = vmatprep.subr.mxu0 0.0
  %1353 = vmatpush1.msra.mxu0 0.0
  %1354 = vmatprep.subr.mxu0 0.0
  %1355 = vmatpush1.msra.mxu0 0.0
  %1356 = vmatprep.subr.mxu0 0.0
  %1357 = vmatpush1.msra.mxu0 0.0
  %1358 = vmatprep.subr.mxu0 0.0
  %1359 = vmatpush1.msra.mxu0 0.0
  %1360 = vmatprep.subr.mxu0 0.0
  %1361 = vmatpush1.msra.mxu0 0.0
  %1362 = vmatprep.subr.mxu0 0.0
  %1363 = vmatpush1.msra.mxu0 0.0
  %1364 = vmatprep.subr.mxu0 0.0
  %1365 = vmatpush1.msra.mxu0 0.0
  %1366 = vmatprep.subr.mxu0 0.0
  %1367 = vmatpush1.msra.mxu0 0.0
  %1368 = vmatprep.subr.mxu0 0.0
  %1369 = vmatpush1.msra.mxu0 0.0
  %1370 = vmatprep.subr.mxu0 0.0
  %1371 = vmatpush1.msra.mxu0 0.0
  %1372 = vmatprep.subr.mxu0 0.0
  %1373 = vmatpush1.msra.mxu0 0.0
  %1374 = vmatprep.subr.mxu0 0.0
  %1375 = vmatpush1.msra.mxu0 0.0
  %1376 = vmatprep.subr.mxu0 0.0
  %1377 = vmatpush1.msra.mxu0 0.0
  %1378 = vmatprep.subr.mxu0 0.0
  %1379 = vmatpush1.msra.mxu0 0.0
  %1380 = vmatprep.subr.mxu0 0.0
  %1381 = vmatpush1.msra.mxu0 0.0
  %1382 = vmatprep.subr.mxu0 0.0
  %1383 = vmatpush1.msra.mxu0 0.0
  %1384 = vmatprep.subr.mxu0 0.0
  %1385 = vmatpush1.msra.mxu0 0.0
  %1386 = vmatprep.subr.mxu0 0.0
  %1387 = vmatpush1.msra.mxu0 0.0
  %1388 = vmatprep.subr.mxu0 0.0
  %1389 = vmatpush1.msra.mxu0 0.0
  %1390 = vmatprep.subr.mxu0 0.0
  %1391 = vmatpush1.msra.mxu0 0.0
  %1392 = vmatprep.subr.mxu0 0.0
  %1393 = vmatpush1.msra.mxu0 0.0
  %1394 = vmatprep.subr.mxu0 0.0
  %1395 = vmatpush1.msra.mxu0 0.0
  %1396 = vmatprep.subr.mxu0 0.0
  %1397 = vmatpush1.msra.mxu0 0.0
  %1398 = vmatprep.subr.mxu0 0.0
  %1399 = vmatpush1.msra.mxu0 0.0
  %1400 = vmatprep.subr.mxu0 0.0
  %1401 = vmatpush1.msra.mxu0 0.0
  %1402 = vmatprep.subr.mxu0 0.0
  %1403 = vmatpush1.msra.mxu0 0.0
  %1404 = vmatprep.subr.mxu0 0.0
  %1405 = vmatpush1.msra.mxu0 0.0
  %1406 = vmatprep.subr.mxu0 0.0
  %1407 = vmatpush1.msra.mxu0 0.0
  %1408 = vmatprep.mubr.f32.mxu0 0.0
  %1409 = vmatmul.mubr.f32.gmra.mrb[0].mxu0 %v1342
  %v1410 = vpop.f32.mrb[0].mxu0
  %v1411 = vadd.f32 0.0, %v1410
  %v1412 = vpop.f32.mrb[0].mxu0
  %1413 = vdwg.mxu0
  %1414 = vrot.lane.b32.xlu0 %v324, 64
  %v1415 = vpop.permute.xlu0 %1414
  %v1418 = vsel %vm331, %v1031, 0
  %1420 = vmatprep.subr.mxu0 0.0
  %1421 = vmatpush1.msra.mxu0 %v1415
  %1422 = vmatprep.subr.mxu0 0.0
  %1423 = vmatpush1.msra.mxu0 0.0
  %1424 = vmatprep.subr.mxu0 0.0
  %1425 = vmatpush1.msra.mxu0 0.0
  %1426 = vmatprep.subr.mxu0 0.0
  %1427 = vmatpush1.msra.mxu0 0.0
  %1428 = vmatprep.subr.mxu0 0.0
  %1429 = vmatpush1.msra.mxu0 0.0
  %1430 = vmatprep.subr.mxu0 0.0
  %1431 = vmatpush1.msra.mxu0 0.0
  %1432 = vmatprep.subr.mxu0 0.0
  %1433 = vmatpush1.msra.mxu0 0.0
  %1434 = vmatprep.subr.mxu0 0.0
  %1435 = vmatpush1.msra.mxu0 0.0
  %1436 = vmatprep.subr.mxu0 0.0
  %1437 = vmatpush1.msra.mxu0 0.0
  %1438 = vmatprep.subr.mxu0 0.0
  %1439 = vmatpush1.msra.mxu0 0.0
  %1440 = vmatprep.subr.mxu0 0.0
  %1441 = vmatpush1.msra.mxu0 0.0
  %1442 = vmatprep.subr.mxu0 0.0
  %1443 = vmatpush1.msra.mxu0 0.0
  %1444 = vmatprep.subr.mxu0 0.0
  %1445 = vmatpush1.msra.mxu0 0.0
  %1446 = vmatprep.subr.mxu0 0.0
  %1447 = vmatpush1.msra.mxu0 0.0
  %1448 = vmatprep.subr.mxu0 0.0
  %1449 = vmatpush1.msra.mxu0 0.0
  %1450 = vmatprep.subr.mxu0 0.0
  %1451 = vmatpush1.msra.mxu0 0.0
  %1452 = vmatprep.subr.mxu0 0.0
  %1453 = vmatpush1.msra.mxu0 0.0
  %1454 = vmatprep.subr.mxu0 0.0
  %1455 = vmatpush1.msra.mxu0 0.0
  %1456 = vmatprep.subr.mxu0 0.0
  %1457 = vmatpush1.msra.mxu0 0.0
  %1458 = vmatprep.subr.mxu0 0.0
  %1459 = vmatpush1.msra.mxu0 0.0
  %1460 = vmatprep.subr.mxu0 0.0
  %1461 = vmatpush1.msra.mxu0 0.0
  %1462 = vmatprep.subr.mxu0 0.0
  %1463 = vmatpush1.msra.mxu0 0.0
  %1464 = vmatprep.subr.mxu0 0.0
  %1465 = vmatpush1.msra.mxu0 0.0
  %1466 = vmatprep.subr.mxu0 0.0
  %1467 = vmatpush1.msra.mxu0 0.0
  %1468 = vmatprep.subr.mxu0 0.0
  %1469 = vmatpush1.msra.mxu0 0.0
  %1470 = vmatprep.subr.mxu0 0.0
  %1471 = vmatpush1.msra.mxu0 0.0
  %1472 = vmatprep.subr.mxu0 0.0
  %1473 = vmatpush1.msra.mxu0 0.0
  %1474 = vmatprep.subr.mxu0 0.0
  %1475 = vmatpush1.msra.mxu0 0.0
  %1476 = vmatprep.subr.mxu0 0.0
  %1477 = vmatpush1.msra.mxu0 0.0
  %1478 = vmatprep.subr.mxu0 0.0
  %1479 = vmatpush1.msra.mxu0 0.0
  %1480 = vmatprep.subr.mxu0 0.0
  %1481 = vmatpush1.msra.mxu0 0.0
  %1482 = vmatprep.subr.mxu0 0.0
  %1483 = vmatpush1.msra.mxu0 0.0
  %1484 = vmatprep.mubr.f32.mxu0 0.0
  %1485 = vmatmul.mubr.f32.gmra.mrb[0].mxu0 %v1418
  %v1486 = vpop.f32.mrb[0].mxu0
  %v1487 = vadd.f32 0.0, %v1486
  %v1488 = vpop.f32.mrb[0].mxu0
  %1489 = vdwg.mxu0
  %1490 = vrot.lane.b32.xlu0 %v326, 64
  %v1491 = vpop.permute.xlu0 %1490
  %v1494 = vsel %vm331, %v1032, 0
  %1496 = vmatprep.subr.mxu0 0.0
  %1497 = vmatpush1.msra.mxu0 %v1491
  %1498 = vmatprep.subr.mxu0 0.0
  %1499 = vmatpush1.msra.mxu0 0.0
  %1500 = vmatprep.subr.mxu0 0.0
  %1501 = vmatpush1.msra.mxu0 0.0
  %1502 = vmatprep.subr.mxu0 0.0
  %1503 = vmatpush1.msra.mxu0 0.0
  %1504 = vmatprep.subr.mxu0 0.0
  %1505 = vmatpush1.msra.mxu0 0.0
  %1506 = vmatprep.subr.mxu0 0.0
  %1507 = vmatpush1.msra.mxu0 0.0
  %1508 = vmatprep.subr.mxu0 0.0
  %1509 = vmatpush1.msra.mxu0 0.0
  %1510 = vmatprep.subr.mxu0 0.0
  %1511 = vmatpush1.msra.mxu0 0.0
  %1512 = vmatprep.subr.mxu0 0.0
  %1513 = vmatpush1.msra.mxu0 0.0
  %1514 = vmatprep.subr.mxu0 0.0
  %1515 = vmatpush1.msra.mxu0 0.0
  %1516 = vmatprep.subr.mxu0 0.0
  %1517 = vmatpush1.msra.mxu0 0.0
  %1518 = vmatprep.subr.mxu0 0.0
  %1519 = vmatpush1.msra.mxu0 0.0
  %1520 = vmatprep.subr.mxu0 0.0
  %1521 = vmatpush1.msra.mxu0 0.0
  %1522 = vmatprep.subr.mxu0 0.0
  %1523 = vmatpush1.msra.mxu0 0.0
  %1524 = vmatprep.subr.mxu0 0.0
  %1525 = vmatpush1.msra.mxu0 0.0
  %1526 = vmatprep.subr.mxu0 0.0
  %1527 = vmatpush1.msra.mxu0 0.0
  %1528 = vmatprep.subr.mxu0 0.0
  %1529 = vmatpush1.msra.mxu0 0.0
  %1530 = vmatprep.subr.mxu0 0.0
  %1531 = vmatpush1.msra.mxu0 0.0
  %1532 = vmatprep.subr.mxu0 0.0
  %1533 = vmatpush1.msra.mxu0 0.0
  %1534 = vmatprep.subr.mxu0 0.0
  %1535 = vmatpush1.msra.mxu0 0.0
  %1536 = vmatprep.subr.mxu0 0.0
  %1537 = vmatpush1.msra.mxu0 0.0
  %1538 = vmatprep.subr.mxu0 0.0
  %1539 = vmatpush1.msra.mxu0 0.0
  %1540 = vmatprep.subr.mxu0 0.0
  %1541 = vmatpush1.msra.mxu0 0.0
  %1542 = vmatprep.subr.mxu0 0.0
  %1543 = vmatpush1.msra.mxu0 0.0
  %1544 = vmatprep.subr.mxu0 0.0
  %1545 = vmatpush1.msra.mxu0 0.0
  %1546 = vmatprep.subr.mxu0 0.0
  %1547 = vmatpush1.msra.mxu0 0.0
  %1548 = vmatprep.subr.mxu0 0.0
  %1549 = vmatpush1.msra.mxu0 0.0
  %1550 = vmatprep.subr.mxu0 0.0
  %1551 = vmatpush1.msra.mxu0 0.0
  %1552 = vmatprep.subr.mxu0 0.0
  %1553 = vmatpush1.msra.mxu0 0.0
  %1554 = vmatprep.subr.mxu0 0.0
  %1555 = vmatpush1.msra.mxu0 0.0
  %1556 = vmatprep.subr.mxu0 0.0
  %1557 = vmatpush1.msra.mxu0 0.0
  %1558 = vmatprep.subr.mxu0 0.0
  %1559 = vmatpush1.msra.mxu0 0.0
  %1560 = vmatprep.mubr.f32.mxu0 0.0
  %1561 = vmatmul.mubr.f32.gmra.mrb[0].mxu0 %v1494
  %v1562 = vpop.f32.mrb[0].mxu0
  %v1563 = vadd.f32 0.0, %v1562
  %v1564 = vpop.f32.mrb[0].mxu0
  %1565 = vdwg.mxu0
  %1566 = vrot.lane.b32.xlu0 %v328, 64
  %v1567 = vpop.permute.xlu0 %1566
  %v1570 = vsel %vm331, %v1033, 0
  %1572 = vmatprep.subr.mxu0 0.0
  %1573 = vmatpush1.msra.mxu0 %v1567
  %1574 = vmatprep.subr.mxu0 0.0
  %1575 = vmatpush1.msra.mxu0 0.0
  %1576 = vmatprep.subr.mxu0 0.0
  %1577 = vmatpush1.msra.mxu0 0.0
  %1578 = vmatprep.subr.mxu0 0.0
  %1579 = vmatpush1.msra.mxu0 0.0
  %1580 = vmatprep.subr.mxu0 0.0
  %1581 = vmatpush1.msra.mxu0 0.0
  %1582 = vmatprep.subr.mxu0 0.0
  %1583 = vmatpush1.msra.mxu0 0.0
  %1584 = vmatprep.subr.mxu0 0.0
  %1585 = vmatpush1.msra.mxu0 0.0
  %1586 = vmatprep.subr.mxu0 0.0
  %1587 = vmatpush1.msra.mxu0 0.0
  %1588 = vmatprep.subr.mxu0 0.0
  %1589 = vmatpush1.msra.mxu0 0.0
  %1590 = vmatprep.subr.mxu0 0.0
  %1591 = vmatpush1.msra.mxu0 0.0
  %1592 = vmatprep.subr.mxu0 0.0
  %1593 = vmatpush1.msra.mxu0 0.0
  %1594 = vmatprep.subr.mxu0 0.0
  %1595 = vmatpush1.msra.mxu0 0.0
  %1596 = vmatprep.subr.mxu0 0.0
  %1597 = vmatpush1.msra.mxu0 0.0
  %1598 = vmatprep.subr.mxu0 0.0
  %1599 = vmatpush1.msra.mxu0 0.0
  %1600 = vmatprep.subr.mxu0 0.0
  %1601 = vmatpush1.msra.mxu0 0.0
  %1602 = vmatprep.subr.mxu0 0.0
  %1603 = vmatpush1.msra.mxu0 0.0
  %1604 = vmatprep.subr.mxu0 0.0
  %1605 = vmatpush1.msra.mxu0 0.0
  %1606 = vmatprep.subr.mxu0 0.0
  %1607 = vmatpush1.msra.mxu0 0.0
  %1608 = vmatprep.subr.mxu0 0.0
  %1609 = vmatpush1.msra.mxu0 0.0
  %1610 = vmatprep.subr.mxu0 0.0
  %1611 = vmatpush1.msra.mxu0 0.0
  %1612 = vmatprep.subr.mxu0 0.0
  %1613 = vmatpush1.msra.mxu0 0.0
  %1614 = vmatprep.subr.mxu0 0.0
  %1615 = vmatpush1.msra.mxu0 0.0
  %1616 = vmatprep.subr.mxu0 0.0
  %1617 = vmatpush1.msra.mxu0 0.0
  %1618 = vmatprep.subr.mxu0 0.0
  %1619 = vmatpush1.msra.mxu0 0.0
  %1620 = vmatprep.subr.mxu0 0.0
  %1621 = vmatpush1.msra.mxu0 0.0
  %1622 = vmatprep.subr.mxu0 0.0
  %1623 = vmatpush1.msra.mxu0 0.0
  %1624 = vmatprep.subr.mxu0 0.0
  %1625 = vmatpush1.msra.mxu0 0.0
  %1626 = vmatprep.subr.mxu0 0.0
  %1627 = vmatpush1.msra.mxu0 0.0
  %1628 = vmatprep.subr.mxu0 0.0
  %1629 = vmatpush1.msra.mxu0 0.0
  %1630 = vmatprep.subr.mxu0 0.0
  %1631 = vmatpush1.msra.mxu0 0.0
  %1632 = vmatprep.subr.mxu0 0.0
  %1633 = vmatpush1.msra.mxu0 0.0
  %1634 = vmatprep.subr.mxu0 0.0
  %1635 = vmatpush1.msra.mxu0 0.0
  %1636 = vmatprep.mubr.f32.mxu0 0.0
  %1637 = vmatmul.mubr.f32.gmra.mrb[0].mxu0 %v1570
  %v1638 = vpop.f32.mrb[0].mxu0
  %v1639 = vadd.f32 0.0, %v1638
  %v1640 = vpop.f32.mrb[0].mxu0
  %1641 = vdwg.mxu0
  %1643 = vrot.lane.b32.xlu0 %v1183, 8
  %v1644 = vpop.permute.xlu0 %1643
  %1647 = vrot.lane.b32.xlu0 %v1259, 16
  %v1648 = vpop.permute.xlu0 %1647
  %1651 = vrot.lane.b32.xlu0 %v1335, 24
  %v1652 = vpop.permute.xlu0 %1651
  %v1654 = vsel %vm331, %v1107, %v1644
  %vm1655 = vcmask 130048
  %v1656 = vsel %vm1655, %v1654, %v1648
  %vm1657 = vcmask 195584
  %v1658 = vsel %vm1657, %v1656, %v1652
  %1660 = vrot.lane.b32.xlu0 %v1487, 8
  %v1661 = vpop.permute.xlu0 %1660
  %1664 = vrot.lane.b32.xlu0 %v1563, 16
  %v1665 = vpop.permute.xlu0 %1664
  %1668 = vrot.lane.b32.xlu0 %v1639, 24
  %v1669 = vpop.permute.xlu0 %1668
  %v1671 = vsel %vm331, %v1411, %v1661
  %v1672 = vsel %vm1655, %v1671, %v1665
  %v1673 = vsel %vm1657, %v1672, %v1669
  %v1674 = vld [vmem:[%s9] sm:$0xff]
  %v1675 = vld [vmem:[%s9 + $0x8] sm:$0xff]
  %v1676 = vld [vmem:[%s9 + $0x10] sm:$0xff]
  %v1677 = vld [vmem:[%s9 + $0x18] sm:$0xff]
  %v1678 = vld [vmem:[%s10] sm:$0x1]
  %v1680 = vlaneseq
  %v1681 = vshrl.u32 %v1680, 7
  %v1682 = vsub.s32 0, %v1681
  %v1683 = vrot.slane %v1678, %v1682
  %v1686 = vsel %vm179, %v1658, 0
  %v1689 = vsel %vm179, %v1673, 0
  %1691 = vmatprep.subr.mxu0 0.0
  %1692 = vmatpush1.msra.mxu0 %v1674
  %1693 = vmatprep.subr.mxu0 0.0
  %1694 = vmatpush1.msra.mxu0 %v1675
  %1695 = vmatprep.subr.mxu0 0.0
  %1696 = vmatpush1.msra.mxu0 %v1676
  %1697 = vmatprep.subr.mxu0 0.0
  %1698 = vmatpush1.msra.mxu0 %v1677
  %1699 = vmatprep.subr.mxu0 0.0
  %1700 = vmatpush1.msra.mxu0 0.0
  %1701 = vmatprep.subr.mxu0 0.0
  %1702 = vmatpush1.msra.mxu0 0.0
  %1703 = vmatprep.subr.mxu0 0.0
  %1704 = vmatpush1.msra.mxu0 0.0
  %1705 = vmatprep.subr.mxu0 0.0
  %1706 = vmatpush1.msra.mxu0 0.0
  %1707 = vmatprep.subr.mxu0 0.0
  %1708 = vmatpush1.msra.mxu0 0.0
  %1709 = vmatprep.subr.mxu0 0.0
  %1710 = vmatpush1.msra.mxu0 0.0
  %1711 = vmatprep.subr.mxu0 0.0
  %1712 = vmatpush1.msra.mxu0 0.0
  %1713 = vmatprep.subr.mxu0 0.0
  %1714 = vmatpush1.msra.mxu0 0.0
  %1715 = vmatprep.subr.mxu0 0.0
  %1716 = vmatpush1.msra.mxu0 0.0
  %1717 = vmatprep.subr.mxu0 0.0
  %1718 = vmatpush1.msra.mxu0 0.0
  %1719 = vmatprep.subr.mxu0 0.0
  %1720 = vmatpush1.msra.mxu0 0.0
  %1721 = vmatprep.subr.mxu0 0.0
  %1722 = vmatpush1.msra.mxu0 0.0
  %1723 = vmatprep.subr.mxu0 0.0
  %1724 = vmatpush1.msra.mxu0 0.0
  %1725 = vmatprep.subr.mxu0 0.0
  %1726 = vmatpush1.msra.mxu0 0.0
  %1727 = vmatprep.subr.mxu0 0.0
  %1728 = vmatpush1.msra.mxu0 0.0
  %1729 = vmatprep.subr.mxu0 0.0
  %1730 = vmatpush1.msra.mxu0 0.0
  %1731 = vmatprep.subr.mxu0 0.0
  %1732 = vmatpush1.msra.mxu0 0.0
  %1733 = vmatprep.subr.mxu0 0.0
  %1734 = vmatpush1.msra.mxu0 0.0
  %1735 = vmatprep.subr.mxu0 0.0
  %1736 = vmatpush1.msra.mxu0 0.0
  %1737 = vmatprep.subr.mxu0 0.0
  %1738 = vmatpush1.msra.mxu0 0.0
  %1739 = vmatprep.subr.mxu0 0.0
  %1740 = vmatpush1.msra.mxu0 0.0
  %1741 = vmatprep.subr.mxu0 0.0
  %1742 = vmatpush1.msra.mxu0 0.0
  %1743 = vmatprep.subr.mxu0 0.0
  %1744 = vmatpush1.msra.mxu0 0.0
  %1745 = vmatprep.subr.mxu0 0.0
  %1746 = vmatpush1.msra.mxu0 0.0
  %1747 = vmatprep.subr.mxu0 0.0
  %1748 = vmatpush1.msra.mxu0 0.0
  %1749 = vmatprep.subr.mxu0 0.0
  %1750 = vmatpush1.msra.mxu0 0.0
  %1751 = vmatprep.subr.mxu0 0.0
  %1752 = vmatpush1.msra.mxu0 0.0
  %1753 = vmatprep.subr.mxu0 0.0
  %1754 = vmatpush1.msra.mxu0 0.0
  %1755 = vmatprep.mubr.f32.mxu0 0.0
  %1756 = vmatmul.mubr.f32.gmra.mrb[0].mxu0 %v1686
  %v1757 = vpop.f32.mrb[0].mxu0
  %v1758 = vadd.f32 %v1683, %v1757
  %v1759 = vpop.f32.mrb[0].mxu0
  %1760 = vmatprep.mubr.f32.mxu0 0.0
  %1761 = vmatmul.mubr.f32.gmra.mrb[0].mxu0 %v1689
  %v1762 = vpop.f32.mrb[0].mxu0
  %v1763 = vadd.f32 %v1683, %v1762
  %v1764 = vpop.f32.mrb[0].mxu0
  %1765 = vdwg.mxu0
  %v1766 = vadd.f32 %v174, %v1758
  %v1767 = vadd.f32 %v176, %v1763
  %v1768 = vld [vmem:[%s11] sm:$0x1]
  %v1769 = vld [vmem:[%s12] sm:$0x1]
  %v1770 = vsel %vm179, %v1766, 0.0
  %1771 = vadd.xlane.f32.xlu0 %v1770
  %v1772 = vpop.xlane.xlu0 %1771
  %v1773 = vsel %vm179, %v1767, 0.0
  %1774 = vadd.xlane.f32.xlu0 %v1773
  %v1775 = vpop.xlane.xlu0 %1774
  %v1776 = vmul.f32 %v1772, %v186
  %v1777 = vmul.f32 %v1775, %v186
  %v1778 = vsub.f32 %v1766, %v1776
  %v1779 = vsub.f32 %v1767, %v1777
  %v1780 = vmul.f32 %v1778, %v1778
  %v1781 = vmul.f32 %v1779, %v1779
  %v1782 = vsel %vm179, %v1780, 0.0
  %1783 = vadd.xlane.f32.xlu0 %v1782
  %v1784 = vpop.xlane.xlu0 %1783
  %v1785 = vsel %vm179, %v1781, 0.0
  %1786 = vadd.xlane.f32.xlu0 %v1785
  %v1787 = vpop.xlane.xlu0 %1786
  %v1788 = vmul.f32 %v1784, %v186
  %v1789 = vmul.f32 %v1787, %v186
  %v1790 = vadd.f32 %v1788, 1e-06
  %v1791 = vadd.f32 %v1789, 1e-06
  %v1792 = vrsqrt.pop %v1790
  %v1793 = vrsqrt.pop %v1791
  %v1794 = vmul.f32 %v1778, %v1792
  %v1795 = vmul.f32 %v1779, %v1793
  %v1797 = vlaneseq
  %v1798 = vshrl.u32 %v1797, 7
  %v1799 = vsub.s32 0, %v1798
  %v1800 = vrot.slane %v1768, %v1799
  %v1802 = vmul.f32 %v1794, %v1800
  %v1803 = vmul.f32 %v1795, %v1800
  %v1805 = vlaneseq
  %v1806 = vshrl.u32 %v1805, 7
  %v1807 = vsub.s32 0, %v1806
  %v1808 = vrot.slane %v1769, %v1807
  %v1810 = vadd.f32 %v1802, %v1808
  %v1811 = vadd.f32 %v1803, %v1808
  %v1812 = vld [vmem:[%s13] sm:$0xff]
  %v1813 = vld [vmem:[%s13 + $0x8] sm:$0xff]
  %v1814 = vld [vmem:[%s13 + $0x10] sm:$0xff]
  %v1815 = vld [vmem:[%s13 + $0x18] sm:$0xff]
  %v1816 = vld [vmem:[%s14] sm:$0x1]
  %v1818 = vlaneseq
  %v1819 = vshrl.u32 %v1818, 7
  %v1820 = vsub.s32 0, %v1819
  %v1821 = vrot.slane %v1816, %v1820
  %v1824 = vsel %vm179, %v1810, 0
  %v1827 = vsel %vm179, %v1811, 0
  %1829 = vmatprep.subr.mxu0 0.0
  %1830 = vmatpush1.msra.mxu0 %v1812
  %1831 = vmatprep.subr.mxu0 0.0
  %1832 = vmatpush1.msra.mxu0 %v1813
  %1833 = vmatprep.subr.mxu0 0.0
  %1834 = vmatpush1.msra.mxu0 %v1814
  %1835 = vmatprep.subr.mxu0 0.0
  %1836 = vmatpush1.msra.mxu0 %v1815
  %1837 = vmatprep.subr.mxu0 0.0
  %1838 = vmatpush1.msra.mxu0 0.0
  %1839 = vmatprep.subr.mxu0 0.0
  %1840 = vmatpush1.msra.mxu0 0.0
  %1841 = vmatprep.subr.mxu0 0.0
  %1842 = vmatpush1.msra.mxu0 0.0
  %1843 = vmatprep.subr.mxu0 0.0
  %1844 = vmatpush1.msra.mxu0 0.0
  %1845 = vmatprep.subr.mxu0 0.0
  %1846 = vmatpush1.msra.mxu0 0.0
  %1847 = vmatprep.subr.mxu0 0.0
  %1848 = vmatpush1.msra.mxu0 0.0
  %1849 = vmatprep.subr.mxu0 0.0
  %1850 = vmatpush1.msra.mxu0 0.0
  %1851 = vmatprep.subr.mxu0 0.0
  %1852 = vmatpush1.msra.mxu0 0.0
  %1853 = vmatprep.subr.mxu0 0.0
  %1854 = vmatpush1.msra.mxu0 0.0
  %1855 = vmatprep.subr.mxu0 0.0
  %1856 = vmatpush1.msra.mxu0 0.0
  %1857 = vmatprep.subr.mxu0 0.0
  %1858 = vmatpush1.msra.mxu0 0.0
  %1859 = vmatprep.subr.mxu0 0.0
  %1860 = vmatpush1.msra.mxu0 0.0
  %1861 = vmatprep.subr.mxu0 0.0
  %1862 = vmatpush1.msra.mxu0 0.0
  %1863 = vmatprep.subr.mxu0 0.0
  %1864 = vmatpush1.msra.mxu0 0.0
  %1865 = vmatprep.subr.mxu0 0.0
  %1866 = vmatpush1.msra.mxu0 0.0
  %1867 = vmatprep.subr.mxu0 0.0
  %1868 = vmatpush1.msra.mxu0 0.0
  %1869 = vmatprep.subr.mxu0 0.0
  %1870 = vmatpush1.msra.mxu0 0.0
  %1871 = vmatprep.subr.mxu0 0.0
  %1872 = vmatpush1.msra.mxu0 0.0
  %1873 = vmatprep.subr.mxu0 0.0
  %1874 = vmatpush1.msra.mxu0 0.0
  %1875 = vmatprep.subr.mxu0 0.0
  %1876 = vmatpush1.msra.mxu0 0.0
  %1877 = vmatprep.subr.mxu0 0.0
  %1878 = vmatpush1.msra.mxu0 0.0
  %1879 = vmatprep.subr.mxu0 0.0
  %1880 = vmatpush1.msra.mxu0 0.0
  %1881 = vmatprep.subr.mxu0 0.0
  %1882 = vmatpush1.msra.mxu0 0.0
  %1883 = vmatprep.subr.mxu0 0.0
  %1884 = vmatpush1.msra.mxu0 0.0
  %1885 = vmatprep.subr.mxu0 0.0
  %1886 = vmatpush1.msra.mxu0 0.0
  %1887 = vmatprep.subr.mxu0 0.0
  %1888 = vmatpush1.msra.mxu0 0.0
  %1889 = vmatprep.subr.mxu0 0.0
  %1890 = vmatpush1.msra.mxu0 0.0
  %1891 = vmatprep.subr.mxu0 0.0
  %1892 = vmatpush1.msra.mxu0 0.0
  %1893 = vmatprep.mubr.f32.mxu0 0.0
  %1894 = vmatmul.mubr.f32.gmra.mrb[0].mxu0 %v1824
  %v1895 = vpop.f32.mrb[0].mxu0
  %v1896 = vadd.f32 %v1821, %v1895
  %v1897 = vpop.f32.mrb[0].mxu0
  %1898 = vmatprep.mubr.f32.mxu0 0.0
  %1899 = vmatmul.mubr.f32.gmra.mrb[0].mxu0 %v1827
  %v1900 = vpop.f32.mrb[0].mxu0
  %v1901 = vadd.f32 %v1821, %v1900
  %v1902 = vpop.f32.mrb[0].mxu0
  %1903 = vdwg.mxu0
  %v1904 = vmul.f32 %v1896, 0.5
  %v1905 = vmul.f32 %v1901, 0.5
  %v1906 = vmul.f32 %v1896, 0.044715
  %v1907 = vmul.f32 %v1901, 0.044715
  %v1908 = vmul.f32 %v1906, %v1896
  %v1909 = vmul.f32 %v1907, %v1901
  %v1910 = vmul.f32 %v1908, %v1896
  %v1911 = vmul.f32 %v1909, %v1901
  %v1912 = vadd.f32 %v1896, %v1910
  %v1913 = vadd.f32 %v1901, %v1911
  %v1914 = vmul.f32 %v1912, 0.7978846
  %v1915 = vmul.f32 %v1913, 0.7978846
  %v1916 = vtanh.pop %v1914
  %v1917 = vtanh.pop %v1915
  %v1918 = vadd.f32 %v1916, 1.0
  %v1919 = vadd.f32 %v1917, 1.0
  %v1920 = vmul.f32 %v1904, %v1918
  %v1921 = vmul.f32 %v1905, %v1919
  %v1922 = vld [vmem:[%s15] sm:$0xff]
  %v1923 = vld [vmem:[%s15 + $0x8] sm:$0xff]
  %v1924 = vld [vmem:[%s15 + $0x10] sm:$0xff]
  %v1925 = vld [vmem:[%s15 + $0x18] sm:$0xff]
  %v1926 = vld [vmem:[%s15 + $0x20] sm:$0xff]
  %v1927 = vld [vmem:[%s15 + $0x28] sm:$0xff]
  %v1928 = vld [vmem:[%s15 + $0x30] sm:$0xff]
  %v1929 = vld [vmem:[%s15 + $0x38] sm:$0xff]
  %v1930 = vld [vmem:[%s16] sm:$0x1]
  %v1932 = vlaneseq
  %v1933 = vshrl.u32 %v1932, 7
  %v1934 = vsub.s32 0, %v1933
  %v1935 = vrot.slane %v1930, %v1934
  %vm1937 = vcmask 523264
  %v1939 = vsel %vm1937, %v1920, 0
  %v1942 = vsel %vm1937, %v1921, 0
  %1944 = vmatprep.subr.mxu0 0.0
  %1945 = vmatpush1.msra.mxu0 %v1922
  %1946 = vmatprep.subr.mxu0 0.0
  %1947 = vmatpush1.msra.mxu0 %v1923
  %1948 = vmatprep.subr.mxu0 0.0
  %1949 = vmatpush1.msra.mxu0 %v1924
  %1950 = vmatprep.subr.mxu0 0.0
  %1951 = vmatpush1.msra.mxu0 %v1925
  %1952 = vmatprep.subr.mxu0 0.0
  %1953 = vmatpush1.msra.mxu0 %v1926
  %1954 = vmatprep.subr.mxu0 0.0
  %1955 = vmatpush1.msra.mxu0 %v1927
  %1956 = vmatprep.subr.mxu0 0.0
  %1957 = vmatpush1.msra.mxu0 %v1928
  %1958 = vmatprep.subr.mxu0 0.0
  %1959 = vmatpush1.msra.mxu0 %v1929
  %1960 = vmatprep.subr.mxu0 0.0
  %1961 = vmatpush1.msra.mxu0 0.0
  %1962 = vmatprep.subr.mxu0 0.0
  %1963 = vmatpush1.msra.mxu0 0.0
  %1964 = vmatprep.subr.mxu0 0.0
  %1965 = vmatpush1.msra.mxu0 0.0
  %1966 = vmatprep.subr.mxu0 0.0
  %1967 = vmatpush1.msra.mxu0 0.0
  %1968 = vmatprep.subr.mxu0 0.0
  %1969 = vmatpush1.msra.mxu0 0.0
  %1970 = vmatprep.subr.mxu0 0.0
  %1971 = vmatpush1.msra.mxu0 0.0
  %1972 = vmatprep.subr.mxu0 0.0
  %1973 = vmatpush1.msra.mxu0 0.0
  %1974 = vmatprep.subr.mxu0 0.0
  %1975 = vmatpush1.msra.mxu0 0.0
  %1976 = vmatprep.subr.mxu0 0.0
  %1977 = vmatpush1.msra.mxu0 0.0
  %1978 = vmatprep.subr.mxu0 0.0
  %1979 = vmatpush1.msra.mxu0 0.0
  %1980 = vmatprep.subr.mxu0 0.0
  %1981 = vmatpush1.msra.mxu0 0.0
  %1982 = vmatprep.subr.mxu0 0.0
  %1983 = vmatpush1.msra.mxu0 0.0
  %1984 = vmatprep.subr.mxu0 0.0
  %1985 = vmatpush1.msra.mxu0 0.0
  %1986 = vmatprep.subr.mxu0 0.0
  %1987 = vmatpush1.msra.mxu0 0.0
  %1988 = vmatprep.subr.mxu0 0.0
  %1989 = vmatpush1.msra.mxu0 0.0
  %1990 = vmatprep.subr.mxu0 0.0
  %1991 = vmatpush1.msra.mxu0 0.0
  %1992 = vmatprep.subr.mxu0 0.0
  %1993 = vmatpush1.msra.mxu0 0.0
  %1994 = vmatprep.subr.mxu0 0.0
  %1995 = vmatpush1.msra.mxu0 0.0
  %1996 = vmatprep.subr.mxu0 0.0
  %1997 = vmatpush1.msra.mxu0 0.0
  %1998 = vmatprep.subr.mxu0 0.0
  %1999 = vmatpush1.msra.mxu0 0.0
  %2000 = vmatprep.subr.mxu0 0.0
  %2001 = vmatpush1.msra.mxu0 0.0
  %2002 = vmatprep.subr.mxu0 0.0
  %2003 = vmatpush1.msra.mxu0 0.0
  %2004 = vmatprep.subr.mxu0 0.0
  %2005 = vmatpush1.msra.mxu0 0.0
  %2006 = vmatprep.subr.mxu0 0.0
  %2007 = vmatpush1.msra.mxu0 0.0
  %2008 = vmatprep.mubr.f32.mxu0 0.0
  %2009 = vmatmul.mubr.f32.gmra.mrb[0].mxu0 %v1939
  %v2010 = vpop.f32.mrb[0].mxu0
  %v2011 = vadd.f32 %v1935, %v2010
  %v2012 = vpop.f32.mrb[0].mxu0
  %2013 = vmatprep.mubr.f32.mxu0 0.0
  %2014 = vmatmul.mubr.f32.gmra.mrb[0].mxu0 %v1942
  %v2015 = vpop.f32.mrb[0].mxu0
  %v2016 = vadd.f32 %v1935, %v2015
  %v2017 = vpop.f32.mrb[0].mxu0
  %2018 = vdwg.mxu0
  %v2019 = vadd.f32 %v1766, %v2011
  %v2020 = vadd.f32 %v1767, %v2016
  %s2021 = scalar_lea.vmem %s5, 1
  %v2022 = vld [vmem:[%s2021] sm:$0x1]
  %s2023 = scalar_lea.vmem %s6, 1
  %v2024 = vld [vmem:[%s2023] sm:$0x1]
  %v2025 = vsel %vm179, %v2019, 0.0
  %2026 = vadd.xlane.f32.xlu0 %v2025
  %v2027 = vpop.xlane.xlu0 %2026
  %v2028 = vsel %vm179, %v2020, 0.0
  %2029 = vadd.xlane.f32.xlu0 %v2028
  %v2030 = vpop.xlane.xlu0 %2029
  %v2031 = vmul.f32 %v2027, %v186
  %v2032 = vmul.f32 %v2030, %v186
  %v2033 = vsub.f32 %v2019, %v2031
  %v2034 = vsub.f32 %v2020, %v2032
  %v2035 = vmul.f32 %v2033, %v2033
  %v2036 = vmul.f32 %v2034, %v2034
  %v2037 = vsel %vm179, %v2035, 0.0
  %2038 = vadd.xlane.f32.xlu0 %v2037
  %v2039 = vpop.xlane.xlu0 %2038
  %v2040 = vsel %vm179, %v2036, 0.0
  %2041 = vadd.xlane.f32.xlu0 %v2040
  %v2042 = vpop.xlane.xlu0 %2041
  %v2043 = vmul.f32 %v2039, %v186
  %v2044 = vmul.f32 %v2042, %v186
  %v2045 = vadd.f32 %v2043, 1e-06
  %v2046 = vadd.f32 %v2044, 1e-06
  %v2047 = vrsqrt.pop %v2045
  %v2048 = vrsqrt.pop %v2046
  %v2049 = vmul.f32 %v2033, %v2047
  %v2050 = vmul.f32 %v2034, %v2048
  %v2052 = vlaneseq
  %v2053 = vshrl.u32 %v2052, 7
  %v2054 = vsub.s32 0, %v2053
  %v2055 = vrot.slane %v2022, %v2054
  %v2057 = vmul.f32 %v2049, %v2055
  %v2058 = vmul.f32 %v2050, %v2055
  %v2060 = vlaneseq
  %v2061 = vshrl.u32 %v2060, 7
  %v2062 = vsub.s32 0, %v2061
  %v2063 = vrot.slane %v2024, %v2062
  %v2065 = vadd.f32 %v2057, %v2063
  %v2066 = vadd.f32 %v2058, %v2063
  %s2067 = scalar_lea.vmem %s7, 32
  %v2068 = vld [vmem:[%s2067] sm:$0xff]
  %v2069 = vld [vmem:[%s2067 + $0x8] sm:$0xff]
  %v2070 = vld [vmem:[%s2067 + $0x10] sm:$0xff]
  %v2071 = vld [vmem:[%s2067 + $0x18] sm:$0xff]
  %s2072 = scalar_lea.vmem %s8, 1
  %v2073 = vld [vmem:[%s2072] sm:$0x1]
  %v2075 = vlaneseq
  %v2076 = vshrl.u32 %v2075, 7
  %v2077 = vsub.s32 0, %v2076
  %v2078 = vrot.slane %v2073, %v2077
  %v2081 = vsel %vm179, %v2065, 0
  %v2084 = vsel %vm179, %v2066, 0
  %2086 = vmatprep.subr.mxu0 0.0
  %2087 = vmatpush1.msra.mxu0 %v2068
  %2088 = vmatprep.subr.mxu0 0.0
  %2089 = vmatpush1.msra.mxu0 %v2069
  %2090 = vmatprep.subr.mxu0 0.0
  %2091 = vmatpush1.msra.mxu0 %v2070
  %2092 = vmatprep.subr.mxu0 0.0
  %2093 = vmatpush1.msra.mxu0 %v2071
  %2094 = vmatprep.subr.mxu0 0.0
  %2095 = vmatpush1.msra.mxu0 0.0
  %2096 = vmatprep.subr.mxu0 0.0
  %2097 = vmatpush1.msra.mxu0 0.0
  %2098 = vmatprep.subr.mxu0 0.0
  %2099 = vmatpush1.msra.mxu0 0.0
  %2100 = vmatprep.subr.mxu0 0.0
  %2101 = vmatpush1.msra.mxu0 0.0
  %2102 = vmatprep.subr.mxu0 0.0
  %2103 = vmatpush1.msra.mxu0 0.0
  %2104 = vmatprep.subr.mxu0 0.0
  %2105 = vmatpush1.msra.mxu0 0.0
  %2106 = vmatprep.subr.mxu0 0.0
  %2107 = vmatpush1.msra.mxu0 0.0
  %2108 = vmatprep.subr.mxu0 0.0
  %2109 = vmatpush1.msra.mxu0 0.0
  %2110 = vmatprep.subr.mxu0 0.0
  %2111 = vmatpush1.msra.mxu0 0.0
  %2112 = vmatprep.subr.mxu0 0.0
  %2113 = vmatpush1.msra.mxu0 0.0
  %2114 = vmatprep.subr.mxu0 0.0
  %2115 = vmatpush1.msra.mxu0 0.0
  %2116 = vmatprep.subr.mxu0 0.0
  %2117 = vmatpush1.msra.mxu0 0.0
  %2118 = vmatprep.subr.mxu0 0.0
  %2119 = vmatpush1.msra.mxu0 0.0
  %2120 = vmatprep.subr.mxu0 0.0
  %2121 = vmatpush1.msra.mxu0 0.0
  %2122 = vmatprep.subr.mxu0 0.0
  %2123 = vmatpush1.msra.mxu0 0.0
  %2124 = vmatprep.subr.mxu0 0.0
  %2125 = vmatpush1.msra.mxu0 0.0
  %2126 = vmatprep.subr.mxu0 0.0
  %2127 = vmatpush1.msra.mxu0 0.0
  %2128 = vmatprep.subr.mxu0 0.0
  %2129 = vmatpush1.msra.mxu0 0.0
  %2130 = vmatprep.subr.mxu0 0.0
  %2131 = vmatpush1.msra.mxu0 0.0
  %2132 = vmatprep.subr.mxu0 0.0
  %2133 = vmatpush1.msra.mxu0 0.0
  %2134 = vmatprep.subr.mxu0 0.0
  %2135 = vmatpush1.msra.mxu0 0.0
  %2136 = vmatprep.subr.mxu0 0.0
  %2137 = vmatpush1.msra.mxu0 0.0
  %2138 = vmatprep.subr.mxu0 0.0
  %2139 = vmatpush1.msra.mxu0 0.0
  %2140 = vmatprep.subr.mxu0 0.0
  %2141 = vmatpush1.msra.mxu0 0.0
  %2142 = vmatprep.subr.mxu0 0.0
  %2143 = vmatpush1.msra.mxu0 0.0
  %2144 = vmatprep.subr.mxu0 0.0
  %2145 = vmatpush1.msra.mxu0 0.0
  %2146 = vmatprep.subr.mxu0 0.0
  %2147 = vmatpush1.msra.mxu0 0.0
  %2148 = vmatprep.subr.mxu0 0.0
  %2149 = vmatpush1.msra.mxu0 0.0
  %2150 = vmatprep.mubr.f32.mxu0 0.0
  %2151 = vmatmul.mubr.f32.gmra.mrb[0].mxu0 %v2081
  %v2152 = vpop.f32.mrb[0].mxu0
  %v2153 = vadd.f32 %v2078, %v2152
  %v2154 = vpop.f32.mrb[0].mxu0
  %2155 = vmatprep.mubr.f32.mxu0 0.0
  %2156 = vmatmul.mubr.f32.gmra.mrb[0].mxu0 %v2084
  %v2157 = vpop.f32.mrb[0].mxu0
  %v2158 = vadd.f32 %v2078, %v2157
  %v2159 = vpop.f32.mrb[0].mxu0
  %2160 = vdwg.mxu0
  %2162 = vrot.lane.b32.xlu0 %v2153, 120
  %v2163 = vpop.permute.xlu0 %2162
  %2164 = vrot.lane.b32.xlu0 %v2153, 112
  %v2165 = vpop.permute.xlu0 %2164
  %2166 = vrot.lane.b32.xlu0 %v2153, 104
  %v2167 = vpop.permute.xlu0 %2166
  %2169 = vrot.lane.b32.xlu0 %v2158, 120
  %v2170 = vpop.permute.xlu0 %2169
  %2171 = vrot.lane.b32.xlu0 %v2158, 112
  %v2172 = vpop.permute.xlu0 %2171
  %2173 = vrot.lane.b32.xlu0 %v2158, 104
  %v2174 = vpop.permute.xlu0 %2173
  %2175 = vrot.lane.b32.xlu0 %v2153, 96
  %v2176 = vpop.permute.xlu0 %2175
  %v2177 = vsel %vm331, %v2153, 0
  %v2179 = vsel %vm331, %v2176, 0
  %2181 = vmatprep.subr.mxu0 0.0
  %2182 = vmatpush1.xpose.msra.mxu0 %v2179
  %2183 = vmatprep.subr.mxu0 0.0
  %2184 = vmatpush1.xpose.msra.mxu0 0.0
  %2185 = vmatprep.subr.mxu0 0.0
  %2186 = vmatpush1.xpose.msra.mxu0 0.0
  %2187 = vmatprep.subr.mxu0 0.0
  %2188 = vmatpush1.xpose.msra.mxu0 0.0
  %2189 = vmatprep.subr.mxu0 0.0
  %2190 = vmatpush1.xpose.msra.mxu0 0.0
  %2191 = vmatprep.subr.mxu0 0.0
  %2192 = vmatpush1.xpose.msra.mxu0 0.0
  %2193 = vmatprep.subr.mxu0 0.0
  %2194 = vmatpush1.xpose.msra.mxu0 0.0
  %2195 = vmatprep.subr.mxu0 0.0
  %2196 = vmatpush1.xpose.msra.mxu0 0.0
  %2197 = vmatprep.subr.mxu0 0.0
  %2198 = vmatpush1.xpose.msra.mxu0 0.0
  %2199 = vmatprep.subr.mxu0 0.0
  %2200 = vmatpush1.xpose.msra.mxu0 0.0
  %2201 = vmatprep.subr.mxu0 0.0
  %2202 = vmatpush1.xpose.msra.mxu0 0.0
  %2203 = vmatprep.subr.mxu0 0.0
  %2204 = vmatpush1.xpose.msra.mxu0 0.0
  %2205 = vmatprep.subr.mxu0 0.0
  %2206 = vmatpush1.xpose.msra.mxu0 0.0
  %2207 = vmatprep.subr.mxu0 0.0
  %2208 = vmatpush1.xpose.msra.mxu0 0.0
  %2209 = vmatprep.subr.mxu0 0.0
  %2210 = vmatpush1.xpose.msra.mxu0 0.0
  %2211 = vmatprep.subr.mxu0 0.0
  %2212 = vmatpush1.xpose.msra.mxu0 0.0
  %2213 = vmatprep.subr.mxu0 0.0
  %2214 = vmatpush1.xpose.msra.mxu0 0.0
  %2215 = vmatprep.subr.mxu0 0.0
  %2216 = vmatpush1.xpose.msra.mxu0 0.0
  %2217 = vmatprep.subr.mxu0 0.0
  %2218 = vmatpush1.xpose.msra.mxu0 0.0
  %2219 = vmatprep.subr.mxu0 0.0
  %2220 = vmatpush1.xpose.msra.mxu0 0.0
  %2221 = vmatprep.subr.mxu0 0.0
  %2222 = vmatpush1.xpose.msra.mxu0 0.0
  %2223 = vmatprep.subr.mxu0 0.0
  %2224 = vmatpush1.xpose.msra.mxu0 0.0
  %2225 = vmatprep.subr.mxu0 0.0
  %2226 = vmatpush1.xpose.msra.mxu0 0.0
  %2227 = vmatprep.subr.mxu0 0.0
  %2228 = vmatpush1.xpose.msra.mxu0 0.0
  %2229 = vmatprep.subr.mxu0 0.0
  %2230 = vmatpush1.xpose.msra.mxu0 0.0
  %2231 = vmatprep.subr.mxu0 0.0
  %2232 = vmatpush1.xpose.msra.mxu0 0.0
  %2233 = vmatprep.subr.mxu0 0.0
  %2234 = vmatpush1.xpose.msra.mxu0 0.0
  %2235 = vmatprep.subr.mxu0 0.0
  %2236 = vmatpush1.xpose.msra.mxu0 0.0
  %2237 = vmatprep.subr.mxu0 0.0
  %2238 = vmatpush1.xpose.msra.mxu0 0.0
  %2239 = vmatprep.subr.mxu0 0.0
  %2240 = vmatpush1.xpose.msra.mxu0 0.0
  %2241 = vmatprep.subr.mxu0 0.0
  %2242 = vmatpush1.xpose.msra.mxu0 0.0
  %2243 = vmatprep.subr.mxu0 0.0
  %2244 = vmatpush1.xpose.msra.mxu0 0.0
  %2245 = vmatprep.mubr.f32.mxu0 0.0
  %2246 = vmatmul.mubr.f32.gmra.mrb[0].mxu0 %v2177
  %v2247 = vpop.f32.mrb[0].mxu0
  %v2248 = vadd.f32 0.0, %v2247
  %v2249 = vpop.f32.mrb[0].mxu0
  %2250 = vdwg.mxu0
  %2251 = vrot.lane.b32.xlu0 %v2163, 96
  %v2252 = vpop.permute.xlu0 %2251
  %v2253 = vsel %vm331, %v2163, 0
  %v2255 = vsel %vm331, %v2252, 0
  %2257 = vmatprep.subr.mxu0 0.0
  %2258 = vmatpush1.xpose.msra.mxu0 %v2255
  %2259 = vmatprep.subr.mxu0 0.0
  %2260 = vmatpush1.xpose.msra.mxu0 0.0
  %2261 = vmatprep.subr.mxu0 0.0
  %2262 = vmatpush1.xpose.msra.mxu0 0.0
  %2263 = vmatprep.subr.mxu0 0.0
  %2264 = vmatpush1.xpose.msra.mxu0 0.0
  %2265 = vmatprep.subr.mxu0 0.0
  %2266 = vmatpush1.xpose.msra.mxu0 0.0
  %2267 = vmatprep.subr.mxu0 0.0
  %2268 = vmatpush1.xpose.msra.mxu0 0.0
  %2269 = vmatprep.subr.mxu0 0.0
  %2270 = vmatpush1.xpose.msra.mxu0 0.0
  %2271 = vmatprep.subr.mxu0 0.0
  %2272 = vmatpush1.xpose.msra.mxu0 0.0
  %2273 = vmatprep.subr.mxu0 0.0
  %2274 = vmatpush1.xpose.msra.mxu0 0.0
  %2275 = vmatprep.subr.mxu0 0.0
  %2276 = vmatpush1.xpose.msra.mxu0 0.0
  %2277 = vmatprep.subr.mxu0 0.0
  %2278 = vmatpush1.xpose.msra.mxu0 0.0
  %2279 = vmatprep.subr.mxu0 0.0
  %2280 = vmatpush1.xpose.msra.mxu0 0.0
  %2281 = vmatprep.subr.mxu0 0.0
  %2282 = vmatpush1.xpose.msra.mxu0 0.0
  %2283 = vmatprep.subr.mxu0 0.0
  %2284 = vmatpush1.xpose.msra.mxu0 0.0
  %2285 = vmatprep.subr.mxu0 0.0
  %2286 = vmatpush1.xpose.msra.mxu0 0.0
  %2287 = vmatprep.subr.mxu0 0.0
  %2288 = vmatpush1.xpose.msra.mxu0 0.0
  %2289 = vmatprep.subr.mxu0 0.0
  %2290 = vmatpush1.xpose.msra.mxu0 0.0
  %2291 = vmatprep.subr.mxu0 0.0
  %2292 = vmatpush1.xpose.msra.mxu0 0.0
  %2293 = vmatprep.subr.mxu0 0.0
  %2294 = vmatpush1.xpose.msra.mxu0 0.0
  %2295 = vmatprep.subr.mxu0 0.0
  %2296 = vmatpush1.xpose.msra.mxu0 0.0
  %2297 = vmatprep.subr.mxu0 0.0
  %2298 = vmatpush1.xpose.msra.mxu0 0.0
  %2299 = vmatprep.subr.mxu0 0.0
  %2300 = vmatpush1.xpose.msra.mxu0 0.0
  %2301 = vmatprep.subr.mxu0 0.0
  %2302 = vmatpush1.xpose.msra.mxu0 0.0
  %2303 = vmatprep.subr.mxu0 0.0
  %2304 = vmatpush1.xpose.msra.mxu0 0.0
  %2305 = vmatprep.subr.mxu0 0.0
  %2306 = vmatpush1.xpose.msra.mxu0 0.0
  %2307 = vmatprep.subr.mxu0 0.0
  %2308 = vmatpush1.xpose.msra.mxu0 0.0
  %2309 = vmatprep.subr.mxu0 0.0
  %2310 = vmatpush1.xpose.msra.mxu0 0.0
  %2311 = vmatprep.subr.mxu0 0.0
  %2312 = vmatpush1.xpose.msra.mxu0 0.0
  %2313 = vmatprep.subr.mxu0 0.0
  %2314 = vmatpush1.xpose.msra.mxu0 0.0
  %2315 = vmatprep.subr.mxu0 0.0
  %2316 = vmatpush1.xpose.msra.mxu0 0.0
  %2317 = vmatprep.subr.mxu0 0.0
  %2318 = vmatpush1.xpose.msra.mxu0 0.0
  %2319 = vmatprep.subr.mxu0 0.0
  %2320 = vmatpush1.xpose.msra.mxu0 0.0
  %2321 = vmatprep.mubr.f32.mxu0 0.0
  %2322 = vmatmul.mubr.f32.gmra.mrb[0].mxu0 %v2253
  %v2323 = vpop.f32.mrb[0].mxu0
  %v2324 = vadd.f32 0.0, %v2323
  %v2325 = vpop.f32.mrb[0].mxu0
  %2326 = vdwg.mxu0
  %2327 = vrot.lane.b32.xlu0 %v2165, 96
  %v2328 = vpop.permute.xlu0 %2327
  %v2329 = vsel %vm331, %v2165, 0
  %v2331 = vsel %vm331, %v2328, 0
  %2333 = vmatprep.subr.mxu0 0.0
  %2334 = vmatpush1.xpose.msra.mxu0 %v2331
  %2335 = vmatprep.subr.mxu0 0.0
  %2336 = vmatpush1.xpose.msra.mxu0 0.0
  %2337 = vmatprep.subr.mxu0 0.0
  %2338 = vmatpush1.xpose.msra.mxu0 0.0
  %2339 = vmatprep.subr.mxu0 0.0
  %2340 = vmatpush1.xpose.msra.mxu0 0.0
  %2341 = vmatprep.subr.mxu0 0.0
  %2342 = vmatpush1.xpose.msra.mxu0 0.0
  %2343 = vmatprep.subr.mxu0 0.0
  %2344 = vmatpush1.xpose.msra.mxu0 0.0
  %2345 = vmatprep.subr.mxu0 0.0
  %2346 = vmatpush1.xpose.msra.mxu0 0.0
  %2347 = vmatprep.subr.mxu0 0.0
  %2348 = vmatpush1.xpose.msra.mxu0 0.0
  %2349 = vmatprep.subr.mxu0 0.0
  %2350 = vmatpush1.xpose.msra.mxu0 0.0
  %2351 = vmatprep.subr.mxu0 0.0
  %2352 = vmatpush1.xpose.msra.mxu0 0.0
  %2353 = vmatprep.subr.mxu0 0.0
  %2354 = vmatpush1.xpose.msra.mxu0 0.0
  %2355 = vmatprep.subr.mxu0 0.0
  %2356 = vmatpush1.xpose.msra.mxu0 0.0
  %2357 = vmatprep.subr.mxu0 0.0
  %2358 = vmatpush1.xpose.msra.mxu0 0.0
  %2359 = vmatprep.subr.mxu0 0.0
  %2360 = vmatpush1.xpose.msra.mxu0 0.0
  %2361 = vmatprep.subr.mxu0 0.0
  %2362 = vmatpush1.xpose.msra.mxu0 0.0
  %2363 = vmatprep.subr.mxu0 0.0
  %2364 = vmatpush1.xpose.msra.mxu0 0.0
  %2365 = vmatprep.subr.mxu0 0.0
  %2366 = vmatpush1.xpose.msra.mxu0 0.0
  %2367 = vmatprep.subr.mxu0 0.0
  %2368 = vmatpush1.xpose.msra.mxu0 0.0
  %2369 = vmatprep.subr.mxu0 0.0
  %2370 = vmatpush1.xpose.msra.mxu0 0.0
  %2371 = vmatprep.subr.mxu0 0.0
  %2372 = vmatpush1.xpose.msra.mxu0 0.0
  %2373 = vmatprep.subr.mxu0 0.0
  %2374 = vmatpush1.xpose.msra.mxu0 0.0
  %2375 = vmatprep.subr.mxu0 0.0
  %2376 = vmatpush1.xpose.msra.mxu0 0.0
  %2377 = vmatprep.subr.mxu0 0.0
  %2378 = vmatpush1.xpose.msra.mxu0 0.0
  %2379 = vmatprep.subr.mxu0 0.0
  %2380 = vmatpush1.xpose.msra.mxu0 0.0
  %2381 = vmatprep.subr.mxu0 0.0
  %2382 = vmatpush1.xpose.msra.mxu0 0.0
  %2383 = vmatprep.subr.mxu0 0.0
  %2384 = vmatpush1.xpose.msra.mxu0 0.0
  %2385 = vmatprep.subr.mxu0 0.0
  %2386 = vmatpush1.xpose.msra.mxu0 0.0
  %2387 = vmatprep.subr.mxu0 0.0
  %2388 = vmatpush1.xpose.msra.mxu0 0.0
  %2389 = vmatprep.subr.mxu0 0.0
  %2390 = vmatpush1.xpose.msra.mxu0 0.0
  %2391 = vmatprep.subr.mxu0 0.0
  %2392 = vmatpush1.xpose.msra.mxu0 0.0
  %2393 = vmatprep.subr.mxu0 0.0
  %2394 = vmatpush1.xpose.msra.mxu0 0.0
  %2395 = vmatprep.subr.mxu0 0.0
  %2396 = vmatpush1.xpose.msra.mxu0 0.0
  %2397 = vmatprep.mubr.f32.mxu0 0.0
  %2398 = vmatmul.mubr.f32.gmra.mrb[0].mxu0 %v2329
  %v2399 = vpop.f32.mrb[0].mxu0
  %v2400 = vadd.f32 0.0, %v2399
  %v2401 = vpop.f32.mrb[0].mxu0
  %2402 = vdwg.mxu0
  %2403 = vrot.lane.b32.xlu0 %v2167, 96
  %v2404 = vpop.permute.xlu0 %2403
  %v2405 = vsel %vm331, %v2167, 0
  %v2407 = vsel %vm331, %v2404, 0
  %2409 = vmatprep.subr.mxu0 0.0
  %2410 = vmatpush1.xpose.msra.mxu0 %v2407
  %2411 = vmatprep.subr.mxu0 0.0
  %2412 = vmatpush1.xpose.msra.mxu0 0.0
  %2413 = vmatprep.subr.mxu0 0.0
  %2414 = vmatpush1.xpose.msra.mxu0 0.0
  %2415 = vmatprep.subr.mxu0 0.0
  %2416 = vmatpush1.xpose.msra.mxu0 0.0
  %2417 = vmatprep.subr.mxu0 0.0
  %2418 = vmatpush1.xpose.msra.mxu0 0.0
  %2419 = vmatprep.subr.mxu0 0.0
  %2420 = vmatpush1.xpose.msra.mxu0 0.0
  %2421 = vmatprep.subr.mxu0 0.0
  %2422 = vmatpush1.xpose.msra.mxu0 0.0
  %2423 = vmatprep.subr.mxu0 0.0
  %2424 = vmatpush1.xpose.msra.mxu0 0.0
  %2425 = vmatprep.subr.mxu0 0.0
  %2426 = vmatpush1.xpose.msra.mxu0 0.0
  %2427 = vmatprep.subr.mxu0 0.0
  %2428 = vmatpush1.xpose.msra.mxu0 0.0
  %2429 = vmatprep.subr.mxu0 0.0
  %2430 = vmatpush1.xpose.msra.mxu0 0.0
  %2431 = vmatprep.subr.mxu0 0.0
  %2432 = vmatpush1.xpose.msra.mxu0 0.0
  %2433 = vmatprep.subr.mxu0 0.0
  %2434 = vmatpush1.xpose.msra.mxu0 0.0
  %2435 = vmatprep.subr.mxu0 0.0
  %2436 = vmatpush1.xpose.msra.mxu0 0.0
  %2437 = vmatprep.subr.mxu0 0.0
  %2438 = vmatpush1.xpose.msra.mxu0 0.0
  %2439 = vmatprep.subr.mxu0 0.0
  %2440 = vmatpush1.xpose.msra.mxu0 0.0
  %2441 = vmatprep.subr.mxu0 0.0
  %2442 = vmatpush1.xpose.msra.mxu0 0.0
  %2443 = vmatprep.subr.mxu0 0.0
  %2444 = vmatpush1.xpose.msra.mxu0 0.0
  %2445 = vmatprep.subr.mxu0 0.0
  %2446 = vmatpush1.xpose.msra.mxu0 0.0
  %2447 = vmatprep.subr.mxu0 0.0
  %2448 = vmatpush1.xpose.msra.mxu0 0.0
  %2449 = vmatprep.subr.mxu0 0.0
  %2450 = vmatpush1.xpose.msra.mxu0 0.0
  %2451 = vmatprep.subr.mxu0 0.0
  %2452 = vmatpush1.xpose.msra.mxu0 0.0
  %2453 = vmatprep.subr.mxu0 0.0
  %2454 = vmatpush1.xpose.msra.mxu0 0.0
  %2455 = vmatprep.subr.mxu0 0.0
  %2456 = vmatpush1.xpose.msra.mxu0 0.0
  %2457 = vmatprep.subr.mxu0 0.0
  %2458 = vmatpush1.xpose.msra.mxu0 0.0
  %2459 = vmatprep.subr.mxu0 0.0
  %2460 = vmatpush1.xpose.msra.mxu0 0.0
  %2461 = vmatprep.subr.mxu0 0.0
  %2462 = vmatpush1.xpose.msra.mxu0 0.0
  %2463 = vmatprep.subr.mxu0 0.0
  %2464 = vmatpush1.xpose.msra.mxu0 0.0
  %2465 = vmatprep.subr.mxu0 0.0
  %2466 = vmatpush1.xpose.msra.mxu0 0.0
  %2467 = vmatprep.subr.mxu0 0.0
  %2468 = vmatpush1.xpose.msra.mxu0 0.0
  %2469 = vmatprep.subr.mxu0 0.0
  %2470 = vmatpush1.xpose.msra.mxu0 0.0
  %2471 = vmatprep.subr.mxu0 0.0
  %2472 = vmatpush1.xpose.msra.mxu0 0.0
  %2473 = vmatprep.mubr.f32.mxu0 0.0
  %2474 = vmatmul.mubr.f32.gmra.mrb[0].mxu0 %v2405
  %v2475 = vpop.f32.mrb[0].mxu0
  %v2476 = vadd.f32 0.0, %v2475
  %v2477 = vpop.f32.mrb[0].mxu0
  %2478 = vdwg.mxu0
  %2479 = vrot.lane.b32.xlu0 %v2158, 96
  %v2480 = vpop.permute.xlu0 %2479
  %v2481 = vsel %vm331, %v2158, 0
  %v2483 = vsel %vm331, %v2480, 0
  %2485 = vmatprep.subr.mxu0 0.0
  %2486 = vmatpush1.xpose.msra.mxu0 %v2483
  %2487 = vmatprep.subr.mxu0 0.0
  %2488 = vmatpush1.xpose.msra.mxu0 0.0
  %2489 = vmatprep.subr.mxu0 0.0
  %2490 = vmatpush1.xpose.msra.mxu0 0.0
  %2491 = vmatprep.subr.mxu0 0.0
  %2492 = vmatpush1.xpose.msra.mxu0 0.0
  %2493 = vmatprep.subr.mxu0 0.0
  %2494 = vmatpush1.xpose.msra.mxu0 0.0
  %2495 = vmatprep.subr.mxu0 0.0
  %2496 = vmatpush1.xpose.msra.mxu0 0.0
  %2497 = vmatprep.subr.mxu0 0.0
  %2498 = vmatpush1.xpose.msra.mxu0 0.0
  %2499 = vmatprep.subr.mxu0 0.0
  %2500 = vmatpush1.xpose.msra.mxu0 0.0
  %2501 = vmatprep.subr.mxu0 0.0
  %2502 = vmatpush1.xpose.msra.mxu0 0.0
  %2503 = vmatprep.subr.mxu0 0.0
  %2504 = vmatpush1.xpose.msra.mxu0 0.0
  %2505 = vmatprep.subr.mxu0 0.0
  %2506 = vmatpush1.xpose.msra.mxu0 0.0
  %2507 = vmatprep.subr.mxu0 0.0
  %2508 = vmatpush1.xpose.msra.mxu0 0.0
  %2509 = vmatprep.subr.mxu0 0.0
  %2510 = vmatpush1.xpose.msra.mxu0 0.0
  %2511 = vmatprep.subr.mxu0 0.0
  %2512 = vmatpush1.xpose.msra.mxu0 0.0
  %2513 = vmatprep.subr.mxu0 0.0
  %2514 = vmatpush1.xpose.msra.mxu0 0.0
  %2515 = vmatprep.subr.mxu0 0.0
  %2516 = vmatpush1.xpose.msra.mxu0 0.0
  %2517 = vmatprep.subr.mxu0 0.0
  %2518 = vmatpush1.xpose.msra.mxu0 0.0
  %2519 = vmatprep.subr.mxu0 0.0
  %2520 = vmatpush1.xpose.msra.mxu0 0.0
  %2521 = vmatprep.subr.mxu0 0.0
  %2522 = vmatpush1.xpose.msra.mxu0 0.0
  %2523 = vmatprep.subr.mxu0 0.0
  %2524 = vmatpush1.xpose.msra.mxu0 0.0
  %2525 = vmatprep.subr.mxu0 0.0
  %2526 = vmatpush1.xpose.msra.mxu0 0.0
  %2527 = vmatprep.subr.mxu0 0.0
  %2528 = vmatpush1.xpose.msra.mxu0 0.0
  %2529 = vmatprep.subr.mxu0 0.0
  %2530 = vmatpush1.xpose.msra.mxu0 0.0
  %2531 = vmatprep.subr.mxu0 0.0
  %2532 = vmatpush1.xpose.msra.mxu0 0.0
  %2533 = vmatprep.subr.mxu0 0.0
  %2534 = vmatpush1.xpose.msra.mxu0 0.0
  %2535 = vmatprep.subr.mxu0 0.0
  %2536 = vmatpush1.xpose.msra.mxu0 0.0
  %2537 = vmatprep.subr.mxu0 0.0
  %2538 = vmatpush1.xpose.msra.mxu0 0.0
  %2539 = vmatprep.subr.mxu0 0.0
  %2540 = vmatpush1.xpose.msra.mxu0 0.0
  %2541 = vmatprep.subr.mxu0 0.0
  %2542 = vmatpush1.xpose.msra.mxu0 0.0
  %2543 = vmatprep.subr.mxu0 0.0
  %2544 = vmatpush1.xpose.msra.mxu0 0.0
  %2545 = vmatprep.subr.mxu0 0.0
  %2546 = vmatpush1.xpose.msra.mxu0 0.0
  %2547 = vmatprep.subr.mxu0 0.0
  %2548 = vmatpush1.xpose.msra.mxu0 0.0
  %2549 = vmatprep.mubr.f32.mxu0 0.0
  %2550 = vmatmul.mubr.f32.gmra.mrb[0].mxu0 %v2481
  %v2551 = vpop.f32.mrb[0].mxu0
  %v2552 = vadd.f32 0.0, %v2551
  %v2553 = vpop.f32.mrb[0].mxu0
  %2554 = vdwg.mxu0
  %2555 = vrot.lane.b32.xlu0 %v2170, 96
  %v2556 = vpop.permute.xlu0 %2555
  %v2557 = vsel %vm331, %v2170, 0
  %v2559 = vsel %vm331, %v2556, 0
  %2561 = vmatprep.subr.mxu0 0.0
  %2562 = vmatpush1.xpose.msra.mxu0 %v2559
  %2563 = vmatprep.subr.mxu0 0.0
  %2564 = vmatpush1.xpose.msra.mxu0 0.0
  %2565 = vmatprep.subr.mxu0 0.0
  %2566 = vmatpush1.xpose.msra.mxu0 0.0
  %2567 = vmatprep.subr.mxu0 0.0
  %2568 = vmatpush1.xpose.msra.mxu0 0.0
  %2569 = vmatprep.subr.mxu0 0.0
  %2570 = vmatpush1.xpose.msra.mxu0 0.0
  %2571 = vmatprep.subr.mxu0 0.0
  %2572 = vmatpush1.xpose.msra.mxu0 0.0
  %2573 = vmatprep.subr.mxu0 0.0
  %2574 = vmatpush1.xpose.msra.mxu0 0.0
  %2575 = vmatprep.subr.mxu0 0.0
  %2576 = vmatpush1.xpose.msra.mxu0 0.0
  %2577 = vmatprep.subr.mxu0 0.0
  %2578 = vmatpush1.xpose.msra.mxu0 0.0
  %2579 = vmatprep.subr.mxu0 0.0
  %2580 = vmatpush1.xpose.msra.mxu0 0.0
  %2581 = vmatprep.subr.mxu0 0.0
  %2582 = vmatpush1.xpose.msra.mxu0 0.0
  %2583 = vmatprep.subr.mxu0 0.0
  %2584 = vmatpush1.xpose.msra.mxu0 0.0
  %2585 = vmatprep.subr.mxu0 0.0
  %2586 = vmatpush1.xpose.msra.mxu0 0.0
  %2587 = vmatprep.subr.mxu0 0.0
  %2588 = vmatpush1.xpose.msra.mxu0 0.0
  %2589 = vmatprep.subr.mxu0 0.0
  %2590 = vmatpush1.xpose.msra.mxu0 0.0
  %2591 = vmatprep.subr.mxu0 0.0
  %2592 = vmatpush1.xpose.msra.mxu0 0.0
  %2593 = vmatprep.subr.mxu0 0.0
  %2594 = vmatpush1.xpose.msra.mxu0 0.0
  %2595 = vmatprep.subr.mxu0 0.0
  %2596 = vmatpush1.xpose.msra.mxu0 0.0
  %2597 = vmatprep.subr.mxu0 0.0
  %2598 = vmatpush1.xpose.msra.mxu0 0.0
  %2599 = vmatprep.subr.mxu0 0.0
  %2600 = vmatpush1.xpose.msra.mxu0 0.0
  %2601 = vmatprep.subr.mxu0 0.0
  %2602 = vmatpush1.xpose.msra.mxu0 0.0
  %2603 = vmatprep.subr.mxu0 0.0
  %2604 = vmatpush1.xpose.msra.mxu0 0.0
  %2605 = vmatprep.subr.mxu0 0.0
  %2606 = vmatpush1.xpose.msra.mxu0 0.0
  %2607 = vmatprep.subr.mxu0 0.0
  %2608 = vmatpush1.xpose.msra.mxu0 0.0
  %2609 = vmatprep.subr.mxu0 0.0
  %2610 = vmatpush1.xpose.msra.mxu0 0.0
  %2611 = vmatprep.subr.mxu0 0.0
  %2612 = vmatpush1.xpose.msra.mxu0 0.0
  %2613 = vmatprep.subr.mxu0 0.0
  %2614 = vmatpush1.xpose.msra.mxu0 0.0
  %2615 = vmatprep.subr.mxu0 0.0
  %2616 = vmatpush1.xpose.msra.mxu0 0.0
  %2617 = vmatprep.subr.mxu0 0.0
  %2618 = vmatpush1.xpose.msra.mxu0 0.0
  %2619 = vmatprep.subr.mxu0 0.0
  %2620 = vmatpush1.xpose.msra.mxu0 0.0
  %2621 = vmatprep.subr.mxu0 0.0
  %2622 = vmatpush1.xpose.msra.mxu0 0.0
  %2623 = vmatprep.subr.mxu0 0.0
  %2624 = vmatpush1.xpose.msra.mxu0 0.0
  %2625 = vmatprep.mubr.f32.mxu0 0.0
  %2626 = vmatmul.mubr.f32.gmra.mrb[0].mxu0 %v2557
  %v2627 = vpop.f32.mrb[0].mxu0
  %v2628 = vadd.f32 0.0, %v2627
  %v2629 = vpop.f32.mrb[0].mxu0
  %2630 = vdwg.mxu0
  %2631 = vrot.lane.b32.xlu0 %v2172, 96
  %v2632 = vpop.permute.xlu0 %2631
  %v2633 = vsel %vm331, %v2172, 0
  %v2635 = vsel %vm331, %v2632, 0
  %2637 = vmatprep.subr.mxu0 0.0
  %2638 = vmatpush1.xpose.msra.mxu0 %v2635
  %2639 = vmatprep.subr.mxu0 0.0
  %2640 = vmatpush1.xpose.msra.mxu0 0.0
  %2641 = vmatprep.subr.mxu0 0.0
  %2642 = vmatpush1.xpose.msra.mxu0 0.0
  %2643 = vmatprep.subr.mxu0 0.0
  %2644 = vmatpush1.xpose.msra.mxu0 0.0
  %2645 = vmatprep.subr.mxu0 0.0
  %2646 = vmatpush1.xpose.msra.mxu0 0.0
  %2647 = vmatprep.subr.mxu0 0.0
  %2648 = vmatpush1.xpose.msra.mxu0 0.0
  %2649 = vmatprep.subr.mxu0 0.0
  %2650 = vmatpush1.xpose.msra.mxu0 0.0
  %2651 = vmatprep.subr.mxu0 0.0
  %2652 = vmatpush1.xpose.msra.mxu0 0.0
  %2653 = vmatprep.subr.mxu0 0.0
  %2654 = vmatpush1.xpose.msra.mxu0 0.0
  %2655 = vmatprep.subr.mxu0 0.0
  %2656 = vmatpush1.xpose.msra.mxu0 0.0
  %2657 = vmatprep.subr.mxu0 0.0
  %2658 = vmatpush1.xpose.msra.mxu0 0.0
  %2659 = vmatprep.subr.mxu0 0.0
  %2660 = vmatpush1.xpose.msra.mxu0 0.0
  %2661 = vmatprep.subr.mxu0 0.0
  %2662 = vmatpush1.xpose.msra.mxu0 0.0
  %2663 = vmatprep.subr.mxu0 0.0
  %2664 = vmatpush1.xpose.msra.mxu0 0.0
  %2665 = vmatprep.subr.mxu0 0.0
  %2666 = vmatpush1.xpose.msra.mxu0 0.0
  %2667 = vmatprep.subr.mxu0 0.0
  %2668 = vmatpush1.xpose.msra.mxu0 0.0
  %2669 = vmatprep.subr.mxu0 0.0
  %2670 = vmatpush1.xpose.msra.mxu0 0.0
  %2671 = vmatprep.subr.mxu0 0.0
  %2672 = vmatpush1.xpose.msra.mxu0 0.0
  %2673 = vmatprep.subr.mxu0 0.0
  %2674 = vmatpush1.xpose.msra.mxu0 0.0
  %2675 = vmatprep.subr.mxu0 0.0
  %2676 = vmatpush1.xpose.msra.mxu0 0.0
  %2677 = vmatprep.subr.mxu0 0.0
  %2678 = vmatpush1.xpose.msra.mxu0 0.0
  %2679 = vmatprep.subr.mxu0 0.0
  %2680 = vmatpush1.xpose.msra.mxu0 0.0
  %2681 = vmatprep.subr.mxu0 0.0
  %2682 = vmatpush1.xpose.msra.mxu0 0.0
  %2683 = vmatprep.subr.mxu0 0.0
  %2684 = vmatpush1.xpose.msra.mxu0 0.0
  %2685 = vmatprep.subr.mxu0 0.0
  %2686 = vmatpush1.xpose.msra.mxu0 0.0
  %2687 = vmatprep.subr.mxu0 0.0
  %2688 = vmatpush1.xpose.msra.mxu0 0.0
  %2689 = vmatprep.subr.mxu0 0.0
  %2690 = vmatpush1.xpose.msra.mxu0 0.0
  %2691 = vmatprep.subr.mxu0 0.0
  %2692 = vmatpush1.xpose.msra.mxu0 0.0
  %2693 = vmatprep.subr.mxu0 0.0
  %2694 = vmatpush1.xpose.msra.mxu0 0.0
  %2695 = vmatprep.subr.mxu0 0.0
  %2696 = vmatpush1.xpose.msra.mxu0 0.0
  %2697 = vmatprep.subr.mxu0 0.0
  %2698 = vmatpush1.xpose.msra.mxu0 0.0
  %2699 = vmatprep.subr.mxu0 0.0
  %2700 = vmatpush1.xpose.msra.mxu0 0.0
  %2701 = vmatprep.mubr.f32.mxu0 0.0
  %2702 = vmatmul.mubr.f32.gmra.mrb[0].mxu0 %v2633
  %v2703 = vpop.f32.mrb[0].mxu0
  %v2704 = vadd.f32 0.0, %v2703
  %v2705 = vpop.f32.mrb[0].mxu0
  %2706 = vdwg.mxu0
  %2707 = vrot.lane.b32.xlu0 %v2174, 96
  %v2708 = vpop.permute.xlu0 %2707
  %v2709 = vsel %vm331, %v2174, 0
  %v2711 = vsel %vm331, %v2708, 0
  %2713 = vmatprep.subr.mxu0 0.0
  %2714 = vmatpush1.xpose.msra.mxu0 %v2711
  %2715 = vmatprep.subr.mxu0 0.0
  %2716 = vmatpush1.xpose.msra.mxu0 0.0
  %2717 = vmatprep.subr.mxu0 0.0
  %2718 = vmatpush1.xpose.msra.mxu0 0.0
  %2719 = vmatprep.subr.mxu0 0.0
  %2720 = vmatpush1.xpose.msra.mxu0 0.0
  %2721 = vmatprep.subr.mxu0 0.0
  %2722 = vmatpush1.xpose.msra.mxu0 0.0
  %2723 = vmatprep.subr.mxu0 0.0
  %2724 = vmatpush1.xpose.msra.mxu0 0.0
  %2725 = vmatprep.subr.mxu0 0.0
  %2726 = vmatpush1.xpose.msra.mxu0 0.0
  %2727 = vmatprep.subr.mxu0 0.0
  %2728 = vmatpush1.xpose.msra.mxu0 0.0
  %2729 = vmatprep.subr.mxu0 0.0
  %2730 = vmatpush1.xpose.msra.mxu0 0.0
  %2731 = vmatprep.subr.mxu0 0.0
  %2732 = vmatpush1.xpose.msra.mxu0 0.0
  %2733 = vmatprep.subr.mxu0 0.0
  %2734 = vmatpush1.xpose.msra.mxu0 0.0
  %2735 = vmatprep.subr.mxu0 0.0
  %2736 = vmatpush1.xpose.msra.mxu0 0.0
  %2737 = vmatprep.subr.mxu0 0.0
  %2738 = vmatpush1.xpose.msra.mxu0 0.0
  %2739 = vmatprep.subr.mxu0 0.0
  %2740 = vmatpush1.xpose.msra.mxu0 0.0
  %2741 = vmatprep.subr.mxu0 0.0
  %2742 = vmatpush1.xpose.msra.mxu0 0.0
  %2743 = vmatprep.subr.mxu0 0.0
  %2744 = vmatpush1.xpose.msra.mxu0 0.0
  %2745 = vmatprep.subr.mxu0 0.0
  %2746 = vmatpush1.xpose.msra.mxu0 0.0
  %2747 = vmatprep.subr.mxu0 0.0
  %2748 = vmatpush1.xpose.msra.mxu0 0.0
  %2749 = vmatprep.subr.mxu0 0.0
  %2750 = vmatpush1.xpose.msra.mxu0 0.0
  %2751 = vmatprep.subr.mxu0 0.0
  %2752 = vmatpush1.xpose.msra.mxu0 0.0
  %2753 = vmatprep.subr.mxu0 0.0
  %2754 = vmatpush1.xpose.msra.mxu0 0.0
  %2755 = vmatprep.subr.mxu0 0.0
  %2756 = vmatpush1.xpose.msra.mxu0 0.0
  %2757 = vmatprep.subr.mxu0 0.0
  %2758 = vmatpush1.xpose.msra.mxu0 0.0
  %2759 = vmatprep.subr.mxu0 0.0
  %2760 = vmatpush1.xpose.msra.mxu0 0.0
  %2761 = vmatprep.subr.mxu0 0.0
  %2762 = vmatpush1.xpose.msra.mxu0 0.0
  %2763 = vmatprep.subr.mxu0 0.0
  %2764 = vmatpush1.xpose.msra.mxu0 0.0
  %2765 = vmatprep.subr.mxu0 0.0
  %2766 = vmatpush1.xpose.msra.mxu0 0.0
  %2767 = vmatprep.subr.mxu0 0.0
  %2768 = vmatpush1.xpose.msra.mxu0 0.0
  %2769 = vmatprep.subr.mxu0 0.0
  %2770 = vmatpush1.xpose.msra.mxu0 0.0
  %2771 = vmatprep.subr.mxu0 0.0
  %2772 = vmatpush1.xpose.msra.mxu0 0.0
  %2773 = vmatprep.subr.mxu0 0.0
  %2774 = vmatpush1.xpose.msra.mxu0 0.0
  %2775 = vmatprep.subr.mxu0 0.0
  %2776 = vmatpush1.xpose.msra.mxu0 0.0
  %2777 = vmatprep.mubr.f32.mxu0 0.0
  %2778 = vmatmul.mubr.f32.gmra.mrb[0].mxu0 %v2709
  %v2779 = vpop.f32.mrb[0].mxu0
  %v2780 = vadd.f32 0.0, %v2779
  %v2781 = vpop.f32.mrb[0].mxu0
  %2782 = vdwg.mxu0
  %v2783 = vmul.f32 %v2248, 0.35355338
  %v2784 = vmul.f32 %v2324, 0.35355338
  %v2785 = vmul.f32 %v2400, 0.35355338
  %v2786 = vmul.f32 %v2476, 0.35355338
  %v2787 = vmul.f32 %v2552, 0.35355338
  %v2788 = vmul.f32 %v2628, 0.35355338
  %v2789 = vmul.f32 %v2704, 0.35355338
  %v2790 = vmul.f32 %v2780, 0.35355338
  %v2791 = vsel %vm331, %v2783, -inf
  %2792 = vmax.xlane.f32.xlu0 %v2791
  %v2793 = vpop.xlane.xlu0 %2792
  %v2794 = vsel %vm331, %v2784, -inf
  %2795 = vmax.xlane.f32.xlu0 %v2794
  %v2796 = vpop.xlane.xlu0 %2795
  %v2797 = vsel %vm331, %v2785, -inf
  %2798 = vmax.xlane.f32.xlu0 %v2797
  %v2799 = vpop.xlane.xlu0 %2798
  %v2800 = vsel %vm331, %v2786, -inf
  %2801 = vmax.xlane.f32.xlu0 %v2800
  %v2802 = vpop.xlane.xlu0 %2801
  %v2803 = vsel %vm331, %v2787, -inf
  %2804 = vmax.xlane.f32.xlu0 %v2803
  %v2805 = vpop.xlane.xlu0 %2804
  %v2806 = vsel %vm331, %v2788, -inf
  %2807 = vmax.xlane.f32.xlu0 %v2806
  %v2808 = vpop.xlane.xlu0 %2807
  %v2809 = vsel %vm331, %v2789, -inf
  %2810 = vmax.xlane.f32.xlu0 %v2809
  %v2811 = vpop.xlane.xlu0 %2810
  %v2812 = vsel %vm331, %v2790, -inf
  %2813 = vmax.xlane.f32.xlu0 %v2812
  %v2814 = vpop.xlane.xlu0 %2813
  %v2815 = vsub.f32 %v2783, %v2793
  %v2816 = vsub.f32 %v2784, %v2796
  %v2817 = vsub.f32 %v2785, %v2799
  %v2818 = vsub.f32 %v2786, %v2802
  %v2819 = vsub.f32 %v2787, %v2805
  %v2820 = vsub.f32 %v2788, %v2808
  %v2821 = vsub.f32 %v2789, %v2811
  %v2822 = vsub.f32 %v2790, %v2814
  %v2823 = vmul.f32 %v2815, 1.442695
  %v2824 = vpow.pop %v2823
  %v2825 = vmul.f32 %v2816, 1.442695
  %v2826 = vpow.pop %v2825
  %v2827 = vmul.f32 %v2817, 1.442695
  %v2828 = vpow.pop %v2827
  %v2829 = vmul.f32 %v2818, 1.442695
  %v2830 = vpow.pop %v2829
  %v2831 = vmul.f32 %v2819, 1.442695
  %v2832 = vpow.pop %v2831
  %v2833 = vmul.f32 %v2820, 1.442695
  %v2834 = vpow.pop %v2833
  %v2835 = vmul.f32 %v2821, 1.442695
  %v2836 = vpow.pop %v2835
  %v2837 = vmul.f32 %v2822, 1.442695
  %v2838 = vpow.pop %v2837
  %v2839 = vsel %vm331, %v2824, 0.0
  %2840 = vadd.xlane.f32.xlu0 %v2839
  %v2841 = vpop.xlane.xlu0 %2840
  %v2842 = vsel %vm331, %v2826, 0.0
  %2843 = vadd.xlane.f32.xlu0 %v2842
  %v2844 = vpop.xlane.xlu0 %2843
  %v2845 = vsel %vm331, %v2828, 0.0
  %2846 = vadd.xlane.f32.xlu0 %v2845
  %v2847 = vpop.xlane.xlu0 %2846
  %v2848 = vsel %vm331, %v2830, 0.0
  %2849 = vadd.xlane.f32.xlu0 %v2848
  %v2850 = vpop.xlane.xlu0 %2849
  %v2851 = vsel %vm331, %v2832, 0.0
  %2852 = vadd.xlane.f32.xlu0 %v2851
  %v2853 = vpop.xlane.xlu0 %2852
  %v2854 = vsel %vm331, %v2834, 0.0
  %2855 = vadd.xlane.f32.xlu0 %v2854
  %v2856 = vpop.xlane.xlu0 %2855
  %v2857 = vsel %vm331, %v2836, 0.0
  %2858 = vadd.xlane.f32.xlu0 %v2857
  %v2859 = vpop.xlane.xlu0 %2858
  %v2860 = vsel %vm331, %v2838, 0.0
  %2861 = vadd.xlane.f32.xlu0 %v2860
  %v2862 = vpop.xlane.xlu0 %2861
  %v2863 = vrcp.pop %v2841
  %v2864 = vrcp.pop %v2844
  %v2865 = vrcp.pop %v2847
  %v2866 = vrcp.pop %v2850
  %v2867 = vrcp.pop %v2853
  %v2868 = vrcp.pop %v2856
  %v2869 = vrcp.pop %v2859
  %v2870 = vrcp.pop %v2862
  %v2871 = vmul.f32 %v2824, %v2863
  %v2872 = vmul.f32 %v2826, %v2864
  %v2873 = vmul.f32 %v2828, %v2865
  %v2874 = vmul.f32 %v2830, %v2866
  %v2875 = vmul.f32 %v2832, %v2867
  %v2876 = vmul.f32 %v2834, %v2868
  %v2877 = vmul.f32 %v2836, %v2869
  %v2878 = vmul.f32 %v2838, %v2870
  %2879 = vrot.lane.b32.xlu0 %v2153, 64
  %v2880 = vpop.permute.xlu0 %2879
  %v2883 = vsel %vm331, %v2871, 0
  %2885 = vmatprep.subr.mxu0 0.0
  %2886 = vmatpush1.msra.mxu0 %v2880
  %2887 = vmatprep.subr.mxu0 0.0
  %2888 = vmatpush1.msra.mxu0 0.0
  %2889 = vmatprep.subr.mxu0 0.0
  %2890 = vmatpush1.msra.mxu0 0.0
  %2891 = vmatprep.subr.mxu0 0.0
  %2892 = vmatpush1.msra.mxu0 0.0
  %2893 = vmatprep.subr.mxu0 0.0
  %2894 = vmatpush1.msra.mxu0 0.0
  %2895 = vmatprep.subr.mxu0 0.0
  %2896 = vmatpush1.msra.mxu0 0.0
  %2897 = vmatprep.subr.mxu0 0.0
  %2898 = vmatpush1.msra.mxu0 0.0
  %2899 = vmatprep.subr.mxu0 0.0
  %2900 = vmatpush1.msra.mxu0 0.0
  %2901 = vmatprep.subr.mxu0 0.0
  %2902 = vmatpush1.msra.mxu0 0.0
  %2903 = vmatprep.subr.mxu0 0.0
  %2904 = vmatpush1.msra.mxu0 0.0
  %2905 = vmatprep.subr.mxu0 0.0
  %2906 = vmatpush1.msra.mxu0 0.0
  %2907 = vmatprep.subr.mxu0 0.0
  %2908 = vmatpush1.msra.mxu0 0.0
  %2909 = vmatprep.subr.mxu0 0.0
  %2910 = vmatpush1.msra.mxu0 0.0
  %2911 = vmatprep.subr.mxu0 0.0
  %2912 = vmatpush1.msra.mxu0 0.0
  %2913 = vmatprep.subr.mxu0 0.0
  %2914 = vmatpush1.msra.mxu0 0.0
  %2915 = vmatprep.subr.mxu0 0.0
  %2916 = vmatpush1.msra.mxu0 0.0
  %2917 = vmatprep.subr.mxu0 0.0
  %2918 = vmatpush1.msra.mxu0 0.0
  %2919 = vmatprep.subr.mxu0 0.0
  %2920 = vmatpush1.msra.mxu0 0.0
  %2921 = vmatprep.subr.mxu0 0.0
  %2922 = vmatpush1.msra.mxu0 0.0
  %2923 = vmatprep.subr.mxu0 0.0
  %2924 = vmatpush1.msra.mxu0 0.0
  %2925 = vmatprep.subr.mxu0 0.0
  %2926 = vmatpush1.msra.mxu0 0.0
  %2927 = vmatprep.subr.mxu0 0.0
  %2928 = vmatpush1.msra.mxu0 0.0
  %2929 = vmatprep.subr.mxu0 0.0
  %2930 = vmatpush1.msra.mxu0 0.0
  %2931 = vmatprep.subr.mxu0 0.0
  %2932 = vmatpush1.msra.mxu0 0.0
  %2933 = vmatprep.subr.mxu0 0.0
  %2934 = vmatpush1.msra.mxu0 0.0
  %2935 = vmatprep.subr.mxu0 0.0
  %2936 = vmatpush1.msra.mxu0 0.0
  %2937 = vmatprep.subr.mxu0 0.0
  %2938 = vmatpush1.msra.mxu0 0.0
  %2939 = vmatprep.subr.mxu0 0.0
  %2940 = vmatpush1.msra.mxu0 0.0
  %2941 = vmatprep.subr.mxu0 0.0
  %2942 = vmatpush1.msra.mxu0 0.0
  %2943 = vmatprep.subr.mxu0 0.0
  %2944 = vmatpush1.msra.mxu0 0.0
  %2945 = vmatprep.subr.mxu0 0.0
  %2946 = vmatpush1.msra.mxu0 0.0
  %2947 = vmatprep.subr.mxu0 0.0
  %2948 = vmatpush1.msra.mxu0 0.0
  %2949 = vmatprep.mubr.f32.mxu0 0.0
  %2950 = vmatmul.mubr.f32.gmra.mrb[0].mxu0 %v2883
  %v2951 = vpop.f32.mrb[0].mxu0
  %v2952 = vadd.f32 0.0, %v2951
  %v2953 = vpop.f32.mrb[0].mxu0
  %2954 = vdwg.mxu0
  %2955 = vrot.lane.b32.xlu0 %v2163, 64
  %v2956 = vpop.permute.xlu0 %2955
  %v2959 = vsel %vm331, %v2872, 0
  %2961 = vmatprep.subr.mxu0 0.0
  %2962 = vmatpush1.msra.mxu0 %v2956
  %2963 = vmatprep.subr.mxu0 0.0
  %2964 = vmatpush1.msra.mxu0 0.0
  %2965 = vmatprep.subr.mxu0 0.0
  %2966 = vmatpush1.msra.mxu0 0.0
  %2967 = vmatprep.subr.mxu0 0.0
  %2968 = vmatpush1.msra.mxu0 0.0
  %2969 = vmatprep.subr.mxu0 0.0
  %2970 = vmatpush1.msra.mxu0 0.0
  %2971 = vmatprep.subr.mxu0 0.0
  %2972 = vmatpush1.msra.mxu0 0.0
  %2973 = vmatprep.subr.mxu0 0.0
  %2974 = vmatpush1.msra.mxu0 0.0
  %2975 = vmatprep.subr.mxu0 0.0
  %2976 = vmatpush1.msra.mxu0 0.0
  %2977 = vmatprep.subr.mxu0 0.0
  %2978 = vmatpush1.msra.mxu0 0.0
  %2979 = vmatprep.subr.mxu0 0.0
  %2980 = vmatpush1.msra.mxu0 0.0
  %2981 = vmatprep.subr.mxu0 0.0
  %2982 = vmatpush1.msra.mxu0 0.0
  %2983 = vmatprep.subr.mxu0 0.0
  %2984 = vmatpush1.msra.mxu0 0.0
  %2985 = vmatprep.subr.mxu0 0.0
  %2986 = vmatpush1.msra.mxu0 0.0
  %2987 = vmatprep.subr.mxu0 0.0
  %2988 = vmatpush1.msra.mxu0 0.0
  %2989 = vmatprep.subr.mxu0 0.0
  %2990 = vmatpush1.msra.mxu0 0.0
  %2991 = vmatprep.subr.mxu0 0.0
  %2992 = vmatpush1.msra.mxu0 0.0
  %2993 = vmatprep.subr.mxu0 0.0
  %2994 = vmatpush1.msra.mxu0 0.0
  %2995 = vmatprep.subr.mxu0 0.0
  %2996 = vmatpush1.msra.mxu0 0.0
  %2997 = vmatprep.subr.mxu0 0.0
  %2998 = vmatpush1.msra.mxu0 0.0
  %2999 = vmatprep.subr.mxu0 0.0
  %3000 = vmatpush1.msra.mxu0 0.0
  %3001 = vmatprep.subr.mxu0 0.0
  %3002 = vmatpush1.msra.mxu0 0.0
  %3003 = vmatprep.subr.mxu0 0.0
  %3004 = vmatpush1.msra.mxu0 0.0
  %3005 = vmatprep.subr.mxu0 0.0
  %3006 = vmatpush1.msra.mxu0 0.0
  %3007 = vmatprep.subr.mxu0 0.0
  %3008 = vmatpush1.msra.mxu0 0.0
  %3009 = vmatprep.subr.mxu0 0.0
  %3010 = vmatpush1.msra.mxu0 0.0
  %3011 = vmatprep.subr.mxu0 0.0
  %3012 = vmatpush1.msra.mxu0 0.0
  %3013 = vmatprep.subr.mxu0 0.0
  %3014 = vmatpush1.msra.mxu0 0.0
  %3015 = vmatprep.subr.mxu0 0.0
  %3016 = vmatpush1.msra.mxu0 0.0
  %3017 = vmatprep.subr.mxu0 0.0
  %3018 = vmatpush1.msra.mxu0 0.0
  %3019 = vmatprep.subr.mxu0 0.0
  %3020 = vmatpush1.msra.mxu0 0.0
  %3021 = vmatprep.subr.mxu0 0.0
  %3022 = vmatpush1.msra.mxu0 0.0
  %3023 = vmatprep.subr.mxu0 0.0
  %3024 = vmatpush1.msra.mxu0 0.0
  %3025 = vmatprep.mubr.f32.mxu0 0.0
  %3026 = vmatmul.mubr.f32.gmra.mrb[0].mxu0 %v2959
  %v3027 = vpop.f32.mrb[0].mxu0
  %v3028 = vadd.f32 0.0, %v3027
  %v3029 = vpop.f32.mrb[0].mxu0
  %3030 = vdwg.mxu0
  %3031 = vrot.lane.b32.xlu0 %v2165, 64
  %v3032 = vpop.permute.xlu0 %3031
  %v3035 = vsel %vm331, %v2873, 0
  %3037 = vmatprep.subr.mxu0 0.0
  %3038 = vmatpush1.msra.mxu0 %v3032
  %3039 = vmatprep.subr.mxu0 0.0
  %3040 = vmatpush1.msra.mxu0 0.0
  %3041 = vmatprep.subr.mxu0 0.0
  %3042 = vmatpush1.msra.mxu0 0.0
  %3043 = vmatprep.subr.mxu0 0.0
  %3044 = vmatpush1.msra.mxu0 0.0
  %3045 = vmatprep.subr.mxu0 0.0
  %3046 = vmatpush1.msra.mxu0 0.0
  %3047 = vmatprep.subr.mxu0 0.0
  %3048 = vmatpush1.msra.mxu0 0.0
  %3049 = vmatprep.subr.mxu0 0.0
  %3050 = vmatpush1.msra.mxu0 0.0
  %3051 = vmatprep.subr.mxu0 0.0
  %3052 = vmatpush1.msra.mxu0 0.0
  %3053 = vmatprep.subr.mxu0 0.0
  %3054 = vmatpush1.msra.mxu0 0.0
  %3055 = vmatprep.subr.mxu0 0.0
  %3056 = vmatpush1.msra.mxu0 0.0
  %3057 = vmatprep.subr.mxu0 0.0
  %3058 = vmatpush1.msra.mxu0 0.0
  %3059 = vmatprep.subr.mxu0 0.0
  %3060 = vmatpush1.msra.mxu0 0.0
  %3061 = vmatprep.subr.mxu0 0.0
  %3062 = vmatpush1.msra.mxu0 0.0
  %3063 = vmatprep.subr.mxu0 0.0
  %3064 = vmatpush1.msra.mxu0 0.0
  %3065 = vmatprep.subr.mxu0 0.0
  %3066 = vmatpush1.msra.mxu0 0.0
  %3067 = vmatprep.subr.mxu0 0.0
  %3068 = vmatpush1.msra.mxu0 0.0
  %3069 = vmatprep.subr.mxu0 0.0
  %3070 = vmatpush1.msra.mxu0 0.0
  %3071 = vmatprep.subr.mxu0 0.0
  %3072 = vmatpush1.msra.mxu0 0.0
  %3073 = vmatprep.subr.mxu0 0.0
  %3074 = vmatpush1.msra.mxu0 0.0
  %3075 = vmatprep.subr.mxu0 0.0
  %3076 = vmatpush1.msra.mxu0 0.0
  %3077 = vmatprep.subr.mxu0 0.0
  %3078 = vmatpush1.msra.mxu0 0.0
  %3079 = vmatprep.subr.mxu0 0.0
  %3080 = vmatpush1.msra.mxu0 0.0
  %3081 = vmatprep.subr.mxu0 0.0
  %3082 = vmatpush1.msra.mxu0 0.0
  %3083 = vmatprep.subr.mxu0 0.0
  %3084 = vmatpush1.msra.mxu0 0.0
  %3085 = vmatprep.subr.mxu0 0.0
  %3086 = vmatpush1.msra.mxu0 0.0
  %3087 = vmatprep.subr.mxu0 0.0
  %3088 = vmatpush1.msra.mxu0 0.0
  %3089 = vmatprep.subr.mxu0 0.0
  %3090 = vmatpush1.msra.mxu0 0.0
  %3091 = vmatprep.subr.mxu0 0.0
  %3092 = vmatpush1.msra.mxu0 0.0
  %3093 = vmatprep.subr.mxu0 0.0
  %3094 = vmatpush1.msra.mxu0 0.0
  %3095 = vmatprep.subr.mxu0 0.0
  %3096 = vmatpush1.msra.mxu0 0.0
  %3097 = vmatprep.subr.mxu0 0.0
  %3098 = vmatpush1.msra.mxu0 0.0
  %3099 = vmatprep.subr.mxu0 0.0
  %3100 = vmatpush1.msra.mxu0 0.0
  %3101 = vmatprep.mubr.f32.mxu0 0.0
  %3102 = vmatmul.mubr.f32.gmra.mrb[0].mxu0 %v3035
  %v3103 = vpop.f32.mrb[0].mxu0
  %v3104 = vadd.f32 0.0, %v3103
  %v3105 = vpop.f32.mrb[0].mxu0
  %3106 = vdwg.mxu0
  %3107 = vrot.lane.b32.xlu0 %v2167, 64
  %v3108 = vpop.permute.xlu0 %3107
  %v3111 = vsel %vm331, %v2874, 0
  %3113 = vmatprep.subr.mxu0 0.0
  %3114 = vmatpush1.msra.mxu0 %v3108
  %3115 = vmatprep.subr.mxu0 0.0
  %3116 = vmatpush1.msra.mxu0 0.0
  %3117 = vmatprep.subr.mxu0 0.0
  %3118 = vmatpush1.msra.mxu0 0.0
  %3119 = vmatprep.subr.mxu0 0.0
  %3120 = vmatpush1.msra.mxu0 0.0
  %3121 = vmatprep.subr.mxu0 0.0
  %3122 = vmatpush1.msra.mxu0 0.0
  %3123 = vmatprep.subr.mxu0 0.0
  %3124 = vmatpush1.msra.mxu0 0.0
  %3125 = vmatprep.subr.mxu0 0.0
  %3126 = vmatpush1.msra.mxu0 0.0
  %3127 = vmatprep.subr.mxu0 0.0
  %3128 = vmatpush1.msra.mxu0 0.0
  %3129 = vmatprep.subr.mxu0 0.0
  %3130 = vmatpush1.msra.mxu0 0.0
  %3131 = vmatprep.subr.mxu0 0.0
  %3132 = vmatpush1.msra.mxu0 0.0
  %3133 = vmatprep.subr.mxu0 0.0
  %3134 = vmatpush1.msra.mxu0 0.0
  %3135 = vmatprep.subr.mxu0 0.0
  %3136 = vmatpush1.msra.mxu0 0.0
  %3137 = vmatprep.subr.mxu0 0.0
  %3138 = vmatpush1.msra.mxu0 0.0
  %3139 = vmatprep.subr.mxu0 0.0
  %3140 = vmatpush1.msra.mxu0 0.0
  %3141 = vmatprep.subr.mxu0 0.0
  %3142 = vmatpush1.msra.mxu0 0.0
  %3143 = vmatprep.subr.mxu0 0.0
  %3144 = vmatpush1.msra.mxu0 0.0
  %3145 = vmatprep.subr.mxu0 0.0
  %3146 = vmatpush1.msra.mxu0 0.0
  %3147 = vmatprep.subr.mxu0 0.0
  %3148 = vmatpush1.msra.mxu0 0.0
  %3149 = vmatprep.subr.mxu0 0.0
  %3150 = vmatpush1.msra.mxu0 0.0
  %3151 = vmatprep.subr.mxu0 0.0
  %3152 = vmatpush1.msra.mxu0 0.0
  %3153 = vmatprep.subr.mxu0 0.0
  %3154 = vmatpush1.msra.mxu0 0.0
  %3155 = vmatprep.subr.mxu0 0.0
  %3156 = vmatpush1.msra.mxu0 0.0
  %3157 = vmatprep.subr.mxu0 0.0
  %3158 = vmatpush1.msra.mxu0 0.0
  %3159 = vmatprep.subr.mxu0 0.0
  %3160 = vmatpush1.msra.mxu0 0.0
  %3161 = vmatprep.subr.mxu0 0.0
  %3162 = vmatpush1.msra.mxu0 0.0
  %3163 = vmatprep.subr.mxu0 0.0
  %3164 = vmatpush1.msra.mxu0 0.0
  %3165 = vmatprep.subr.mxu0 0.0
  %3166 = vmatpush1.msra.mxu0 0.0
  %3167 = vmatprep.subr.mxu0 0.0
  %3168 = vmatpush1.msra.mxu0 0.0
  %3169 = vmatprep.subr.mxu0 0.0
  %3170 = vmatpush1.msra.mxu0 0.0
  %3171 = vmatprep.subr.mxu0 0.0
  %3172 = vmatpush1.msra.mxu0 0.0
  %3173 = vmatprep.subr.mxu0 0.0
  %3174 = vmatpush1.msra.mxu0 0.0
  %3175 = vmatprep.subr.mxu0 0.0
  %3176 = vmatpush1.msra.mxu0 0.0
  %3177 = vmatprep.mubr.f32.mxu0 0.0
  %3178 = vmatmul.mubr.f32.gmra.mrb[0].mxu0 %v3111
  %v3179 = vpop.f32.mrb[0].mxu0
  %v3180 = vadd.f32 0.0, %v3179
  %v3181 = vpop.f32.mrb[0].mxu0
  %3182 = vdwg.mxu0
  %3183 = vrot.lane.b32.xlu0 %v2158, 64
  %v3184 = vpop.permute.xlu0 %3183
  %v3187 = vsel %vm331, %v2875, 0
  %3189 = vmatprep.subr.mxu0 0.0
  %3190 = vmatpush1.msra.mxu0 %v3184
  %3191 = vmatprep.subr.mxu0 0.0
  %3192 = vmatpush1.msra.mxu0 0.0
  %3193 = vmatprep.subr.mxu0 0.0
  %3194 = vmatpush1.msra.mxu0 0.0
  %3195 = vmatprep.subr.mxu0 0.0
  %3196 = vmatpush1.msra.mxu0 0.0
  %3197 = vmatprep.subr.mxu0 0.0
  %3198 = vmatpush1.msra.mxu0 0.0
  %3199 = vmatprep.subr.mxu0 0.0
  %3200 = vmatpush1.msra.mxu0 0.0
  %3201 = vmatprep.subr.mxu0 0.0
  %3202 = vmatpush1.msra.mxu0 0.0
  %3203 = vmatprep.subr.mxu0 0.0
  %3204 = vmatpush1.msra.mxu0 0.0
  %3205 = vmatprep.subr.mxu0 0.0
  %3206 = vmatpush1.msra.mxu0 0.0
  %3207 = vmatprep.subr.mxu0 0.0
  %3208 = vmatpush1.msra.mxu0 0.0
  %3209 = vmatprep.subr.mxu0 0.0
  %3210 = vmatpush1.msra.mxu0 0.0
  %3211 = vmatprep.subr.mxu0 0.0
  %3212 = vmatpush1.msra.mxu0 0.0
  %3213 = vmatprep.subr.mxu0 0.0
  %3214 = vmatpush1.msra.mxu0 0.0
  %3215 = vmatprep.subr.mxu0 0.0
  %3216 = vmatpush1.msra.mxu0 0.0
  %3217 = vmatprep.subr.mxu0 0.0
  %3218 = vmatpush1.msra.mxu0 0.0
  %3219 = vmatprep.subr.mxu0 0.0
  %3220 = vmatpush1.msra.mxu0 0.0
  %3221 = vmatprep.subr.mxu0 0.0
  %3222 = vmatpush1.msra.mxu0 0.0
  %3223 = vmatprep.subr.mxu0 0.0
  %3224 = vmatpush1.msra.mxu0 0.0
  %3225 = vmatprep.subr.mxu0 0.0
  %3226 = vmatpush1.msra.mxu0 0.0
  %3227 = vmatprep.subr.mxu0 0.0
  %3228 = vmatpush1.msra.mxu0 0.0
  %3229 = vmatprep.subr.mxu0 0.0
  %3230 = vmatpush1.msra.mxu0 0.0
  %3231 = vmatprep.subr.mxu0 0.0
  %3232 = vmatpush1.msra.mxu0 0.0
  %3233 = vmatprep.subr.mxu0 0.0
  %3234 = vmatpush1.msra.mxu0 0.0
  %3235 = vmatprep.subr.mxu0 0.0
  %3236 = vmatpush1.msra.mxu0 0.0
  %3237 = vmatprep.subr.mxu0 0.0
  %3238 = vmatpush1.msra.mxu0 0.0
  %3239 = vmatprep.subr.mxu0 0.0
  %3240 = vmatpush1.msra.mxu0 0.0
  %3241 = vmatprep.subr.mxu0 0.0
  %3242 = vmatpush1.msra.mxu0 0.0
  %3243 = vmatprep.subr.mxu0 0.0
  %3244 = vmatpush1.msra.mxu0 0.0
  %3245 = vmatprep.subr.mxu0 0.0
  %3246 = vmatpush1.msra.mxu0 0.0
  %3247 = vmatprep.subr.mxu0 0.0
  %3248 = vmatpush1.msra.mxu0 0.0
  %3249 = vmatprep.subr.mxu0 0.0
  %3250 = vmatpush1.msra.mxu0 0.0
  %3251 = vmatprep.subr.mxu0 0.0
  %3252 = vmatpush1.msra.mxu0 0.0
  %3253 = vmatprep.mubr.f32.mxu0 0.0
  %3254 = vmatmul.mubr.f32.gmra.mrb[0].mxu0 %v3187
  %v3255 = vpop.f32.mrb[0].mxu0
  %v3256 = vadd.f32 0.0, %v3255
  %v3257 = vpop.f32.mrb[0].mxu0
  %3258 = vdwg.mxu0
  %3259 = vrot.lane.b32.xlu0 %v2170, 64
  %v3260 = vpop.permute.xlu0 %3259
  %v3263 = vsel %vm331, %v2876, 0
  %3265 = vmatprep.subr.mxu0 0.0
  %3266 = vmatpush1.msra.mxu0 %v3260
  %3267 = vmatprep.subr.mxu0 0.0
  %3268 = vmatpush1.msra.mxu0 0.0
  %3269 = vmatprep.subr.mxu0 0.0
  %3270 = vmatpush1.msra.mxu0 0.0
  %3271 = vmatprep.subr.mxu0 0.0
  %3272 = vmatpush1.msra.mxu0 0.0
  %3273 = vmatprep.subr.mxu0 0.0
  %3274 = vmatpush1.msra.mxu0 0.0
  %3275 = vmatprep.subr.mxu0 0.0
  %3276 = vmatpush1.msra.mxu0 0.0
  %3277 = vmatprep.subr.mxu0 0.0
  %3278 = vmatpush1.msra.mxu0 0.0
  %3279 = vmatprep.subr.mxu0 0.0
  %3280 = vmatpush1.msra.mxu0 0.0
  %3281 = vmatprep.subr.mxu0 0.0
  %3282 = vmatpush1.msra.mxu0 0.0
  %3283 = vmatprep.subr.mxu0 0.0
  %3284 = vmatpush1.msra.mxu0 0.0
  %3285 = vmatprep.subr.mxu0 0.0
  %3286 = vmatpush1.msra.mxu0 0.0
  %3287 = vmatprep.subr.mxu0 0.0
  %3288 = vmatpush1.msra.mxu0 0.0
  %3289 = vmatprep.subr.mxu0 0.0
  %3290 = vmatpush1.msra.mxu0 0.0
  %3291 = vmatprep.subr.mxu0 0.0
  %3292 = vmatpush1.msra.mxu0 0.0
  %3293 = vmatprep.subr.mxu0 0.0
  %3294 = vmatpush1.msra.mxu0 0.0
  %3295 = vmatprep.subr.mxu0 0.0
  %3296 = vmatpush1.msra.mxu0 0.0
  %3297 = vmatprep.subr.mxu0 0.0
  %3298 = vmatpush1.msra.mxu0 0.0
  %3299 = vmatprep.subr.mxu0 0.0
  %3300 = vmatpush1.msra.mxu0 0.0
  %3301 = vmatprep.subr.mxu0 0.0
  %3302 = vmatpush1.msra.mxu0 0.0
  %3303 = vmatprep.subr.mxu0 0.0
  %3304 = vmatpush1.msra.mxu0 0.0
  %3305 = vmatprep.subr.mxu0 0.0
  %3306 = vmatpush1.msra.mxu0 0.0
  %3307 = vmatprep.subr.mxu0 0.0
  %3308 = vmatpush1.msra.mxu0 0.0
  %3309 = vmatprep.subr.mxu0 0.0
  %3310 = vmatpush1.msra.mxu0 0.0
  %3311 = vmatprep.subr.mxu0 0.0
  %3312 = vmatpush1.msra.mxu0 0.0
  %3313 = vmatprep.subr.mxu0 0.0
  %3314 = vmatpush1.msra.mxu0 0.0
  %3315 = vmatprep.subr.mxu0 0.0
  %3316 = vmatpush1.msra.mxu0 0.0
  %3317 = vmatprep.subr.mxu0 0.0
  %3318 = vmatpush1.msra.mxu0 0.0
  %3319 = vmatprep.subr.mxu0 0.0
  %3320 = vmatpush1.msra.mxu0 0.0
  %3321 = vmatprep.subr.mxu0 0.0
  %3322 = vmatpush1.msra.mxu0 0.0
  %3323 = vmatprep.subr.mxu0 0.0
  %3324 = vmatpush1.msra.mxu0 0.0
  %3325 = vmatprep.subr.mxu0 0.0
  %3326 = vmatpush1.msra.mxu0 0.0
  %3327 = vmatprep.subr.mxu0 0.0
  %3328 = vmatpush1.msra.mxu0 0.0
  %3329 = vmatprep.mubr.f32.mxu0 0.0
  %3330 = vmatmul.mubr.f32.gmra.mrb[0].mxu0 %v3263
  %v3331 = vpop.f32.mrb[0].mxu0
  %v3332 = vadd.f32 0.0, %v3331
  %v3333 = vpop.f32.mrb[0].mxu0
  %3334 = vdwg.mxu0
  %3335 = vrot.lane.b32.xlu0 %v2172, 64
  %v3336 = vpop.permute.xlu0 %3335
  %v3339 = vsel %vm331, %v2877, 0
  %3341 = vmatprep.subr.mxu0 0.0
  %3342 = vmatpush1.msra.mxu0 %v3336
  %3343 = vmatprep.subr.mxu0 0.0
  %3344 = vmatpush1.msra.mxu0 0.0
  %3345 = vmatprep.subr.mxu0 0.0
  %3346 = vmatpush1.msra.mxu0 0.0
  %3347 = vmatprep.subr.mxu0 0.0
  %3348 = vmatpush1.msra.mxu0 0.0
  %3349 = vmatprep.subr.mxu0 0.0
  %3350 = vmatpush1.msra.mxu0 0.0
  %3351 = vmatprep.subr.mxu0 0.0
  %3352 = vmatpush1.msra.mxu0 0.0
  %3353 = vmatprep.subr.mxu0 0.0
  %3354 = vmatpush1.msra.mxu0 0.0
  %3355 = vmatprep.subr.mxu0 0.0
  %3356 = vmatpush1.msra.mxu0 0.0
  %3357 = vmatprep.subr.mxu0 0.0
  %3358 = vmatpush1.msra.mxu0 0.0
  %3359 = vmatprep.subr.mxu0 0.0
  %3360 = vmatpush1.msra.mxu0 0.0
  %3361 = vmatprep.subr.mxu0 0.0
  %3362 = vmatpush1.msra.mxu0 0.0
  %3363 = vmatprep.subr.mxu0 0.0
  %3364 = vmatpush1.msra.mxu0 0.0
  %3365 = vmatprep.subr.mxu0 0.0
  %3366 = vmatpush1.msra.mxu0 0.0
  %3367 = vmatprep.subr.mxu0 0.0
  %3368 = vmatpush1.msra.mxu0 0.0
  %3369 = vmatprep.subr.mxu0 0.0
  %3370 = vmatpush1.msra.mxu0 0.0
  %3371 = vmatprep.subr.mxu0 0.0
  %3372 = vmatpush1.msra.mxu0 0.0
  %3373 = vmatprep.subr.mxu0 0.0
  %3374 = vmatpush1.msra.mxu0 0.0
  %3375 = vmatprep.subr.mxu0 0.0
  %3376 = vmatpush1.msra.mxu0 0.0
  %3377 = vmatprep.subr.mxu0 0.0
  %3378 = vmatpush1.msra.mxu0 0.0
  %3379 = vmatprep.subr.mxu0 0.0
  %3380 = vmatpush1.msra.mxu0 0.0
  %3381 = vmatprep.subr.mxu0 0.0
  %3382 = vmatpush1.msra.mxu0 0.0
  %3383 = vmatprep.subr.mxu0 0.0
  %3384 = vmatpush1.msra.mxu0 0.0
  %3385 = vmatprep.subr.mxu0 0.0
  %3386 = vmatpush1.msra.mxu0 0.0
  %3387 = vmatprep.subr.mxu0 0.0
  %3388 = vmatpush1.msra.mxu0 0.0
  %3389 = vmatprep.subr.mxu0 0.0
  %3390 = vmatpush1.msra.mxu0 0.0
  %3391 = vmatprep.subr.mxu0 0.0
  %3392 = vmatpush1.msra.mxu0 0.0
  %3393 = vmatprep.subr.mxu0 0.0
  %3394 = vmatpush1.msra.mxu0 0.0
  %3395 = vmatprep.subr.mxu0 0.0
  %3396 = vmatpush1.msra.mxu0 0.0
  %3397 = vmatprep.subr.mxu0 0.0
  %3398 = vmatpush1.msra.mxu0 0.0
  %3399 = vmatprep.subr.mxu0 0.0
  %3400 = vmatpush1.msra.mxu0 0.0
  %3401 = vmatprep.subr.mxu0 0.0
  %3402 = vmatpush1.msra.mxu0 0.0
  %3403 = vmatprep.subr.mxu0 0.0
  %3404 = vmatpush1.msra.mxu0 0.0
  %3405 = vmatprep.mubr.f32.mxu0 0.0
  %3406 = vmatmul.mubr.f32.gmra.mrb[0].mxu0 %v3339
  %v3407 = vpop.f32.mrb[0].mxu0
  %v3408 = vadd.f32 0.0, %v3407
  %v3409 = vpop.f32.mrb[0].mxu0
  %3410 = vdwg.mxu0
  %3411 = vrot.lane.b32.xlu0 %v2174, 64
  %v3412 = vpop.permute.xlu0 %3411
  %v3415 = vsel %vm331, %v2878, 0
  %3417 = vmatprep.subr.mxu0 0.0
  %3418 = vmatpush1.msra.mxu0 %v3412
  %3419 = vmatprep.subr.mxu0 0.0
  %3420 = vmatpush1.msra.mxu0 0.0
  %3421 = vmatprep.subr.mxu0 0.0
  %3422 = vmatpush1.msra.mxu0 0.0
  %3423 = vmatprep.subr.mxu0 0.0
  %3424 = vmatpush1.msra.mxu0 0.0
  %3425 = vmatprep.subr.mxu0 0.0
  %3426 = vmatpush1.msra.mxu0 0.0
  %3427 = vmatprep.subr.mxu0 0.0
  %3428 = vmatpush1.msra.mxu0 0.0
  %3429 = vmatprep.subr.mxu0 0.0
  %3430 = vmatpush1.msra.mxu0 0.0
  %3431 = vmatprep.subr.mxu0 0.0
  %3432 = vmatpush1.msra.mxu0 0.0
  %3433 = vmatprep.subr.mxu0 0.0
  %3434 = vmatpush1.msra.mxu0 0.0
  %3435 = vmatprep.subr.mxu0 0.0
  %3436 = vmatpush1.msra.mxu0 0.0
  %3437 = vmatprep.subr.mxu0 0.0
  %3438 = vmatpush1.msra.mxu0 0.0
  %3439 = vmatprep.subr.mxu0 0.0
  %3440 = vmatpush1.msra.mxu0 0.0
  %3441 = vmatprep.subr.mxu0 0.0
  %3442 = vmatpush1.msra.mxu0 0.0
  %3443 = vmatprep.subr.mxu0 0.0
  %3444 = vmatpush1.msra.mxu0 0.0
  %3445 = vmatprep.subr.mxu0 0.0
  %3446 = vmatpush1.msra.mxu0 0.0
  %3447 = vmatprep.subr.mxu0 0.0
  %3448 = vmatpush1.msra.mxu0 0.0
  %3449 = vmatprep.subr.mxu0 0.0
  %3450 = vmatpush1.msra.mxu0 0.0
  %3451 = vmatprep.subr.mxu0 0.0
  %3452 = vmatpush1.msra.mxu0 0.0
  %3453 = vmatprep.subr.mxu0 0.0
  %3454 = vmatpush1.msra.mxu0 0.0
  %3455 = vmatprep.subr.mxu0 0.0
  %3456 = vmatpush1.msra.mxu0 0.0
  %3457 = vmatprep.subr.mxu0 0.0
  %3458 = vmatpush1.msra.mxu0 0.0
  %3459 = vmatprep.subr.mxu0 0.0
  %3460 = vmatpush1.msra.mxu0 0.0
  %3461 = vmatprep.subr.mxu0 0.0
  %3462 = vmatpush1.msra.mxu0 0.0
  %3463 = vmatprep.subr.mxu0 0.0
  %3464 = vmatpush1.msra.mxu0 0.0
  %3465 = vmatprep.subr.mxu0 0.0
  %3466 = vmatpush1.msra.mxu0 0.0
  %3467 = vmatprep.subr.mxu0 0.0
  %3468 = vmatpush1.msra.mxu0 0.0
  %3469 = vmatprep.subr.mxu0 0.0
  %3470 = vmatpush1.msra.mxu0 0.0
  %3471 = vmatprep.subr.mxu0 0.0
  %3472 = vmatpush1.msra.mxu0 0.0
  %3473 = vmatprep.subr.mxu0 0.0
  %3474 = vmatpush1.msra.mxu0 0.0
  %3475 = vmatprep.subr.mxu0 0.0
  %3476 = vmatpush1.msra.mxu0 0.0
  %3477 = vmatprep.subr.mxu0 0.0
  %3478 = vmatpush1.msra.mxu0 0.0
  %3479 = vmatprep.subr.mxu0 0.0
  %3480 = vmatpush1.msra.mxu0 0.0
  %3481 = vmatprep.mubr.f32.mxu0 0.0
  %3482 = vmatmul.mubr.f32.gmra.mrb[0].mxu0 %v3415
  %v3483 = vpop.f32.mrb[0].mxu0
  %v3484 = vadd.f32 0.0, %v3483
  %v3485 = vpop.f32.mrb[0].mxu0
  %3486 = vdwg.mxu0
  %3488 = vrot.lane.b32.xlu0 %v3028, 8
  %v3489 = vpop.permute.xlu0 %3488
  %3492 = vrot.lane.b32.xlu0 %v3104, 16
  %v3493 = vpop.permute.xlu0 %3492
  %3496 = vrot.lane.b32.xlu0 %v3180, 24
  %v3497 = vpop.permute.xlu0 %3496
  %v3499 = vsel %vm331, %v2952, %v3489
  %v3500 = vsel %vm1655, %v3499, %v3493
  %v3501 = vsel %vm1657, %v3500, %v3497
  %3503 = vrot.lane.b32.xlu0 %v3332, 8
  %v3504 = vpop.permute.xlu0 %3503
  %3507 = vrot.lane.b32.xlu0 %v3408, 16
  %v3508 = vpop.permute.xlu0 %3507
  %3511 = vrot.lane.b32.xlu0 %v3484, 24
  %v3512 = vpop.permute.xlu0 %3511
  %v3514 = vsel %vm331, %v3256, %v3504
  %v3515 = vsel %vm1655, %v3514, %v3508
  %v3516 = vsel %vm1657, %v3515, %v3512
  %s3517 = scalar_lea.vmem %s9, 32
  %v3518 = vld [vmem:[%s3517] sm:$0xff]
  %v3519 = vld [vmem:[%s3517 + $0x8] sm:$0xff]
  %v3520 = vld [vmem:[%s3517 + $0x10] sm:$0xff]
  %v3521 = vld [vmem:[%s3517 + $0x18] sm:$0xff]
  %s3522 = scalar_lea.vmem %s10, 1
  %v3523 = vld [vmem:[%s3522] sm:$0x1]
  %v3525 = vlaneseq
  %v3526 = vshrl.u32 %v3525, 7
  %v3527 = vsub.s32 0, %v3526
  %v3528 = vrot.slane %v3523, %v3527
  %v3531 = vsel %vm179, %v3501, 0
  %v3534 = vsel %vm179, %v3516, 0
  %3536 = vmatprep.subr.mxu0 0.0
  %3537 = vmatpush1.msra.mxu0 %v3518
  %3538 = vmatprep.subr.mxu0 0.0
  %3539 = vmatpush1.msra.mxu0 %v3519
  %3540 = vmatprep.subr.mxu0 0.0
  %3541 = vmatpush1.msra.mxu0 %v3520
  %3542 = vmatprep.subr.mxu0 0.0
  %3543 = vmatpush1.msra.mxu0 %v3521
  %3544 = vmatprep.subr.mxu0 0.0
  %3545 = vmatpush1.msra.mxu0 0.0
  %3546 = vmatprep.subr.mxu0 0.0
  %3547 = vmatpush1.msra.mxu0 0.0
  %3548 = vmatprep.subr.mxu0 0.0
  %3549 = vmatpush1.msra.mxu0 0.0
  %3550 = vmatprep.subr.mxu0 0.0
  %3551 = vmatpush1.msra.mxu0 0.0
  %3552 = vmatprep.subr.mxu0 0.0
  %3553 = vmatpush1.msra.mxu0 0.0
  %3554 = vmatprep.subr.mxu0 0.0
  %3555 = vmatpush1.msra.mxu0 0.0
  %3556 = vmatprep.subr.mxu0 0.0
  %3557 = vmatpush1.msra.mxu0 0.0
  %3558 = vmatprep.subr.mxu0 0.0
  %3559 = vmatpush1.msra.mxu0 0.0
  %3560 = vmatprep.subr.mxu0 0.0
  %3561 = vmatpush1.msra.mxu0 0.0
  %3562 = vmatprep.subr.mxu0 0.0
  %3563 = vmatpush1.msra.mxu0 0.0
  %3564 = vmatprep.subr.mxu0 0.0
  %3565 = vmatpush1.msra.mxu0 0.0
  %3566 = vmatprep.subr.mxu0 0.0
  %3567 = vmatpush1.msra.mxu0 0.0
  %3568 = vmatprep.subr.mxu0 0.0
  %3569 = vmatpush1.msra.mxu0 0.0
  %3570 = vmatprep.subr.mxu0 0.0
  %3571 = vmatpush1.msra.mxu0 0.0
  %3572 = vmatprep.subr.mxu0 0.0
  %3573 = vmatpush1.msra.mxu0 0.0
  %3574 = vmatprep.subr.mxu0 0.0
  %3575 = vmatpush1.msra.mxu0 0.0
  %3576 = vmatprep.subr.mxu0 0.0
  %3577 = vmatpush1.msra.mxu0 0.0
  %3578 = vmatprep.subr.mxu0 0.0
  %3579 = vmatpush1.msra.mxu0 0.0
  %3580 = vmatprep.subr.mxu0 0.0
  %3581 = vmatpush1.msra.mxu0 0.0
  %3582 = vmatprep.subr.mxu0 0.0
  %3583 = vmatpush1.msra.mxu0 0.0
  %3584 = vmatprep.subr.mxu0 0.0
  %3585 = vmatpush1.msra.mxu0 0.0
  %3586 = vmatprep.subr.mxu0 0.0
  %3587 = vmatpush1.msra.mxu0 0.0
  %3588 = vmatprep.subr.mxu0 0.0
  %3589 = vmatpush1.msra.mxu0 0.0
  %3590 = vmatprep.subr.mxu0 0.0
  %3591 = vmatpush1.msra.mxu0 0.0
  %3592 = vmatprep.subr.mxu0 0.0
  %3593 = vmatpush1.msra.mxu0 0.0
  %3594 = vmatprep.subr.mxu0 0.0
  %3595 = vmatpush1.msra.mxu0 0.0
  %3596 = vmatprep.subr.mxu0 0.0
  %3597 = vmatpush1.msra.mxu0 0.0
  %3598 = vmatprep.subr.mxu0 0.0
  %3599 = vmatpush1.msra.mxu0 0.0
  %3600 = vmatprep.mubr.f32.mxu0 0.0
  %3601 = vmatmul.mubr.f32.gmra.mrb[0].mxu0 %v3531
  %v3602 = vpop.f32.mrb[0].mxu0
  %v3603 = vadd.f32 %v3528, %v3602
  %v3604 = vpop.f32.mrb[0].mxu0
  %3605 = vmatprep.mubr.f32.mxu0 0.0
  %3606 = vmatmul.mubr.f32.gmra.mrb[0].mxu0 %v3534
  %v3607 = vpop.f32.mrb[0].mxu0
  %v3608 = vadd.f32 %v3528, %v3607
  %v3609 = vpop.f32.mrb[0].mxu0
  %3610 = vdwg.mxu0
  %v3611 = vadd.f32 %v2019, %v3603
  %v3612 = vadd.f32 %v2020, %v3608
  %s3613 = scalar_lea.vmem %s11, 1
  %v3614 = vld [vmem:[%s3613] sm:$0x1]
  %s3615 = scalar_lea.vmem %s12, 1
  %v3616 = vld [vmem:[%s3615] sm:$0x1]
  %v3617 = vsel %vm179, %v3611, 0.0
  %3618 = vadd.xlane.f32.xlu0 %v3617
  %v3619 = vpop.xlane.xlu0 %3618
  %v3620 = vsel %vm179, %v3612, 0.0
  %3621 = vadd.xlane.f32.xlu0 %v3620
  %v3622 = vpop.xlane.xlu0 %3621
  %v3623 = vmul.f32 %v3619, %v186
  %v3624 = vmul.f32 %v3622, %v186
  %v3625 = vsub.f32 %v3611, %v3623
  %v3626 = vsub.f32 %v3612, %v3624
  %v3627 = vmul.f32 %v3625, %v3625
  %v3628 = vmul.f32 %v3626, %v3626
  %v3629 = vsel %vm179, %v3627, 0.0
  %3630 = vadd.xlane.f32.xlu0 %v3629
  %v3631 = vpop.xlane.xlu0 %3630
  %v3632 = vsel %vm179, %v3628, 0.0
  %3633 = vadd.xlane.f32.xlu0 %v3632
  %v3634 = vpop.xlane.xlu0 %3633
  %v3635 = vmul.f32 %v3631, %v186
  %v3636 = vmul.f32 %v3634, %v186
  %v3637 = vadd.f32 %v3635, 1e-06
  %v3638 = vadd.f32 %v3636, 1e-06
  %v3639 = vrsqrt.pop %v3637
  %v3640 = vrsqrt.pop %v3638
  %v3641 = vmul.f32 %v3625, %v3639
  %v3642 = vmul.f32 %v3626, %v3640
  %v3644 = vlaneseq
  %v3645 = vshrl.u32 %v3644, 7
  %v3646 = vsub.s32 0, %v3645
  %v3647 = vrot.slane %v3614, %v3646
  %v3649 = vmul.f32 %v3641, %v3647
  %v3650 = vmul.f32 %v3642, %v3647
  %v3652 = vlaneseq
  %v3653 = vshrl.u32 %v3652, 7
  %v3654 = vsub.s32 0, %v3653
  %v3655 = vrot.slane %v3616, %v3654
  %v3657 = vadd.f32 %v3649, %v3655
  %v3658 = vadd.f32 %v3650, %v3655
  %s3659 = scalar_lea.vmem %s13, 32
  %v3660 = vld [vmem:[%s3659] sm:$0xff]
  %v3661 = vld [vmem:[%s3659 + $0x8] sm:$0xff]
  %v3662 = vld [vmem:[%s3659 + $0x10] sm:$0xff]
  %v3663 = vld [vmem:[%s3659 + $0x18] sm:$0xff]
  %s3664 = scalar_lea.vmem %s14, 1
  %v3665 = vld [vmem:[%s3664] sm:$0x1]
  %v3667 = vlaneseq
  %v3668 = vshrl.u32 %v3667, 7
  %v3669 = vsub.s32 0, %v3668
  %v3670 = vrot.slane %v3665, %v3669
  %v3673 = vsel %vm179, %v3657, 0
  %v3676 = vsel %vm179, %v3658, 0
  %3678 = vmatprep.subr.mxu0 0.0
  %3679 = vmatpush1.msra.mxu0 %v3660
  %3680 = vmatprep.subr.mxu0 0.0
  %3681 = vmatpush1.msra.mxu0 %v3661
  %3682 = vmatprep.subr.mxu0 0.0
  %3683 = vmatpush1.msra.mxu0 %v3662
  %3684 = vmatprep.subr.mxu0 0.0
  %3685 = vmatpush1.msra.mxu0 %v3663
  %3686 = vmatprep.subr.mxu0 0.0
  %3687 = vmatpush1.msra.mxu0 0.0
  %3688 = vmatprep.subr.mxu0 0.0
  %3689 = vmatpush1.msra.mxu0 0.0
  %3690 = vmatprep.subr.mxu0 0.0
  %3691 = vmatpush1.msra.mxu0 0.0
  %3692 = vmatprep.subr.mxu0 0.0
  %3693 = vmatpush1.msra.mxu0 0.0
  %3694 = vmatprep.subr.mxu0 0.0
  %3695 = vmatpush1.msra.mxu0 0.0
  %3696 = vmatprep.subr.mxu0 0.0
  %3697 = vmatpush1.msra.mxu0 0.0
  %3698 = vmatprep.subr.mxu0 0.0
  %3699 = vmatpush1.msra.mxu0 0.0
  %3700 = vmatprep.subr.mxu0 0.0
  %3701 = vmatpush1.msra.mxu0 0.0
  %3702 = vmatprep.subr.mxu0 0.0
  %3703 = vmatpush1.msra.mxu0 0.0
  %3704 = vmatprep.subr.mxu0 0.0
  %3705 = vmatpush1.msra.mxu0 0.0
  %3706 = vmatprep.subr.mxu0 0.0
  %3707 = vmatpush1.msra.mxu0 0.0
  %3708 = vmatprep.subr.mxu0 0.0
  %3709 = vmatpush1.msra.mxu0 0.0
  %3710 = vmatprep.subr.mxu0 0.0
  %3711 = vmatpush1.msra.mxu0 0.0
  %3712 = vmatprep.subr.mxu0 0.0
  %3713 = vmatpush1.msra.mxu0 0.0
  %3714 = vmatprep.subr.mxu0 0.0
  %3715 = vmatpush1.msra.mxu0 0.0
  %3716 = vmatprep.subr.mxu0 0.0
  %3717 = vmatpush1.msra.mxu0 0.0
  %3718 = vmatprep.subr.mxu0 0.0
  %3719 = vmatpush1.msra.mxu0 0.0
  %3720 = vmatprep.subr.mxu0 0.0
  %3721 = vmatpush1.msra.mxu0 0.0
  %3722 = vmatprep.subr.mxu0 0.0
  %3723 = vmatpush1.msra.mxu0 0.0
  %3724 = vmatprep.subr.mxu0 0.0
  %3725 = vmatpush1.msra.mxu0 0.0
  %3726 = vmatprep.subr.mxu0 0.0
  %3727 = vmatpush1.msra.mxu0 0.0
  %3728 = vmatprep.subr.mxu0 0.0
  %3729 = vmatpush1.msra.mxu0 0.0
  %3730 = vmatprep.subr.mxu0 0.0
  %3731 = vmatpush1.msra.mxu0 0.0
  %3732 = vmatprep.subr.mxu0 0.0
  %3733 = vmatpush1.msra.mxu0 0.0
  %3734 = vmatprep.subr.mxu0 0.0
  %3735 = vmatpush1.msra.mxu0 0.0
  %3736 = vmatprep.subr.mxu0 0.0
  %3737 = vmatpush1.msra.mxu0 0.0
  %3738 = vmatprep.subr.mxu0 0.0
  %3739 = vmatpush1.msra.mxu0 0.0
  %3740 = vmatprep.subr.mxu0 0.0
  %3741 = vmatpush1.msra.mxu0 0.0
  %3742 = vmatprep.mubr.f32.mxu0 0.0
  %3743 = vmatmul.mubr.f32.gmra.mrb[0].mxu0 %v3673
  %v3744 = vpop.f32.mrb[0].mxu0
  %v3745 = vadd.f32 %v3670, %v3744
  %v3746 = vpop.f32.mrb[0].mxu0
  %3747 = vmatprep.mubr.f32.mxu0 0.0
  %3748 = vmatmul.mubr.f32.gmra.mrb[0].mxu0 %v3676
  %v3749 = vpop.f32.mrb[0].mxu0
  %v3750 = vadd.f32 %v3670, %v3749
  %v3751 = vpop.f32.mrb[0].mxu0
  %3752 = vdwg.mxu0
  %v3753 = vmul.f32 %v3745, 0.5
  %v3754 = vmul.f32 %v3750, 0.5
  %v3755 = vmul.f32 %v3745, 0.044715
  %v3756 = vmul.f32 %v3750, 0.044715
  %v3757 = vmul.f32 %v3755, %v3745
  %v3758 = vmul.f32 %v3756, %v3750
  %v3759 = vmul.f32 %v3757, %v3745
  %v3760 = vmul.f32 %v3758, %v3750
  %v3761 = vadd.f32 %v3745, %v3759
  %v3762 = vadd.f32 %v3750, %v3760
  %v3763 = vmul.f32 %v3761, 0.7978846
  %v3764 = vmul.f32 %v3762, 0.7978846
  %v3765 = vtanh.pop %v3763
  %v3766 = vtanh.pop %v3764
  %v3767 = vadd.f32 %v3765, 1.0
  %v3768 = vadd.f32 %v3766, 1.0
  %v3769 = vmul.f32 %v3753, %v3767
  %v3770 = vmul.f32 %v3754, %v3768
  %s3771 = scalar_lea.vmem %s15, 64
  %v3772 = vld [vmem:[%s3771] sm:$0xff]
  %v3773 = vld [vmem:[%s3771 + $0x8] sm:$0xff]
  %v3774 = vld [vmem:[%s3771 + $0x10] sm:$0xff]
  %v3775 = vld [vmem:[%s3771 + $0x18] sm:$0xff]
  %v3776 = vld [vmem:[%s3771 + $0x20] sm:$0xff]
  %v3777 = vld [vmem:[%s3771 + $0x28] sm:$0xff]
  %v3778 = vld [vmem:[%s3771 + $0x30] sm:$0xff]
  %v3779 = vld [vmem:[%s3771 + $0x38] sm:$0xff]
  %s3780 = scalar_lea.vmem %s16, 1
  %v3781 = vld [vmem:[%s3780] sm:$0x1]
  %v3783 = vlaneseq
  %v3784 = vshrl.u32 %v3783, 7
  %v3785 = vsub.s32 0, %v3784
  %v3786 = vrot.slane %v3781, %v3785
  %v3789 = vsel %vm1937, %v3769, 0
  %v3792 = vsel %vm1937, %v3770, 0
  %3794 = vmatprep.subr.mxu0 0.0
  %3795 = vmatpush1.msra.mxu0 %v3772
  %3796 = vmatprep.subr.mxu0 0.0
  %3797 = vmatpush1.msra.mxu0 %v3773
  %3798 = vmatprep.subr.mxu0 0.0
  %3799 = vmatpush1.msra.mxu0 %v3774
  %3800 = vmatprep.subr.mxu0 0.0
  %3801 = vmatpush1.msra.mxu0 %v3775
  %3802 = vmatprep.subr.mxu0 0.0
  %3803 = vmatpush1.msra.mxu0 %v3776
  %3804 = vmatprep.subr.mxu0 0.0
  %3805 = vmatpush1.msra.mxu0 %v3777
  %3806 = vmatprep.subr.mxu0 0.0
  %3807 = vmatpush1.msra.mxu0 %v3778
  %3808 = vmatprep.subr.mxu0 0.0
  %3809 = vmatpush1.msra.mxu0 %v3779
  %3810 = vmatprep.subr.mxu0 0.0
  %3811 = vmatpush1.msra.mxu0 0.0
  %3812 = vmatprep.subr.mxu0 0.0
  %3813 = vmatpush1.msra.mxu0 0.0
  %3814 = vmatprep.subr.mxu0 0.0
  %3815 = vmatpush1.msra.mxu0 0.0
  %3816 = vmatprep.subr.mxu0 0.0
  %3817 = vmatpush1.msra.mxu0 0.0
  %3818 = vmatprep.subr.mxu0 0.0
  %3819 = vmatpush1.msra.mxu0 0.0
  %3820 = vmatprep.subr.mxu0 0.0
  %3821 = vmatpush1.msra.mxu0 0.0
  %3822 = vmatprep.subr.mxu0 0.0
  %3823 = vmatpush1.msra.mxu0 0.0
  %3824 = vmatprep.subr.mxu0 0.0
  %3825 = vmatpush1.msra.mxu0 0.0
  %3826 = vmatprep.subr.mxu0 0.0
  %3827 = vmatpush1.msra.mxu0 0.0
  %3828 = vmatprep.subr.mxu0 0.0
  %3829 = vmatpush1.msra.mxu0 0.0
  %3830 = vmatprep.subr.mxu0 0.0
  %3831 = vmatpush1.msra.mxu0 0.0
  %3832 = vmatprep.subr.mxu0 0.0
  %3833 = vmatpush1.msra.mxu0 0.0
  %3834 = vmatprep.subr.mxu0 0.0
  %3835 = vmatpush1.msra.mxu0 0.0
  %3836 = vmatprep.subr.mxu0 0.0
  %3837 = vmatpush1.msra.mxu0 0.0
  %3838 = vmatprep.subr.mxu0 0.0
  %3839 = vmatpush1.msra.mxu0 0.0
  %3840 = vmatprep.subr.mxu0 0.0
  %3841 = vmatpush1.msra.mxu0 0.0
  %3842 = vmatprep.subr.mxu0 0.0
  %3843 = vmatpush1.msra.mxu0 0.0
  %3844 = vmatprep.subr.mxu0 0.0
  %3845 = vmatpush1.msra.mxu0 0.0
  %3846 = vmatprep.subr.mxu0 0.0
  %3847 = vmatpush1.msra.mxu0 0.0
  %3848 = vmatprep.subr.mxu0 0.0
  %3849 = vmatpush1.msra.mxu0 0.0
  %3850 = vmatprep.subr.mxu0 0.0
  %3851 = vmatpush1.msra.mxu0 0.0
  %3852 = vmatprep.subr.mxu0 0.0
  %3853 = vmatpush1.msra.mxu0 0.0
  %3854 = vmatprep.subr.mxu0 0.0
  %3855 = vmatpush1.msra.mxu0 0.0
  %3856 = vmatprep.subr.mxu0 0.0
  %3857 = vmatpush1.msra.mxu0 0.0
  %3858 = vmatprep.mubr.f32.mxu0 0.0
  %3859 = vmatmul.mubr.f32.gmra.mrb[0].mxu0 %v3789
  %v3860 = vpop.f32.mrb[0].mxu0
  %v3861 = vadd.f32 %v3786, %v3860
  %v3862 = vpop.f32.mrb[0].mxu0
  %3863 = vmatprep.mubr.f32.mxu0 0.0
  %3864 = vmatmul.mubr.f32.gmra.mrb[0].mxu0 %v3792
  %v3865 = vpop.f32.mrb[0].mxu0
  %v3866 = vadd.f32 %v3786, %v3865
  %v3867 = vpop.f32.mrb[0].mxu0
  %3868 = vdwg.mxu0
  %v3869 = vadd.f32 %v3611, %v3861
  %v3870 = vadd.f32 %v3612, %v3866
  %3871 = vst.msk [vmem:[%s17] sm:$0xff] %vm179, %v3869
  %3872 = vst.msk [vmem:[%s17 + $0x8] sm:$0xff] %vm179, %v3870
  // Predicated region
  $region70: #{vit_forward.1} parent=0 // pred_check
    _
  $region71: #{vit_forward.1} parent=0 // pred_check_branch
    %3874 = sbr.rel (0) target = $region73
  $region72: #{vit_forward.1} parent=0 // pred_region
    _
  $region73: #{vit_forward.1} parent=0 // pred_fallthru
    _
  // Predicated region
  $region74: #{vit_forward.1} parent=0 // pred_check
    _
  $region75: #{vit_forward.1} parent=0 // pred_check_branch
    %3876 = sbr.rel (0) target = $region77
  $region76: #{vit_forward.1} parent=0 // pred_region
    _
  $region77: #{vit_forward.1} parent=0 // pred_fallthru
    _

</llo_original>
